<compile_context>
chip_gen: v7x
topology: tpu7x:2x2x1
jax: 0.10.0
libtpu: 0.0.40
codegen_flags: <defaults>
</compile_context>

<pallas_src>
import functools

import jax
import jax.numpy as jnp
from jax.experimental import pallas as pl
from jax.experimental.pallas import tpu as pltpu


def _ceil_to(x, m):
    return ((x + m - 1) // m) * m


def gru_qa_kernel(ids_ref,    # SMEM (S*Bp,) int32  [scalar prefetch]
                  emb_ref,    # VMEM (Vp, H)   embedding table
                  wih_ref,    # VMEM (H, 3G)   fused W_ih^T, per-gate lane blocks
                  whh_ref,    # VMEM (G, 3G)   fused W_hh^T, rows >= H are zero
                  bif_ref,    # VMEM (1, 3G)   b_ih (+ b_hh folded for r, z)
                  bhn_ref,    # VMEM (1, G)    b_hn (must stay inside r*(...))
                  wfc_ref,    # VMEM (G, Op)   W_fc^T, lane/row padded
                  bfc_ref,    # VMEM (1, Op)
                  out_ref,    # VMEM (Bp, Op)  lane-dense output slab
                  x_scr,      # VMEM scratch (S*Bp, H)   gathered embeddings
                  gi_scr,     # VMEM scratch (S*Bp, 3G)  hoisted input proj.
                  *, seq_len, batch_pad, gate_pad):
    Bp, G = batch_pad, gate_pad

    # ---- 1) In-kernel embedding gather: ids come from SMEM scalar prefetch.
    def gather_step(t, carry):
        base = pl.multiple_of(t * Bp, 8)
        rows = [emb_ref[pl.ds(ids_ref[t * Bp + b], 1), :] for b in range(Bp)]
        x_scr[pl.ds(base, Bp), :] = jnp.concatenate(rows, axis=0)
        return carry

    jax.lax.fori_loop(0, seq_len, gather_step, 0, unroll=min(seq_len, 8))

    # ---- 2) Hoisted input projection for ALL timesteps: fused gate matmul,
    #         results parked in VMEM scratch (not SSA values).  Chunked so the
    #         live matmul result stays bounded for long sequences.
    wih = wih_ref[...]
    b_if = bif_ref[...]
    n_rows = seq_len * Bp
    CHUNK = 512                                   # multiple of 8 sublanes
    for r0 in range(0, n_rows, CHUNK):
        rs = min(CHUNK, n_rows - r0)
        gi_scr[pl.ds(r0, rs), :] = (
            jnp.dot(x_scr[pl.ds(r0, rs), :], wih,
                    preferred_element_type=jnp.float32) + b_if)

    # ---- 3) GRU recurrence: only h @ W_hh_fused is on the serial path.
    whh = whh_ref[...]
    b_hn = jnp.broadcast_to(bhn_ref[...], (Bp, G))   # hoisted out of the loop

    def step(t, h):
        base = pl.multiple_of(t * Bp, 8)
        gi = gi_scr[pl.ds(base, Bp), :]                              # (Bp, 3G)
        gh = jnp.dot(h, whh, preferred_element_type=jnp.float32)     # (Bp, 3G)
        rz = jax.nn.sigmoid(gi[:, :2 * G] + gh[:, :2 * G])           # one EUP pass
        r = rz[:, :G]
        z = rz[:, G:]
        n = jnp.tanh(gi[:, 2 * G:] + r * (gh[:, 2 * G:] + b_hn))
        return (1.0 - z) * n + z * h

    h0 = jnp.zeros((Bp, G), jnp.float32)
    unroll = seq_len if seq_len <= 32 else 8
    h_final = jax.lax.fori_loop(0, seq_len, step, h0, unroll=unroll)

    # ---- 4) Final Linear on last hidden; lane-dense (Bp, Op) store.
    out = jnp.dot(h_final, wfc_ref[...],
                  preferred_element_type=jnp.float32) + bfc_ref[...]
    out_ref[...] = out.astype(out_ref.dtype)


def pack_params(params, *, gate_pad, out_pad, vocab_pad):
    """Fuse / pad PyTorch-layout GRU+FC params into kernel layout."""
    vocab, H = params["embedding"].shape
    O = params["b_fc"].shape[0]
    G = gate_pad

    w_ih = params["w_ih"].reshape(3, H, H)        # gate-major [r, z, n]
    w_hh = params["w_hh"].reshape(3, H, H)
    b_ih = params["b_ih"].reshape(3, H)
    b_hh = params["b_hh"].reshape(3, H)

    wih_f = jnp.zeros((H, 3 * G), jnp.float32)
    whh_f = jnp.zeros((G, 3 * G), jnp.float32)
    b_if = jnp.zeros((1, 3 * G), jnp.float32)
    for g in range(3):
        wih_f = wih_f.at[:, g * G:g * G + H].set(w_ih[g].T)
        whh_f = whh_f.at[:H, g * G:g * G + H].set(w_hh[g].T)
    # Fold b_ih + b_hh for r and z; b_hn must stay with the recurrent term.
    b_if = b_if.at[0, 0 * G:0 * G + H].set(b_ih[0] + b_hh[0])
    b_if = b_if.at[0, 1 * G:1 * G + H].set(b_ih[1] + b_hh[1])
    b_if = b_if.at[0, 2 * G:2 * G + H].set(b_ih[2])
    b_hn = jnp.zeros((1, G), jnp.float32).at[0, :H].set(b_hh[2])

    wfc = jnp.zeros((G, out_pad), jnp.float32).at[:H, :O].set(params["w_fc"].T)
    bfc = jnp.zeros((1, out_pad), jnp.float32).at[0, :O].set(params["b_fc"])
    emb = jnp.zeros((vocab_pad, H), jnp.float32).at[:vocab, :].set(
        params["embedding"])
    return dict(emb=emb, wih_f=wih_f, whh_f=whh_f, b_if=b_if, b_hn=b_hn,
                wfc=wfc, bfc=bfc)


@jax.jit
def simple_qa_forward(input_ids, params):
    """input_ids: (seq_len, batch) int token ids, time-major like nn.GRU."""
    S, B = input_ids.shape
    vocab, H = params["embedding"].shape
    O = params["b_fc"].shape[0]

    Bp = max(8, _ceil_to(B, 8))           # batch  -> sublane multiple
    G = max(128, _ceil_to(H, 128))        # per-gate lane block (vreg aligned)
    Op = max(128, _ceil_to(O, 128))       # output -> lane-dense slab
    Vp = _ceil_to(vocab, 8)

    packed = pack_params(params, gate_pad=G, out_pad=Op, vocab_pad=Vp)

    # Pad token ids along batch (dummy token 0) instead of padding activations.
    ids = jnp.zeros((S, Bp), jnp.int32).at[:, :B].set(input_ids.astype(jnp.int32))
    ids_flat = ids.reshape(S * Bp)

    full = lambda shape: pl.BlockSpec(shape, lambda *_, nd=len(shape): (0,) * nd)

    out = pl.pallas_call(
        functools.partial(gru_qa_kernel, seq_len=S, batch_pad=Bp, gate_pad=G),
        out_shape=jax.ShapeDtypeStruct((Bp, Op), jnp.float32),
        grid_spec=pltpu.PrefetchScalarGridSpec(
            num_scalar_prefetch=1,             # token ids -> SMEM
            grid=(1,),
            in_specs=[
                full((Vp, H)),                 # embedding table (VMEM resident)
                full((H, 3 * G)),              # fused W_ih^T
                full((G, 3 * G)),              # fused W_hh^T
                full((1, 3 * G)),              # fused input bias
                full((1, G)),                  # b_hn
                full((G, Op)),                 # W_fc^T (lane padded)
                full((1, Op)),                 # b_fc
            ],
            out_specs=full((Bp, Op)),
            scratch_shapes=[
                pltpu.VMEM((S * Bp, H), jnp.float32),        # gathered x
                pltpu.VMEM((S * Bp, 3 * G), jnp.float32),    # hoisted gi
            ]),
        compiler_params=pltpu.CompilerParams(
            dimension_semantics=("arbitrary",),
            vmem_limit_bytes=32 * 1024 * 1024),
    )(ids_flat, packed["emb"], packed["wih_f"], packed["whh_f"],
      packed["b_if"], packed["b_hn"], packed["wfc"], packed["bfc"])

    return out[:B, :O]


def gru_reference(input_ids, params):
    """Pure-JAX reference matching PyTorch SimpleQAModel.forward."""
    H = params["embedding"].shape[1]
    emb = jnp.take(params["embedding"], input_ids, axis=0)       # (S, B, H)
    w_ih = params["w_ih"].reshape(3, H, H)
    w_hh = params["w_hh"].reshape(3, H, H)
    b_ih = params["b_ih"].reshape(3, H)
    b_hh = params["b_hh"].reshape(3, H)
    S, B, _ = emb.shape
    h = jnp.zeros((B, H), jnp.float32)
    for t in range(S):
        x = emb[t]
        r = jax.nn.sigmoid(x @ w_ih[0].T + b_ih[0] + h @ w_hh[0].T + b_hh[0])
        z = jax.nn.sigmoid(x @ w_ih[1].T + b_ih[1] + h @ w_hh[1].T + b_hh[1])
        n = jnp.tanh(x @ w_ih[2].T + b_ih[2] + r * (h @ w_hh[2].T + b_hh[2]))
        h = (1.0 - z) * n + z * h
    return h @ params["w_fc"].T + params["b_fc"]


def init_params(key, vocab_size, hidden_size, output_size):
    """PyTorch-layout params: weight_ih/hh_l0 are (3H, H) with gates [r; z; n]."""
    ks = jax.random.split(key, 7)
    H = hidden_size
    bound = 1.0 / (H ** 0.5)
    return {
        "embedding": jax.random.normal(ks[0], (vocab_size, H), jnp.float32),
        "w_ih": jax.random.uniform(ks[1], (3 * H, H), jnp.float32, -bound, bound),
        "w_hh": jax.random.uniform(ks[2], (3 * H, H), jnp.float32, -bound, bound),
        "b_ih": jax.random.uniform(ks[3], (3 * H,), jnp.float32, -bound, bound),
        "b_hh": jax.random.uniform(ks[4], (3 * H,), jnp.float32, -bound, bound),
        "w_fc": jax.random.uniform(ks[5], (output_size, H), jnp.float32, -bound, bound),
        "b_fc": jax.random.uniform(ks[6], (output_size,), jnp.float32, -bound, bound),
    }


if __name__ == "__main__":
    vocab_size = 100          # nn.Embedding "input_size"
    hidden_size = 32
    output_size = 2
    seq_len, batch = 8, 2

    key = jax.random.PRNGKey(0)
    k_params, k_ids = jax.random.split(key)
    params = init_params(k_params, vocab_size, hidden_size, output_size)

    # (seq_len, batch) int32 token ids, time-major like PyTorch GRU default.
    input_ids = jax.random.randint(k_ids, (seq_len, batch), 0, vocab_size,
                                   dtype=jnp.int32)

    out = simple_qa_forward(input_ids, params)
    jax.block_until_ready(out)
    assert out.shape == (batch, output_size), out.shape

    ref = gru_reference(input_ids, params)
    assert jnp.allclose(out, ref, atol=1e-3, rtol=1e-3), (out, ref)

    print("KERNEL_OK")
</pallas_src>

<mosaic_0001>
module attributes {stable_mosaic.version = 11 : i64} {
  func.func @gru_qa_kernel(%arg0: i32, %arg1: memref<64xi32, #tpu.memory_space<smem>>, %arg2: memref<104x32xf32, #tpu.memory_space<vmem>>, %arg3: memref<32x384xf32, #tpu.memory_space<vmem>>, %arg4: memref<128x384xf32, #tpu.memory_space<vmem>>, %arg5: memref<1x384xf32, #tpu.memory_space<vmem>>, %arg6: memref<1x128xf32, #tpu.memory_space<vmem>>, %arg7: memref<128x128xf32, #tpu.memory_space<vmem>>, %arg8: memref<1x128xf32, #tpu.memory_space<vmem>>, %arg9: memref<8x128xf32, #tpu.memory_space<vmem>>, %arg10: memref<64x32xf32, #tpu.memory_space<vmem>>, %arg11: memref<64x384xf32, #tpu.memory_space<vmem>>) attributes {dimension_semantics = [#tpu.dimension_semantics<arbitrary>], iteration_bounds = array<i64: 1>, scalar_prefetch = 1 : i64, scratch_operands = 2 : i64, tpu.core_type = #tpu.core_type<tc>, window_params = [{pipeline_mode = #tpu.pipeline_mode<synchronous>, transform_indices = @transform_0, window_bounds = array<i64: 104, 32>}, {pipeline_mode = #tpu.pipeline_mode<synchronous>, transform_indices = @transform_1, window_bounds = array<i64: 32, 384>}, {pipeline_mode = #tpu.pipeline_mode<synchronous>, transform_indices = @transform_2, window_bounds = array<i64: 128, 384>}, {pipeline_mode = #tpu.pipeline_mode<synchronous>, transform_indices = @transform_3, window_bounds = array<i64: 1, 384>}, {pipeline_mode = #tpu.pipeline_mode<synchronous>, transform_indices = @transform_4, window_bounds = array<i64: 1, 128>}, {pipeline_mode = #tpu.pipeline_mode<synchronous>, transform_indices = @transform_5, window_bounds = array<i64: 128, 128>}, {pipeline_mode = #tpu.pipeline_mode<synchronous>, transform_indices = @transform_6, window_bounds = array<i64: 1, 128>}, {pipeline_mode = #tpu.pipeline_mode<synchronous>, transform_indices = @transform_7, window_bounds = array<i64: 8, 128>}]} {
    %c0_i32 = arith.constant 0 : i32
    %c8_i32 = arith.constant 8 : i32
    %0 = arith.muli %c0_i32, %c8_i32 : i32
    %1 = tpu.assume_multiple %0, 8 : i32
    %c8_i32_0 = arith.constant 8 : i32
    %2 = arith.muli %c0_i32, %c8_i32_0 : i32
    %c0_i32_1 = arith.constant 0 : i32
    %3 = arith.addi %2, %c0_i32_1 : i32
    %4 = arith.index_cast %3 : i32 to index
    %5 = memref.load %arg1[%4] : memref<64xi32, #tpu.memory_space<smem>>
    %6 = arith.index_cast %5 : i32 to index
    %c0 = arith.constant 0 : index
    %7 = vector.load %arg2[%6, %c0] : memref<104x32xf32, #tpu.memory_space<vmem>>, vector<1x32xf32>
    %c8_i32_2 = arith.constant 8 : i32
    %8 = arith.muli %c0_i32, %c8_i32_2 : i32
    %c1_i32 = arith.constant 1 : i32
    %9 = arith.addi %8, %c1_i32 : i32
    %10 = arith.index_cast %9 : i32 to index
    %11 = memref.load %arg1[%10] : memref<64xi32, #tpu.memory_space<smem>>
    %12 = arith.index_cast %11 : i32 to index
    %c0_3 = arith.constant 0 : index
    %13 = vector.load %arg2[%12, %c0_3] : memref<104x32xf32, #tpu.memory_space<vmem>>, vector<1x32xf32>
    %c8_i32_4 = arith.constant 8 : i32
    %14 = arith.muli %c0_i32, %c8_i32_4 : i32
    %c2_i32 = arith.constant 2 : i32
    %15 = arith.addi %14, %c2_i32 : i32
    %16 = arith.index_cast %15 : i32 to index
    %17 = memref.load %arg1[%16] : memref<64xi32, #tpu.memory_space<smem>>
    %18 = arith.index_cast %17 : i32 to index
    %c0_5 = arith.constant 0 : index
    %19 = vector.load %arg2[%18, %c0_5] : memref<104x32xf32, #tpu.memory_space<vmem>>, vector<1x32xf32>
    %c8_i32_6 = arith.constant 8 : i32
    %20 = arith.muli %c0_i32, %c8_i32_6 : i32
    %c3_i32 = arith.constant 3 : i32
    %21 = arith.addi %20, %c3_i32 : i32
    %22 = arith.index_cast %21 : i32 to index
    %23 = memref.load %arg1[%22] : memref<64xi32, #tpu.memory_space<smem>>
    %24 = arith.index_cast %23 : i32 to index
    %c0_7 = arith.constant 0 : index
    %25 = vector.load %arg2[%24, %c0_7] : memref<104x32xf32, #tpu.memory_space<vmem>>, vector<1x32xf32>
    %c8_i32_8 = arith.constant 8 : i32
    %26 = arith.muli %c0_i32, %c8_i32_8 : i32
    %c4_i32 = arith.constant 4 : i32
    %27 = arith.addi %26, %c4_i32 : i32
    %28 = arith.index_cast %27 : i32 to index
    %29 = memref.load %arg1[%28] : memref<64xi32, #tpu.memory_space<smem>>
    %30 = arith.index_cast %29 : i32 to index
    %c0_9 = arith.constant 0 : index
    %31 = vector.load %arg2[%30, %c0_9] : memref<104x32xf32, #tpu.memory_space<vmem>>, vector<1x32xf32>
    %c8_i32_10 = arith.constant 8 : i32
    %32 = arith.muli %c0_i32, %c8_i32_10 : i32
    %c5_i32 = arith.constant 5 : i32
    %33 = arith.addi %32, %c5_i32 : i32
    %34 = arith.index_cast %33 : i32 to index
    %35 = memref.load %arg1[%34] : memref<64xi32, #tpu.memory_space<smem>>
    %36 = arith.index_cast %35 : i32 to index
    %c0_11 = arith.constant 0 : index
    %37 = vector.load %arg2[%36, %c0_11] : memref<104x32xf32, #tpu.memory_space<vmem>>, vector<1x32xf32>
    %c8_i32_12 = arith.constant 8 : i32
    %38 = arith.muli %c0_i32, %c8_i32_12 : i32
    %c6_i32 = arith.constant 6 : i32
    %39 = arith.addi %38, %c6_i32 : i32
    %40 = arith.index_cast %39 : i32 to index
    %41 = memref.load %arg1[%40] : memref<64xi32, #tpu.memory_space<smem>>
    %42 = arith.index_cast %41 : i32 to index
    %c0_13 = arith.constant 0 : index
    %43 = vector.load %arg2[%42, %c0_13] : memref<104x32xf32, #tpu.memory_space<vmem>>, vector<1x32xf32>
    %c8_i32_14 = arith.constant 8 : i32
    %44 = arith.muli %c0_i32, %c8_i32_14 : i32
    %c7_i32 = arith.constant 7 : i32
    %45 = arith.addi %44, %c7_i32 : i32
    %46 = arith.index_cast %45 : i32 to index
    %47 = memref.load %arg1[%46] : memref<64xi32, #tpu.memory_space<smem>>
    %48 = arith.index_cast %47 : i32 to index
    %c0_15 = arith.constant 0 : index
    %49 = vector.load %arg2[%48, %c0_15] : memref<104x32xf32, #tpu.memory_space<vmem>>, vector<1x32xf32>
    %50 = tpu.concatenate %7, %13, %19, %25, %31, %37, %43, %49 in 0 : vector<1x32xf32>, vector<1x32xf32>, vector<1x32xf32>, vector<1x32xf32>, vector<1x32xf32>, vector<1x32xf32>, vector<1x32xf32>, vector<1x32xf32> -> vector<8x32xf32>
    %51 = arith.index_cast %1 : i32 to index
    %c0_16 = arith.constant 0 : index
    %52 = vector.load %arg10[%51, %c0_16] : memref<64x32xf32, #tpu.memory_space<vmem>>, vector<8x32xf32>
    tpu.vector_store %arg10[%51, %c0_16], %50 {strides = array<i32>} : memref<64x32xf32, #tpu.memory_space<vmem>>, vector<8x32xf32>,
    %c1_i32_17 = arith.constant 1 : i32
    %c8_i32_18 = arith.constant 8 : i32
    %53 = arith.muli %c1_i32_17, %c8_i32_18 : i32
    %54 = tpu.assume_multiple %53, 8 : i32
    %c8_i32_19 = arith.constant 8 : i32
    %55 = arith.muli %c1_i32_17, %c8_i32_19 : i32
    %c0_i32_20 = arith.constant 0 : i32
    %56 = arith.addi %55, %c0_i32_20 : i32
    %57 = arith.index_cast %56 : i32 to index
    %58 = memref.load %arg1[%57] : memref<64xi32, #tpu.memory_space<smem>>
    %59 = arith.index_cast %58 : i32 to index
    %c0_21 = arith.constant 0 : index
    %60 = vector.load %arg2[%59, %c0_21] : memref<104x32xf32, #tpu.memory_space<vmem>>, vector<1x32xf32>
    %c8_i32_22 = arith.constant 8 : i32
    %61 = arith.muli %c1_i32_17, %c8_i32_22 : i32
    %c1_i32_23 = arith.constant 1 : i32
    %62 = arith.addi %61, %c1_i32_23 : i32
    %63 = arith.index_cast %62 : i32 to index
    %64 = memref.load %arg1[%63] : memref<64xi32, #tpu.memory_space<smem>>
    %65 = arith.index_cast %64 : i32 to index
    %c0_24 = arith.constant 0 : index
    %66 = vector.load %arg2[%65, %c0_24] : memref<104x32xf32, #tpu.memory_space<vmem>>, vector<1x32xf32>
    %c8_i32_25 = arith.constant 8 : i32
    %67 = arith.muli %c1_i32_17, %c8_i32_25 : i32
    %c2_i32_26 = arith.constant 2 : i32
    %68 = arith.addi %67, %c2_i32_26 : i32
    %69 = arith.index_cast %68 : i32 to index
    %70 = memref.load %arg1[%69] : memref<64xi32, #tpu.memory_space<smem>>
    %71 = arith.index_cast %70 : i32 to index
    %c0_27 = arith.constant 0 : index
    %72 = vector.load %arg2[%71, %c0_27] : memref<104x32xf32, #tpu.memory_space<vmem>>, vector<1x32xf32>
    %c8_i32_28 = arith.constant 8 : i32
    %73 = arith.muli %c1_i32_17, %c8_i32_28 : i32
    %c3_i32_29 = arith.constant 3 : i32
    %74 = arith.addi %73, %c3_i32_29 : i32
    %75 = arith.index_cast %74 : i32 to index
    %76 = memref.load %arg1[%75] : memref<64xi32, #tpu.memory_space<smem>>
    %77 = arith.index_cast %76 : i32 to index
    %c0_30 = arith.constant 0 : index
    %78 = vector.load %arg2[%77, %c0_30] : memref<104x32xf32, #tpu.memory_space<vmem>>, vector<1x32xf32>
    %c8_i32_31 = arith.constant 8 : i32
    %79 = arith.muli %c1_i32_17, %c8_i32_31 : i32
    %c4_i32_32 = arith.constant 4 : i32
    %80 = arith.addi %79, %c4_i32_32 : i32
    %81 = arith.index_cast %80 : i32 to index
    %82 = memref.load %arg1[%81] : memref<64xi32, #tpu.memory_space<smem>>
    %83 = arith.index_cast %82 : i32 to index
    %c0_33 = arith.constant 0 : index
    %84 = vector.load %arg2[%83, %c0_33] : memref<104x32xf32, #tpu.memory_space<vmem>>, vector<1x32xf32>
    %c8_i32_34 = arith.constant 8 : i32
    %85 = arith.muli %c1_i32_17, %c8_i32_34 : i32
    %c5_i32_35 = arith.constant 5 : i32
    %86 = arith.addi %85, %c5_i32_35 : i32
    %87 = arith.index_cast %86 : i32 to index
    %88 = memref.load %arg1[%87] : memref<64xi32, #tpu.memory_space<smem>>
    %89 = arith.index_cast %88 : i32 to index
    %c0_36 = arith.constant 0 : index
    %90 = vector.load %arg2[%89, %c0_36] : memref<104x32xf32, #tpu.memory_space<vmem>>, vector<1x32xf32>
    %c8_i32_37 = arith.constant 8 : i32
    %91 = arith.muli %c1_i32_17, %c8_i32_37 : i32
    %c6_i32_38 = arith.constant 6 : i32
    %92 = arith.addi %91, %c6_i32_38 : i32
    %93 = arith.index_cast %92 : i32 to index
    %94 = memref.load %arg1[%93] : memref<64xi32, #tpu.memory_space<smem>>
    %95 = arith.index_cast %94 : i32 to index
    %c0_39 = arith.constant 0 : index
    %96 = vector.load %arg2[%95, %c0_39] : memref<104x32xf32, #tpu.memory_space<vmem>>, vector<1x32xf32>
    %c8_i32_40 = arith.constant 8 : i32
    %97 = arith.muli %c1_i32_17, %c8_i32_40 : i32
    %c7_i32_41 = arith.constant 7 : i32
    %98 = arith.addi %97, %c7_i32_41 : i32
    %99 = arith.index_cast %98 : i32 to index
    %100 = memref.load %arg1[%99] : memref<64xi32, #tpu.memory_space<smem>>
    %101 = arith.index_cast %100 : i32 to index
    %c0_42 = arith.constant 0 : index
    %102 = vector.load %arg2[%101, %c0_42] : memref<104x32xf32, #tpu.memory_space<vmem>>, vector<1x32xf32>
    %103 = tpu.concatenate %60, %66, %72, %78, %84, %90, %96, %102 in 0 : vector<1x32xf32>, vector<1x32xf32>, vector<1x32xf32>, vector<1x32xf32>, vector<1x32xf32>, vector<1x32xf32>, vector<1x32xf32>, vector<1x32xf32> -> vector<8x32xf32>
    %104 = arith.index_cast %54 : i32 to index
    %c0_43 = arith.constant 0 : index
    %105 = vector.load %arg10[%104, %c0_43] : memref<64x32xf32, #tpu.memory_space<vmem>>, vector<8x32xf32>
    tpu.vector_store %arg10[%104, %c0_43], %103 {strides = array<i32>} : memref<64x32xf32, #tpu.memory_space<vmem>>, vector<8x32xf32>,
    %c2_i32_44 = arith.constant 2 : i32
    %c8_i32_45 = arith.constant 8 : i32
    %106 = arith.muli %c2_i32_44, %c8_i32_45 : i32
    %107 = tpu.assume_multiple %106, 8 : i32
    %c8_i32_46 = arith.constant 8 : i32
    %108 = arith.muli %c2_i32_44, %c8_i32_46 : i32
    %c0_i32_47 = arith.constant 0 : i32
    %109 = arith.addi %108, %c0_i32_47 : i32
    %110 = arith.index_cast %109 : i32 to index
    %111 = memref.load %arg1[%110] : memref<64xi32, #tpu.memory_space<smem>>
    %112 = arith.index_cast %111 : i32 to index
    %c0_48 = arith.constant 0 : index
    %113 = vector.load %arg2[%112, %c0_48] : memref<104x32xf32, #tpu.memory_space<vmem>>, vector<1x32xf32>
    %c8_i32_49 = arith.constant 8 : i32
    %114 = arith.muli %c2_i32_44, %c8_i32_49 : i32
    %c1_i32_50 = arith.constant 1 : i32
    %115 = arith.addi %114, %c1_i32_50 : i32
    %116 = arith.index_cast %115 : i32 to index
    %117 = memref.load %arg1[%116] : memref<64xi32, #tpu.memory_space<smem>>
    %118 = arith.index_cast %117 : i32 to index
    %c0_51 = arith.constant 0 : index
    %119 = vector.load %arg2[%118, %c0_51] : memref<104x32xf32, #tpu.memory_space<vmem>>, vector<1x32xf32>
    %c8_i32_52 = arith.constant 8 : i32
    %120 = arith.muli %c2_i32_44, %c8_i32_52 : i32
    %c2_i32_53 = arith.constant 2 : i32
    %121 = arith.addi %120, %c2_i32_53 : i32
    %122 = arith.index_cast %121 : i32 to index
    %123 = memref.load %arg1[%122] : memref<64xi32, #tpu.memory_space<smem>>
    %124 = arith.index_cast %123 : i32 to index
    %c0_54 = arith.constant 0 : index
    %125 = vector.load %arg2[%124, %c0_54] : memref<104x32xf32, #tpu.memory_space<vmem>>, vector<1x32xf32>
    %c8_i32_55 = arith.constant 8 : i32
    %126 = arith.muli %c2_i32_44, %c8_i32_55 : i32
    %c3_i32_56 = arith.constant 3 : i32
    %127 = arith.addi %126, %c3_i32_56 : i32
    %128 = arith.index_cast %127 : i32 to index
    %129 = memref.load %arg1[%128] : memref<64xi32, #tpu.memory_space<smem>>
    %130 = arith.index_cast %129 : i32 to index
    %c0_57 = arith.constant 0 : index
    %131 = vector.load %arg2[%130, %c0_57] : memref<104x32xf32, #tpu.memory_space<vmem>>, vector<1x32xf32>
    %c8_i32_58 = arith.constant 8 : i32
    %132 = arith.muli %c2_i32_44, %c8_i32_58 : i32
    %c4_i32_59 = arith.constant 4 : i32
    %133 = arith.addi %132, %c4_i32_59 : i32
    %134 = arith.index_cast %133 : i32 to index
    %135 = memref.load %arg1[%134] : memref<64xi32, #tpu.memory_space<smem>>
    %136 = arith.index_cast %135 : i32 to index
    %c0_60 = arith.constant 0 : index
    %137 = vector.load %arg2[%136, %c0_60] : memref<104x32xf32, #tpu.memory_space<vmem>>, vector<1x32xf32>
    %c8_i32_61 = arith.constant 8 : i32
    %138 = arith.muli %c2_i32_44, %c8_i32_61 : i32
    %c5_i32_62 = arith.constant 5 : i32
    %139 = arith.addi %138, %c5_i32_62 : i32
    %140 = arith.index_cast %139 : i32 to index
    %141 = memref.load %arg1[%140] : memref<64xi32, #tpu.memory_space<smem>>
    %142 = arith.index_cast %141 : i32 to index
    %c0_63 = arith.constant 0 : index
    %143 = vector.load %arg2[%142, %c0_63] : memref<104x32xf32, #tpu.memory_space<vmem>>, vector<1x32xf32>
    %c8_i32_64 = arith.constant 8 : i32
    %144 = arith.muli %c2_i32_44, %c8_i32_64 : i32
    %c6_i32_65 = arith.constant 6 : i32
    %145 = arith.addi %144, %c6_i32_65 : i32
    %146 = arith.index_cast %145 : i32 to index
    %147 = memref.load %arg1[%146] : memref<64xi32, #tpu.memory_space<smem>>
    %148 = arith.index_cast %147 : i32 to index
    %c0_66 = arith.constant 0 : index
    %149 = vector.load %arg2[%148, %c0_66] : memref<104x32xf32, #tpu.memory_space<vmem>>, vector<1x32xf32>
    %c8_i32_67 = arith.constant 8 : i32
    %150 = arith.muli %c2_i32_44, %c8_i32_67 : i32
    %c7_i32_68 = arith.constant 7 : i32
    %151 = arith.addi %150, %c7_i32_68 : i32
    %152 = arith.index_cast %151 : i32 to index
    %153 = memref.load %arg1[%152] : memref<64xi32, #tpu.memory_space<smem>>
    %154 = arith.index_cast %153 : i32 to index
    %c0_69 = arith.constant 0 : index
    %155 = vector.load %arg2[%154, %c0_69] : memref<104x32xf32, #tpu.memory_space<vmem>>, vector<1x32xf32>
    %156 = tpu.concatenate %113, %119, %125, %131, %137, %143, %149, %155 in 0 : vector<1x32xf32>, vector<1x32xf32>, vector<1x32xf32>, vector<1x32xf32>, vector<1x32xf32>, vector<1x32xf32>, vector<1x32xf32>, vector<1x32xf32> -> vector<8x32xf32>
    %157 = arith.index_cast %107 : i32 to index
    %c0_70 = arith.constant 0 : index
    %158 = vector.load %arg10[%157, %c0_70] : memref<64x32xf32, #tpu.memory_space<vmem>>, vector<8x32xf32>
    tpu.vector_store %arg10[%157, %c0_70], %156 {strides = array<i32>} : memref<64x32xf32, #tpu.memory_space<vmem>>, vector<8x32xf32>,
    %c3_i32_71 = arith.constant 3 : i32
    %c8_i32_72 = arith.constant 8 : i32
    %159 = arith.muli %c3_i32_71, %c8_i32_72 : i32
    %160 = tpu.assume_multiple %159, 8 : i32
    %c8_i32_73 = arith.constant 8 : i32
    %161 = arith.muli %c3_i32_71, %c8_i32_73 : i32
    %c0_i32_74 = arith.constant 0 : i32
    %162 = arith.addi %161, %c0_i32_74 : i32
    %163 = arith.index_cast %162 : i32 to index
    %164 = memref.load %arg1[%163] : memref<64xi32, #tpu.memory_space<smem>>
    %165 = arith.index_cast %164 : i32 to index
    %c0_75 = arith.constant 0 : index
    %166 = vector.load %arg2[%165, %c0_75] : memref<104x32xf32, #tpu.memory_space<vmem>>, vector<1x32xf32>
    %c8_i32_76 = arith.constant 8 : i32
    %167 = arith.muli %c3_i32_71, %c8_i32_76 : i32
    %c1_i32_77 = arith.constant 1 : i32
    %168 = arith.addi %167, %c1_i32_77 : i32
    %169 = arith.index_cast %168 : i32 to index
    %170 = memref.load %arg1[%169] : memref<64xi32, #tpu.memory_space<smem>>
    %171 = arith.index_cast %170 : i32 to index
    %c0_78 = arith.constant 0 : index
    %172 = vector.load %arg2[%171, %c0_78] : memref<104x32xf32, #tpu.memory_space<vmem>>, vector<1x32xf32>
    %c8_i32_79 = arith.constant 8 : i32
    %173 = arith.muli %c3_i32_71, %c8_i32_79 : i32
    %c2_i32_80 = arith.constant 2 : i32
    %174 = arith.addi %173, %c2_i32_80 : i32
    %175 = arith.index_cast %174 : i32 to index
    %176 = memref.load %arg1[%175] : memref<64xi32, #tpu.memory_space<smem>>
    %177 = arith.index_cast %176 : i32 to index
    %c0_81 = arith.constant 0 : index
    %178 = vector.load %arg2[%177, %c0_81] : memref<104x32xf32, #tpu.memory_space<vmem>>, vector<1x32xf32>
    %c8_i32_82 = arith.constant 8 : i32
    %179 = arith.muli %c3_i32_71, %c8_i32_82 : i32
    %c3_i32_83 = arith.constant 3 : i32
    %180 = arith.addi %179, %c3_i32_83 : i32
    %181 = arith.index_cast %180 : i32 to index
    %182 = memref.load %arg1[%181] : memref<64xi32, #tpu.memory_space<smem>>
    %183 = arith.index_cast %182 : i32 to index
    %c0_84 = arith.constant 0 : index
    %184 = vector.load %arg2[%183, %c0_84] : memref<104x32xf32, #tpu.memory_space<vmem>>, vector<1x32xf32>
    %c8_i32_85 = arith.constant 8 : i32
    %185 = arith.muli %c3_i32_71, %c8_i32_85 : i32
    %c4_i32_86 = arith.constant 4 : i32
    %186 = arith.addi %185, %c4_i32_86 : i32
    %187 = arith.index_cast %186 : i32 to index
    %188 = memref.load %arg1[%187] : memref<64xi32, #tpu.memory_space<smem>>
    %189 = arith.index_cast %188 : i32 to index
    %c0_87 = arith.constant 0 : index
    %190 = vector.load %arg2[%189, %c0_87] : memref<104x32xf32, #tpu.memory_space<vmem>>, vector<1x32xf32>
    %c8_i32_88 = arith.constant 8 : i32
    %191 = arith.muli %c3_i32_71, %c8_i32_88 : i32
    %c5_i32_89 = arith.constant 5 : i32
    %192 = arith.addi %191, %c5_i32_89 : i32
    %193 = arith.index_cast %192 : i32 to index
    %194 = memref.load %arg1[%193] : memref<64xi32, #tpu.memory_space<smem>>
    %195 = arith.index_cast %194 : i32 to index
    %c0_90 = arith.constant 0 : index
    %196 = vector.load %arg2[%195, %c0_90] : memref<104x32xf32, #tpu.memory_space<vmem>>, vector<1x32xf32>
    %c8_i32_91 = arith.constant 8 : i32
    %197 = arith.muli %c3_i32_71, %c8_i32_91 : i32
    %c6_i32_92 = arith.constant 6 : i32
    %198 = arith.addi %197, %c6_i32_92 : i32
    %199 = arith.index_cast %198 : i32 to index
    %200 = memref.load %arg1[%199] : memref<64xi32, #tpu.memory_space<smem>>
    %201 = arith.index_cast %200 : i32 to index
    %c0_93 = arith.constant 0 : index
    %202 = vector.load %arg2[%201, %c0_93] : memref<104x32xf32, #tpu.memory_space<vmem>>, vector<1x32xf32>
    %c8_i32_94 = arith.constant 8 : i32
    %203 = arith.muli %c3_i32_71, %c8_i32_94 : i32
    %c7_i32_95 = arith.constant 7 : i32
    %204 = arith.addi %203, %c7_i32_95 : i32
    %205 = arith.index_cast %204 : i32 to index
    %206 = memref.load %arg1[%205] : memref<64xi32, #tpu.memory_space<smem>>
    %207 = arith.index_cast %206 : i32 to index
    %c0_96 = arith.constant 0 : index
    %208 = vector.load %arg2[%207, %c0_96] : memref<104x32xf32, #tpu.memory_space<vmem>>, vector<1x32xf32>
    %209 = tpu.concatenate %166, %172, %178, %184, %190, %196, %202, %208 in 0 : vector<1x32xf32>, vector<1x32xf32>, vector<1x32xf32>, vector<1x32xf32>, vector<1x32xf32>, vector<1x32xf32>, vector<1x32xf32>, vector<1x32xf32> -> vector<8x32xf32>
    %210 = arith.index_cast %160 : i32 to index
    %c0_97 = arith.constant 0 : index
    %211 = vector.load %arg10[%210, %c0_97] : memref<64x32xf32, #tpu.memory_space<vmem>>, vector<8x32xf32>
    tpu.vector_store %arg10[%210, %c0_97], %209 {strides = array<i32>} : memref<64x32xf32, #tpu.memory_space<vmem>>, vector<8x32xf32>,
    %c4_i32_98 = arith.constant 4 : i32
    %c8_i32_99 = arith.constant 8 : i32
    %212 = arith.muli %c4_i32_98, %c8_i32_99 : i32
    %213 = tpu.assume_multiple %212, 8 : i32
    %c8_i32_100 = arith.constant 8 : i32
    %214 = arith.muli %c4_i32_98, %c8_i32_100 : i32
    %c0_i32_101 = arith.constant 0 : i32
    %215 = arith.addi %214, %c0_i32_101 : i32
    %216 = arith.index_cast %215 : i32 to index
    %217 = memref.load %arg1[%216] : memref<64xi32, #tpu.memory_space<smem>>
    %218 = arith.index_cast %217 : i32 to index
    %c0_102 = arith.constant 0 : index
    %219 = vector.load %arg2[%218, %c0_102] : memref<104x32xf32, #tpu.memory_space<vmem>>, vector<1x32xf32>
    %c8_i32_103 = arith.constant 8 : i32
    %220 = arith.muli %c4_i32_98, %c8_i32_103 : i32
    %c1_i32_104 = arith.constant 1 : i32
    %221 = arith.addi %220, %c1_i32_104 : i32
    %222 = arith.index_cast %221 : i32 to index
    %223 = memref.load %arg1[%222] : memref<64xi32, #tpu.memory_space<smem>>
    %224 = arith.index_cast %223 : i32 to index
    %c0_105 = arith.constant 0 : index
    %225 = vector.load %arg2[%224, %c0_105] : memref<104x32xf32, #tpu.memory_space<vmem>>, vector<1x32xf32>
    %c8_i32_106 = arith.constant 8 : i32
    %226 = arith.muli %c4_i32_98, %c8_i32_106 : i32
    %c2_i32_107 = arith.constant 2 : i32
    %227 = arith.addi %226, %c2_i32_107 : i32
    %228 = arith.index_cast %227 : i32 to index
    %229 = memref.load %arg1[%228] : memref<64xi32, #tpu.memory_space<smem>>
    %230 = arith.index_cast %229 : i32 to index
    %c0_108 = arith.constant 0 : index
    %231 = vector.load %arg2[%230, %c0_108] : memref<104x32xf32, #tpu.memory_space<vmem>>, vector<1x32xf32>
    %c8_i32_109 = arith.constant 8 : i32
    %232 = arith.muli %c4_i32_98, %c8_i32_109 : i32
    %c3_i32_110 = arith.constant 3 : i32
    %233 = arith.addi %232, %c3_i32_110 : i32
    %234 = arith.index_cast %233 : i32 to index
    %235 = memref.load %arg1[%234] : memref<64xi32, #tpu.memory_space<smem>>
    %236 = arith.index_cast %235 : i32 to index
    %c0_111 = arith.constant 0 : index
    %237 = vector.load %arg2[%236, %c0_111] : memref<104x32xf32, #tpu.memory_space<vmem>>, vector<1x32xf32>
    %c8_i32_112 = arith.constant 8 : i32
    %238 = arith.muli %c4_i32_98, %c8_i32_112 : i32
    %c4_i32_113 = arith.constant 4 : i32
    %239 = arith.addi %238, %c4_i32_113 : i32
    %240 = arith.index_cast %239 : i32 to index
    %241 = memref.load %arg1[%240] : memref<64xi32, #tpu.memory_space<smem>>
    %242 = arith.index_cast %241 : i32 to index
    %c0_114 = arith.constant 0 : index
    %243 = vector.load %arg2[%242, %c0_114] : memref<104x32xf32, #tpu.memory_space<vmem>>, vector<1x32xf32>
    %c8_i32_115 = arith.constant 8 : i32
    %244 = arith.muli %c4_i32_98, %c8_i32_115 : i32
    %c5_i32_116 = arith.constant 5 : i32
    %245 = arith.addi %244, %c5_i32_116 : i32
    %246 = arith.index_cast %245 : i32 to index
    %247 = memref.load %arg1[%246] : memref<64xi32, #tpu.memory_space<smem>>
    %248 = arith.index_cast %247 : i32 to index
    %c0_117 = arith.constant 0 : index
    %249 = vector.load %arg2[%248, %c0_117] : memref<104x32xf32, #tpu.memory_space<vmem>>, vector<1x32xf32>
    %c8_i32_118 = arith.constant 8 : i32
    %250 = arith.muli %c4_i32_98, %c8_i32_118 : i32
    %c6_i32_119 = arith.constant 6 : i32
    %251 = arith.addi %250, %c6_i32_119 : i32
    %252 = arith.index_cast %251 : i32 to index
    %253 = memref.load %arg1[%252] : memref<64xi32, #tpu.memory_space<smem>>
    %254 = arith.index_cast %253 : i32 to index
    %c0_120 = arith.constant 0 : index
    %255 = vector.load %arg2[%254, %c0_120] : memref<104x32xf32, #tpu.memory_space<vmem>>, vector<1x32xf32>
    %c8_i32_121 = arith.constant 8 : i32
    %256 = arith.muli %c4_i32_98, %c8_i32_121 : i32
    %c7_i32_122 = arith.constant 7 : i32
    %257 = arith.addi %256, %c7_i32_122 : i32
    %258 = arith.index_cast %257 : i32 to index
    %259 = memref.load %arg1[%258] : memref<64xi32, #tpu.memory_space<smem>>
    %260 = arith.index_cast %259 : i32 to index
    %c0_123 = arith.constant 0 : index
    %261 = vector.load %arg2[%260, %c0_123] : memref<104x32xf32, #tpu.memory_space<vmem>>, vector<1x32xf32>
    %262 = tpu.concatenate %219, %225, %231, %237, %243, %249, %255, %261 in 0 : vector<1x32xf32>, vector<1x32xf32>, vector<1x32xf32>, vector<1x32xf32>, vector<1x32xf32>, vector<1x32xf32>, vector<1x32xf32>, vector<1x32xf32> -> vector<8x32xf32>
    %263 = arith.index_cast %213 : i32 to index
    %c0_124 = arith.constant 0 : index
    %264 = vector.load %arg10[%263, %c0_124] : memref<64x32xf32, #tpu.memory_space<vmem>>, vector<8x32xf32>
    tpu.vector_store %arg10[%263, %c0_124], %262 {strides = array<i32>} : memref<64x32xf32, #tpu.memory_space<vmem>>, vector<8x32xf32>,
    %c5_i32_125 = arith.constant 5 : i32
    %c8_i32_126 = arith.constant 8 : i32
    %265 = arith.muli %c5_i32_125, %c8_i32_126 : i32
    %266 = tpu.assume_multiple %265, 8 : i32
    %c8_i32_127 = arith.constant 8 : i32
    %267 = arith.muli %c5_i32_125, %c8_i32_127 : i32
    %c0_i32_128 = arith.constant 0 : i32
    %268 = arith.addi %267, %c0_i32_128 : i32
    %269 = arith.index_cast %268 : i32 to index
    %270 = memref.load %arg1[%269] : memref<64xi32, #tpu.memory_space<smem>>
    %271 = arith.index_cast %270 : i32 to index
    %c0_129 = arith.constant 0 : index
    %272 = vector.load %arg2[%271, %c0_129] : memref<104x32xf32, #tpu.memory_space<vmem>>, vector<1x32xf32>
    %c8_i32_130 = arith.constant 8 : i32
    %273 = arith.muli %c5_i32_125, %c8_i32_130 : i32
    %c1_i32_131 = arith.constant 1 : i32
    %274 = arith.addi %273, %c1_i32_131 : i32
    %275 = arith.index_cast %274 : i32 to index
    %276 = memref.load %arg1[%275] : memref<64xi32, #tpu.memory_space<smem>>
    %277 = arith.index_cast %276 : i32 to index
    %c0_132 = arith.constant 0 : index
    %278 = vector.load %arg2[%277, %c0_132] : memref<104x32xf32, #tpu.memory_space<vmem>>, vector<1x32xf32>
    %c8_i32_133 = arith.constant 8 : i32
    %279 = arith.muli %c5_i32_125, %c8_i32_133 : i32
    %c2_i32_134 = arith.constant 2 : i32
    %280 = arith.addi %279, %c2_i32_134 : i32
    %281 = arith.index_cast %280 : i32 to index
    %282 = memref.load %arg1[%281] : memref<64xi32, #tpu.memory_space<smem>>
    %283 = arith.index_cast %282 : i32 to index
    %c0_135 = arith.constant 0 : index
    %284 = vector.load %arg2[%283, %c0_135] : memref<104x32xf32, #tpu.memory_space<vmem>>, vector<1x32xf32>
    %c8_i32_136 = arith.constant 8 : i32
    %285 = arith.muli %c5_i32_125, %c8_i32_136 : i32
    %c3_i32_137 = arith.constant 3 : i32
    %286 = arith.addi %285, %c3_i32_137 : i32
    %287 = arith.index_cast %286 : i32 to index
    %288 = memref.load %arg1[%287] : memref<64xi32, #tpu.memory_space<smem>>
    %289 = arith.index_cast %288 : i32 to index
    %c0_138 = arith.constant 0 : index
    %290 = vector.load %arg2[%289, %c0_138] : memref<104x32xf32, #tpu.memory_space<vmem>>, vector<1x32xf32>
    %c8_i32_139 = arith.constant 8 : i32
    %291 = arith.muli %c5_i32_125, %c8_i32_139 : i32
    %c4_i32_140 = arith.constant 4 : i32
    %292 = arith.addi %291, %c4_i32_140 : i32
    %293 = arith.index_cast %292 : i32 to index
    %294 = memref.load %arg1[%293] : memref<64xi32, #tpu.memory_space<smem>>
    %295 = arith.index_cast %294 : i32 to index
    %c0_141 = arith.constant 0 : index
    %296 = vector.load %arg2[%295, %c0_141] : memref<104x32xf32, #tpu.memory_space<vmem>>, vector<1x32xf32>
    %c8_i32_142 = arith.constant 8 : i32
    %297 = arith.muli %c5_i32_125, %c8_i32_142 : i32
    %c5_i32_143 = arith.constant 5 : i32
    %298 = arith.addi %297, %c5_i32_143 : i32
    %299 = arith.index_cast %298 : i32 to index
    %300 = memref.load %arg1[%299] : memref<64xi32, #tpu.memory_space<smem>>
    %301 = arith.index_cast %300 : i32 to index
    %c0_144 = arith.constant 0 : index
    %302 = vector.load %arg2[%301, %c0_144] : memref<104x32xf32, #tpu.memory_space<vmem>>, vector<1x32xf32>
    %c8_i32_145 = arith.constant 8 : i32
    %303 = arith.muli %c5_i32_125, %c8_i32_145 : i32
    %c6_i32_146 = arith.constant 6 : i32
    %304 = arith.addi %303, %c6_i32_146 : i32
    %305 = arith.index_cast %304 : i32 to index
    %306 = memref.load %arg1[%305] : memref<64xi32, #tpu.memory_space<smem>>
    %307 = arith.index_cast %306 : i32 to index
    %c0_147 = arith.constant 0 : index
    %308 = vector.load %arg2[%307, %c0_147] : memref<104x32xf32, #tpu.memory_space<vmem>>, vector<1x32xf32>
    %c8_i32_148 = arith.constant 8 : i32
    %309 = arith.muli %c5_i32_125, %c8_i32_148 : i32
    %c7_i32_149 = arith.constant 7 : i32
    %310 = arith.addi %309, %c7_i32_149 : i32
    %311 = arith.index_cast %310 : i32 to index
    %312 = memref.load %arg1[%311] : memref<64xi32, #tpu.memory_space<smem>>
    %313 = arith.index_cast %312 : i32 to index
    %c0_150 = arith.constant 0 : index
    %314 = vector.load %arg2[%313, %c0_150] : memref<104x32xf32, #tpu.memory_space<vmem>>, vector<1x32xf32>
    %315 = tpu.concatenate %272, %278, %284, %290, %296, %302, %308, %314 in 0 : vector<1x32xf32>, vector<1x32xf32>, vector<1x32xf32>, vector<1x32xf32>, vector<1x32xf32>, vector<1x32xf32>, vector<1x32xf32>, vector<1x32xf32> -> vector<8x32xf32>
    %316 = arith.index_cast %266 : i32 to index
    %c0_151 = arith.constant 0 : index
    %317 = vector.load %arg10[%316, %c0_151] : memref<64x32xf32, #tpu.memory_space<vmem>>, vector<8x32xf32>
    tpu.vector_store %arg10[%316, %c0_151], %315 {strides = array<i32>} : memref<64x32xf32, #tpu.memory_space<vmem>>, vector<8x32xf32>,
    %c6_i32_152 = arith.constant 6 : i32
    %c8_i32_153 = arith.constant 8 : i32
    %318 = arith.muli %c6_i32_152, %c8_i32_153 : i32
    %319 = tpu.assume_multiple %318, 8 : i32
    %c8_i32_154 = arith.constant 8 : i32
    %320 = arith.muli %c6_i32_152, %c8_i32_154 : i32
    %c0_i32_155 = arith.constant 0 : i32
    %321 = arith.addi %320, %c0_i32_155 : i32
    %322 = arith.index_cast %321 : i32 to index
    %323 = memref.load %arg1[%322] : memref<64xi32, #tpu.memory_space<smem>>
    %324 = arith.index_cast %323 : i32 to index
    %c0_156 = arith.constant 0 : index
    %325 = vector.load %arg2[%324, %c0_156] : memref<104x32xf32, #tpu.memory_space<vmem>>, vector<1x32xf32>
    %c8_i32_157 = arith.constant 8 : i32
    %326 = arith.muli %c6_i32_152, %c8_i32_157 : i32
    %c1_i32_158 = arith.constant 1 : i32
    %327 = arith.addi %326, %c1_i32_158 : i32
    %328 = arith.index_cast %327 : i32 to index
    %329 = memref.load %arg1[%328] : memref<64xi32, #tpu.memory_space<smem>>
    %330 = arith.index_cast %329 : i32 to index
    %c0_159 = arith.constant 0 : index
    %331 = vector.load %arg2[%330, %c0_159] : memref<104x32xf32, #tpu.memory_space<vmem>>, vector<1x32xf32>
    %c8_i32_160 = arith.constant 8 : i32
    %332 = arith.muli %c6_i32_152, %c8_i32_160 : i32
    %c2_i32_161 = arith.constant 2 : i32
    %333 = arith.addi %332, %c2_i32_161 : i32
    %334 = arith.index_cast %333 : i32 to index
    %335 = memref.load %arg1[%334] : memref<64xi32, #tpu.memory_space<smem>>
    %336 = arith.index_cast %335 : i32 to index
    %c0_162 = arith.constant 0 : index
    %337 = vector.load %arg2[%336, %c0_162] : memref<104x32xf32, #tpu.memory_space<vmem>>, vector<1x32xf32>
    %c8_i32_163 = arith.constant 8 : i32
    %338 = arith.muli %c6_i32_152, %c8_i32_163 : i32
    %c3_i32_164 = arith.constant 3 : i32
    %339 = arith.addi %338, %c3_i32_164 : i32
    %340 = arith.index_cast %339 : i32 to index
    %341 = memref.load %arg1[%340] : memref<64xi32, #tpu.memory_space<smem>>
    %342 = arith.index_cast %341 : i32 to index
    %c0_165 = arith.constant 0 : index
    %343 = vector.load %arg2[%342, %c0_165] : memref<104x32xf32, #tpu.memory_space<vmem>>, vector<1x32xf32>
    %c8_i32_166 = arith.constant 8 : i32
    %344 = arith.muli %c6_i32_152, %c8_i32_166 : i32
    %c4_i32_167 = arith.constant 4 : i32
    %345 = arith.addi %344, %c4_i32_167 : i32
    %346 = arith.index_cast %345 : i32 to index
    %347 = memref.load %arg1[%346] : memref<64xi32, #tpu.memory_space<smem>>
    %348 = arith.index_cast %347 : i32 to index
    %c0_168 = arith.constant 0 : index
    %349 = vector.load %arg2[%348, %c0_168] : memref<104x32xf32, #tpu.memory_space<vmem>>, vector<1x32xf32>
    %c8_i32_169 = arith.constant 8 : i32
    %350 = arith.muli %c6_i32_152, %c8_i32_169 : i32
    %c5_i32_170 = arith.constant 5 : i32
    %351 = arith.addi %350, %c5_i32_170 : i32
    %352 = arith.index_cast %351 : i32 to index
    %353 = memref.load %arg1[%352] : memref<64xi32, #tpu.memory_space<smem>>
    %354 = arith.index_cast %353 : i32 to index
    %c0_171 = arith.constant 0 : index
    %355 = vector.load %arg2[%354, %c0_171] : memref<104x32xf32, #tpu.memory_space<vmem>>, vector<1x32xf32>
    %c8_i32_172 = arith.constant 8 : i32
    %356 = arith.muli %c6_i32_152, %c8_i32_172 : i32
    %c6_i32_173 = arith.constant 6 : i32
    %357 = arith.addi %356, %c6_i32_173 : i32
    %358 = arith.index_cast %357 : i32 to index
    %359 = memref.load %arg1[%358] : memref<64xi32, #tpu.memory_space<smem>>
    %360 = arith.index_cast %359 : i32 to index
    %c0_174 = arith.constant 0 : index
    %361 = vector.load %arg2[%360, %c0_174] : memref<104x32xf32, #tpu.memory_space<vmem>>, vector<1x32xf32>
    %c8_i32_175 = arith.constant 8 : i32
    %362 = arith.muli %c6_i32_152, %c8_i32_175 : i32
    %c7_i32_176 = arith.constant 7 : i32
    %363 = arith.addi %362, %c7_i32_176 : i32
    %364 = arith.index_cast %363 : i32 to index
    %365 = memref.load %arg1[%364] : memref<64xi32, #tpu.memory_space<smem>>
    %366 = arith.index_cast %365 : i32 to index
    %c0_177 = arith.constant 0 : index
    %367 = vector.load %arg2[%366, %c0_177] : memref<104x32xf32, #tpu.memory_space<vmem>>, vector<1x32xf32>
    %368 = tpu.concatenate %325, %331, %337, %343, %349, %355, %361, %367 in 0 : vector<1x32xf32>, vector<1x32xf32>, vector<1x32xf32>, vector<1x32xf32>, vector<1x32xf32>, vector<1x32xf32>, vector<1x32xf32>, vector<1x32xf32> -> vector<8x32xf32>
    %369 = arith.index_cast %319 : i32 to index
    %c0_178 = arith.constant 0 : index
    %370 = vector.load %arg10[%369, %c0_178] : memref<64x32xf32, #tpu.memory_space<vmem>>, vector<8x32xf32>
    tpu.vector_store %arg10[%369, %c0_178], %368 {strides = array<i32>} : memref<64x32xf32, #tpu.memory_space<vmem>>, vector<8x32xf32>,
    %c7_i32_179 = arith.constant 7 : i32
    %c8_i32_180 = arith.constant 8 : i32
    %371 = arith.muli %c7_i32_179, %c8_i32_180 : i32
    %372 = tpu.assume_multiple %371, 8 : i32
    %c8_i32_181 = arith.constant 8 : i32
    %373 = arith.muli %c7_i32_179, %c8_i32_181 : i32
    %c0_i32_182 = arith.constant 0 : i32
    %374 = arith.addi %373, %c0_i32_182 : i32
    %375 = arith.index_cast %374 : i32 to index
    %376 = memref.load %arg1[%375] : memref<64xi32, #tpu.memory_space<smem>>
    %377 = arith.index_cast %376 : i32 to index
    %c0_183 = arith.constant 0 : index
    %378 = vector.load %arg2[%377, %c0_183] : memref<104x32xf32, #tpu.memory_space<vmem>>, vector<1x32xf32>
    %c8_i32_184 = arith.constant 8 : i32
    %379 = arith.muli %c7_i32_179, %c8_i32_184 : i32
    %c1_i32_185 = arith.constant 1 : i32
    %380 = arith.addi %379, %c1_i32_185 : i32
    %381 = arith.index_cast %380 : i32 to index
    %382 = memref.load %arg1[%381] : memref<64xi32, #tpu.memory_space<smem>>
    %383 = arith.index_cast %382 : i32 to index
    %c0_186 = arith.constant 0 : index
    %384 = vector.load %arg2[%383, %c0_186] : memref<104x32xf32, #tpu.memory_space<vmem>>, vector<1x32xf32>
    %c8_i32_187 = arith.constant 8 : i32
    %385 = arith.muli %c7_i32_179, %c8_i32_187 : i32
    %c2_i32_188 = arith.constant 2 : i32
    %386 = arith.addi %385, %c2_i32_188 : i32
    %387 = arith.index_cast %386 : i32 to index
    %388 = memref.load %arg1[%387] : memref<64xi32, #tpu.memory_space<smem>>
    %389 = arith.index_cast %388 : i32 to index
    %c0_189 = arith.constant 0 : index
    %390 = vector.load %arg2[%389, %c0_189] : memref<104x32xf32, #tpu.memory_space<vmem>>, vector<1x32xf32>
    %c8_i32_190 = arith.constant 8 : i32
    %391 = arith.muli %c7_i32_179, %c8_i32_190 : i32
    %c3_i32_191 = arith.constant 3 : i32
    %392 = arith.addi %391, %c3_i32_191 : i32
    %393 = arith.index_cast %392 : i32 to index
    %394 = memref.load %arg1[%393] : memref<64xi32, #tpu.memory_space<smem>>
    %395 = arith.index_cast %394 : i32 to index
    %c0_192 = arith.constant 0 : index
    %396 = vector.load %arg2[%395, %c0_192] : memref<104x32xf32, #tpu.memory_space<vmem>>, vector<1x32xf32>
    %c8_i32_193 = arith.constant 8 : i32
    %397 = arith.muli %c7_i32_179, %c8_i32_193 : i32
    %c4_i32_194 = arith.constant 4 : i32
    %398 = arith.addi %397, %c4_i32_194 : i32
    %399 = arith.index_cast %398 : i32 to index
    %400 = memref.load %arg1[%399] : memref<64xi32, #tpu.memory_space<smem>>
    %401 = arith.index_cast %400 : i32 to index
    %c0_195 = arith.constant 0 : index
    %402 = vector.load %arg2[%401, %c0_195] : memref<104x32xf32, #tpu.memory_space<vmem>>, vector<1x32xf32>
    %c8_i32_196 = arith.constant 8 : i32
    %403 = arith.muli %c7_i32_179, %c8_i32_196 : i32
    %c5_i32_197 = arith.constant 5 : i32
    %404 = arith.addi %403, %c5_i32_197 : i32
    %405 = arith.index_cast %404 : i32 to index
    %406 = memref.load %arg1[%405] : memref<64xi32, #tpu.memory_space<smem>>
    %407 = arith.index_cast %406 : i32 to index
    %c0_198 = arith.constant 0 : index
    %408 = vector.load %arg2[%407, %c0_198] : memref<104x32xf32, #tpu.memory_space<vmem>>, vector<1x32xf32>
    %c8_i32_199 = arith.constant 8 : i32
    %409 = arith.muli %c7_i32_179, %c8_i32_199 : i32
    %c6_i32_200 = arith.constant 6 : i32
    %410 = arith.addi %409, %c6_i32_200 : i32
    %411 = arith.index_cast %410 : i32 to index
    %412 = memref.load %arg1[%411] : memref<64xi32, #tpu.memory_space<smem>>
    %413 = arith.index_cast %412 : i32 to index
    %c0_201 = arith.constant 0 : index
    %414 = vector.load %arg2[%413, %c0_201] : memref<104x32xf32, #tpu.memory_space<vmem>>, vector<1x32xf32>
    %c8_i32_202 = arith.constant 8 : i32
    %415 = arith.muli %c7_i32_179, %c8_i32_202 : i32
    %c7_i32_203 = arith.constant 7 : i32
    %416 = arith.addi %415, %c7_i32_203 : i32
    %417 = arith.index_cast %416 : i32 to index
    %418 = memref.load %arg1[%417] : memref<64xi32, #tpu.memory_space<smem>>
    %419 = arith.index_cast %418 : i32 to index
    %c0_204 = arith.constant 0 : index
    %420 = vector.load %arg2[%419, %c0_204] : memref<104x32xf32, #tpu.memory_space<vmem>>, vector<1x32xf32>
    %421 = tpu.concatenate %378, %384, %390, %396, %402, %408, %414, %420 in 0 : vector<1x32xf32>, vector<1x32xf32>, vector<1x32xf32>, vector<1x32xf32>, vector<1x32xf32>, vector<1x32xf32>, vector<1x32xf32>, vector<1x32xf32> -> vector<8x32xf32>
    %422 = arith.index_cast %372 : i32 to index
    %c0_205 = arith.constant 0 : index
    %423 = vector.load %arg10[%422, %c0_205] : memref<64x32xf32, #tpu.memory_space<vmem>>, vector<8x32xf32>
    tpu.vector_store %arg10[%422, %c0_205], %421 {strides = array<i32>} : memref<64x32xf32, #tpu.memory_space<vmem>>, vector<8x32xf32>,
    %c8_i32_206 = arith.constant 8 : i32
    %c0_207 = arith.constant 0 : index
    %c0_208 = arith.constant 0 : index
    %424 = vector.load %arg3[%c0_207, %c0_208] : memref<32x384xf32, #tpu.memory_space<vmem>>, vector<32x384xf32>
    %c0_209 = arith.constant 0 : index
    %c0_210 = arith.constant 0 : index
    %425 = vector.load %arg5[%c0_209, %c0_210] : memref<1x384xf32, #tpu.memory_space<vmem>>, vector<1x384xf32>
    %c0_211 = arith.constant 0 : index
    %c0_212 = arith.constant 0 : index
    %426 = vector.load %arg10[%c0_211, %c0_212] : memref<64x32xf32, #tpu.memory_space<vmem>>, vector<64x32xf32>
    %cst = arith.constant dense<0.000000e+00> : vector<64x384xf32>
    %427 = tpu.matmul %426, %424, %cst {dimension_numbers = #tpu.dot_dimension_numbers<[1], [0], [0], [1], [0, 0, 1, 1], [], []>} : vector<64x32xf32>, vector<32x384xf32>, vector<64x384xf32> -> vector<64x384xf32>
    %428 = vector.broadcast %425 : vector<1x384xf32> to vector<64x384xf32>
    %429 = arith.addf %427, %428 : vector<64x384xf32>
    %c0_213 = arith.constant 0 : index
    %c0_214 = arith.constant 0 : index
    %430 = vector.load %arg11[%c0_213, %c0_214] : memref<64x384xf32, #tpu.memory_space<vmem>>, vector<64x384xf32>
    tpu.vector_store %arg11[%c0_213, %c0_214], %429 {strides = array<i32>} : memref<64x384xf32, #tpu.memory_space<vmem>>, vector<64x384xf32>,
    %c0_215 = arith.constant 0 : index
    %c0_216 = arith.constant 0 : index
    %431 = vector.load %arg4[%c0_215, %c0_216] : memref<128x384xf32, #tpu.memory_space<vmem>>, vector<128x384xf32>
    %c0_217 = arith.constant 0 : index
    %c0_218 = arith.constant 0 : index
    %432 = vector.load %arg6[%c0_217, %c0_218] : memref<1x128xf32, #tpu.memory_space<vmem>>, vector<1x128xf32>
    %433 = vector.shape_cast %432 : vector<1x128xf32> to vector<1x128xf32>
    %434 = vector.broadcast %433 : vector<1x128xf32> to vector<8x128xf32>
    %cst_219 = arith.constant 0.000000e+00 : f32
    %435 = vector.broadcast %cst_219 : f32 to vector<8x128xf32>
    %c0_i32_220 = arith.constant 0 : i32
    %c8_i32_221 = arith.constant 8 : i32
    %436 = arith.muli %c0_i32_220, %c8_i32_221 : i32
    %437 = tpu.assume_multiple %436, 8 : i32
    %438 = arith.index_cast %437 : i32 to index
    %c0_222 = arith.constant 0 : index
    %439 = vector.load %arg11[%438, %c0_222] : memref<64x384xf32, #tpu.memory_space<vmem>>, vector<8x384xf32>
    %cst_223 = arith.constant dense<0.000000e+00> : vector<8x384xf32>
    %440 = tpu.matmul %435, %431, %cst_223 {dimension_numbers = #tpu.dot_dimension_numbers<[1], [0], [0], [1], [0, 0, 1, 1], [], []>} : vector<8x128xf32>, vector<128x384xf32>, vector<8x384xf32> -> vector<8x384xf32>
    %441 = vector.extract_strided_slice %439 {offsets = [0, 0], sizes = [8, 256], strides = [1, 1]} : vector<8x384xf32> to vector<8x256xf32>
    %442 = vector.extract_strided_slice %440 {offsets = [0, 0], sizes = [8, 256], strides = [1, 1]} : vector<8x384xf32> to vector<8x256xf32>
    %443 = arith.addf %441, %442 : vector<8x256xf32>
    %444 = arith.negf %443 : vector<8x256xf32>
    %445 = math.exp %444 : vector<8x256xf32>
    %cst_224 = arith.constant 1.000000e+00 : f32
    %446 = vector.broadcast %cst_224 : f32 to vector<8x256xf32>
    %447 = arith.addf %446, %445 : vector<8x256xf32>
    %448 = arith.divf %446, %447 : vector<8x256xf32>
    %449 = vector.extract_strided_slice %448 {offsets = [0, 0], sizes = [8, 128], strides = [1, 1]} : vector<8x256xf32> to vector<8x128xf32>
    %450 = vector.extract_strided_slice %448 {offsets = [0, 128], sizes = [8, 128], strides = [1, 1]} : vector<8x256xf32> to vector<8x128xf32>
    %451 = vector.extract_strided_slice %439 {offsets = [0, 256], sizes = [8, 128], strides = [1, 1]} : vector<8x384xf32> to vector<8x128xf32>
    %452 = vector.extract_strided_slice %440 {offsets = [0, 256], sizes = [8, 128], strides = [1, 1]} : vector<8x384xf32> to vector<8x128xf32>
    %453 = arith.addf %452, %434 : vector<8x128xf32>
    %454 = arith.mulf %449, %453 : vector<8x128xf32>
    %455 = arith.addf %451, %454 : vector<8x128xf32>
    %456 = math.tanh %455 : vector<8x128xf32>
    %cst_225 = arith.constant 1.000000e+00 : f32
    %457 = vector.broadcast %cst_225 : f32 to vector<8x128xf32>
    %458 = arith.subf %457, %450 : vector<8x128xf32>
    %459 = arith.mulf %458, %456 : vector<8x128xf32>
    %460 = arith.mulf %450, %435 : vector<8x128xf32>
    %461 = arith.addf %459, %460 : vector<8x128xf32>
    %c1_i32_226 = arith.constant 1 : i32
    %c8_i32_227 = arith.constant 8 : i32
    %462 = arith.muli %c1_i32_226, %c8_i32_227 : i32
    %463 = tpu.assume_multiple %462, 8 : i32
    %464 = arith.index_cast %463 : i32 to index
    %c0_228 = arith.constant 0 : index
    %465 = vector.load %arg11[%464, %c0_228] : memref<64x384xf32, #tpu.memory_space<vmem>>, vector<8x384xf32>
    %cst_229 = arith.constant dense<0.000000e+00> : vector<8x384xf32>
    %466 = tpu.matmul %461, %431, %cst_229 {dimension_numbers = #tpu.dot_dimension_numbers<[1], [0], [0], [1], [0, 0, 1, 1], [], []>} : vector<8x128xf32>, vector<128x384xf32>, vector<8x384xf32> -> vector<8x384xf32>
    %467 = vector.extract_strided_slice %465 {offsets = [0, 0], sizes = [8, 256], strides = [1, 1]} : vector<8x384xf32> to vector<8x256xf32>
    %468 = vector.extract_strided_slice %466 {offsets = [0, 0], sizes = [8, 256], strides = [1, 1]} : vector<8x384xf32> to vector<8x256xf32>
    %469 = arith.addf %467, %468 : vector<8x256xf32>
    %470 = arith.negf %469 : vector<8x256xf32>
    %471 = math.exp %470 : vector<8x256xf32>
    %cst_230 = arith.constant 1.000000e+00 : f32
    %472 = vector.broadcast %cst_230 : f32 to vector<8x256xf32>
    %473 = arith.addf %472, %471 : vector<8x256xf32>
    %474 = arith.divf %472, %473 : vector<8x256xf32>
    %475 = vector.extract_strided_slice %474 {offsets = [0, 0], sizes = [8, 128], strides = [1, 1]} : vector<8x256xf32> to vector<8x128xf32>
    %476 = vector.extract_strided_slice %474 {offsets = [0, 128], sizes = [8, 128], strides = [1, 1]} : vector<8x256xf32> to vector<8x128xf32>
    %477 = vector.extract_strided_slice %465 {offsets = [0, 256], sizes = [8, 128], strides = [1, 1]} : vector<8x384xf32> to vector<8x128xf32>
    %478 = vector.extract_strided_slice %466 {offsets = [0, 256], sizes = [8, 128], strides = [1, 1]} : vector<8x384xf32> to vector<8x128xf32>
    %479 = arith.addf %478, %434 : vector<8x128xf32>
    %480 = arith.mulf %475, %479 : vector<8x128xf32>
    %481 = arith.addf %477, %480 : vector<8x128xf32>
    %482 = math.tanh %481 : vector<8x128xf32>
    %cst_231 = arith.constant 1.000000e+00 : f32
    %483 = vector.broadcast %cst_231 : f32 to vector<8x128xf32>
    %484 = arith.subf %483, %476 : vector<8x128xf32>
    %485 = arith.mulf %484, %482 : vector<8x128xf32>
    %486 = arith.mulf %476, %461 : vector<8x128xf32>
    %487 = arith.addf %485, %486 : vector<8x128xf32>
    %c2_i32_232 = arith.constant 2 : i32
    %c8_i32_233 = arith.constant 8 : i32
    %488 = arith.muli %c2_i32_232, %c8_i32_233 : i32
    %489 = tpu.assume_multiple %488, 8 : i32
    %490 = arith.index_cast %489 : i32 to index
    %c0_234 = arith.constant 0 : index
    %491 = vector.load %arg11[%490, %c0_234] : memref<64x384xf32, #tpu.memory_space<vmem>>, vector<8x384xf32>
    %cst_235 = arith.constant dense<0.000000e+00> : vector<8x384xf32>
    %492 = tpu.matmul %487, %431, %cst_235 {dimension_numbers = #tpu.dot_dimension_numbers<[1], [0], [0], [1], [0, 0, 1, 1], [], []>} : vector<8x128xf32>, vector<128x384xf32>, vector<8x384xf32> -> vector<8x384xf32>
    %493 = vector.extract_strided_slice %491 {offsets = [0, 0], sizes = [8, 256], strides = [1, 1]} : vector<8x384xf32> to vector<8x256xf32>
    %494 = vector.extract_strided_slice %492 {offsets = [0, 0], sizes = [8, 256], strides = [1, 1]} : vector<8x384xf32> to vector<8x256xf32>
    %495 = arith.addf %493, %494 : vector<8x256xf32>
    %496 = arith.negf %495 : vector<8x256xf32>
    %497 = math.exp %496 : vector<8x256xf32>
    %cst_236 = arith.constant 1.000000e+00 : f32
    %498 = vector.broadcast %cst_236 : f32 to vector<8x256xf32>
    %499 = arith.addf %498, %497 : vector<8x256xf32>
    %500 = arith.divf %498, %499 : vector<8x256xf32>
    %501 = vector.extract_strided_slice %500 {offsets = [0, 0], sizes = [8, 128], strides = [1, 1]} : vector<8x256xf32> to vector<8x128xf32>
    %502 = vector.extract_strided_slice %500 {offsets = [0, 128], sizes = [8, 128], strides = [1, 1]} : vector<8x256xf32> to vector<8x128xf32>
    %503 = vector.extract_strided_slice %491 {offsets = [0, 256], sizes = [8, 128], strides = [1, 1]} : vector<8x384xf32> to vector<8x128xf32>
    %504 = vector.extract_strided_slice %492 {offsets = [0, 256], sizes = [8, 128], strides = [1, 1]} : vector<8x384xf32> to vector<8x128xf32>
    %505 = arith.addf %504, %434 : vector<8x128xf32>
    %506 = arith.mulf %501, %505 : vector<8x128xf32>
    %507 = arith.addf %503, %506 : vector<8x128xf32>
    %508 = math.tanh %507 : vector<8x128xf32>
    %cst_237 = arith.constant 1.000000e+00 : f32
    %509 = vector.broadcast %cst_237 : f32 to vector<8x128xf32>
    %510 = arith.subf %509, %502 : vector<8x128xf32>
    %511 = arith.mulf %510, %508 : vector<8x128xf32>
    %512 = arith.mulf %502, %487 : vector<8x128xf32>
    %513 = arith.addf %511, %512 : vector<8x128xf32>
    %c3_i32_238 = arith.constant 3 : i32
    %c8_i32_239 = arith.constant 8 : i32
    %514 = arith.muli %c3_i32_238, %c8_i32_239 : i32
    %515 = tpu.assume_multiple %514, 8 : i32
    %516 = arith.index_cast %515 : i32 to index
    %c0_240 = arith.constant 0 : index
    %517 = vector.load %arg11[%516, %c0_240] : memref<64x384xf32, #tpu.memory_space<vmem>>, vector<8x384xf32>
    %cst_241 = arith.constant dense<0.000000e+00> : vector<8x384xf32>
    %518 = tpu.matmul %513, %431, %cst_241 {dimension_numbers = #tpu.dot_dimension_numbers<[1], [0], [0], [1], [0, 0, 1, 1], [], []>} : vector<8x128xf32>, vector<128x384xf32>, vector<8x384xf32> -> vector<8x384xf32>
    %519 = vector.extract_strided_slice %517 {offsets = [0, 0], sizes = [8, 256], strides = [1, 1]} : vector<8x384xf32> to vector<8x256xf32>
    %520 = vector.extract_strided_slice %518 {offsets = [0, 0], sizes = [8, 256], strides = [1, 1]} : vector<8x384xf32> to vector<8x256xf32>
    %521 = arith.addf %519, %520 : vector<8x256xf32>
    %522 = arith.negf %521 : vector<8x256xf32>
    %523 = math.exp %522 : vector<8x256xf32>
    %cst_242 = arith.constant 1.000000e+00 : f32
    %524 = vector.broadcast %cst_242 : f32 to vector<8x256xf32>
    %525 = arith.addf %524, %523 : vector<8x256xf32>
    %526 = arith.divf %524, %525 : vector<8x256xf32>
    %527 = vector.extract_strided_slice %526 {offsets = [0, 0], sizes = [8, 128], strides = [1, 1]} : vector<8x256xf32> to vector<8x128xf32>
    %528 = vector.extract_strided_slice %526 {offsets = [0, 128], sizes = [8, 128], strides = [1, 1]} : vector<8x256xf32> to vector<8x128xf32>
    %529 = vector.extract_strided_slice %517 {offsets = [0, 256], sizes = [8, 128], strides = [1, 1]} : vector<8x384xf32> to vector<8x128xf32>
    %530 = vector.extract_strided_slice %518 {offsets = [0, 256], sizes = [8, 128], strides = [1, 1]} : vector<8x384xf32> to vector<8x128xf32>
    %531 = arith.addf %530, %434 : vector<8x128xf32>
    %532 = arith.mulf %527, %531 : vector<8x128xf32>
    %533 = arith.addf %529, %532 : vector<8x128xf32>
    %534 = math.tanh %533 : vector<8x128xf32>
    %cst_243 = arith.constant 1.000000e+00 : f32
    %535 = vector.broadcast %cst_243 : f32 to vector<8x128xf32>
    %536 = arith.subf %535, %528 : vector<8x128xf32>
    %537 = arith.mulf %536, %534 : vector<8x128xf32>
    %538 = arith.mulf %528, %513 : vector<8x128xf32>
    %539 = arith.addf %537, %538 : vector<8x128xf32>
    %c4_i32_244 = arith.constant 4 : i32
    %c8_i32_245 = arith.constant 8 : i32
    %540 = arith.muli %c4_i32_244, %c8_i32_245 : i32
    %541 = tpu.assume_multiple %540, 8 : i32
    %542 = arith.index_cast %541 : i32 to index
    %c0_246 = arith.constant 0 : index
    %543 = vector.load %arg11[%542, %c0_246] : memref<64x384xf32, #tpu.memory_space<vmem>>, vector<8x384xf32>
    %cst_247 = arith.constant dense<0.000000e+00> : vector<8x384xf32>
    %544 = tpu.matmul %539, %431, %cst_247 {dimension_numbers = #tpu.dot_dimension_numbers<[1], [0], [0], [1], [0, 0, 1, 1], [], []>} : vector<8x128xf32>, vector<128x384xf32>, vector<8x384xf32> -> vector<8x384xf32>
    %545 = vector.extract_strided_slice %543 {offsets = [0, 0], sizes = [8, 256], strides = [1, 1]} : vector<8x384xf32> to vector<8x256xf32>
    %546 = vector.extract_strided_slice %544 {offsets = [0, 0], sizes = [8, 256], strides = [1, 1]} : vector<8x384xf32> to vector<8x256xf32>
    %547 = arith.addf %545, %546 : vector<8x256xf32>
    %548 = arith.negf %547 : vector<8x256xf32>
    %549 = math.exp %548 : vector<8x256xf32>
    %cst_248 = arith.constant 1.000000e+00 : f32
    %550 = vector.broadcast %cst_248 : f32 to vector<8x256xf32>
    %551 = arith.addf %550, %549 : vector<8x256xf32>
    %552 = arith.divf %550, %551 : vector<8x256xf32>
    %553 = vector.extract_strided_slice %552 {offsets = [0, 0], sizes = [8, 128], strides = [1, 1]} : vector<8x256xf32> to vector<8x128xf32>
    %554 = vector.extract_strided_slice %552 {offsets = [0, 128], sizes = [8, 128], strides = [1, 1]} : vector<8x256xf32> to vector<8x128xf32>
    %555 = vector.extract_strided_slice %543 {offsets = [0, 256], sizes = [8, 128], strides = [1, 1]} : vector<8x384xf32> to vector<8x128xf32>
    %556 = vector.extract_strided_slice %544 {offsets = [0, 256], sizes = [8, 128], strides = [1, 1]} : vector<8x384xf32> to vector<8x128xf32>
    %557 = arith.addf %556, %434 : vector<8x128xf32>
    %558 = arith.mulf %553, %557 : vector<8x128xf32>
    %559 = arith.addf %555, %558 : vector<8x128xf32>
    %560 = math.tanh %559 : vector<8x128xf32>
    %cst_249 = arith.constant 1.000000e+00 : f32
    %561 = vector.broadcast %cst_249 : f32 to vector<8x128xf32>
    %562 = arith.subf %561, %554 : vector<8x128xf32>
    %563 = arith.mulf %562, %560 : vector<8x128xf32>
    %564 = arith.mulf %554, %539 : vector<8x128xf32>
    %565 = arith.addf %563, %564 : vector<8x128xf32>
    %c5_i32_250 = arith.constant 5 : i32
    %c8_i32_251 = arith.constant 8 : i32
    %566 = arith.muli %c5_i32_250, %c8_i32_251 : i32
    %567 = tpu.assume_multiple %566, 8 : i32
    %568 = arith.index_cast %567 : i32 to index
    %c0_252 = arith.constant 0 : index
    %569 = vector.load %arg11[%568, %c0_252] : memref<64x384xf32, #tpu.memory_space<vmem>>, vector<8x384xf32>
    %cst_253 = arith.constant dense<0.000000e+00> : vector<8x384xf32>
    %570 = tpu.matmul %565, %431, %cst_253 {dimension_numbers = #tpu.dot_dimension_numbers<[1], [0], [0], [1], [0, 0, 1, 1], [], []>} : vector<8x128xf32>, vector<128x384xf32>, vector<8x384xf32> -> vector<8x384xf32>
    %571 = vector.extract_strided_slice %569 {offsets = [0, 0], sizes = [8, 256], strides = [1, 1]} : vector<8x384xf32> to vector<8x256xf32>
    %572 = vector.extract_strided_slice %570 {offsets = [0, 0], sizes = [8, 256], strides = [1, 1]} : vector<8x384xf32> to vector<8x256xf32>
    %573 = arith.addf %571, %572 : vector<8x256xf32>
    %574 = arith.negf %573 : vector<8x256xf32>
    %575 = math.exp %574 : vector<8x256xf32>
    %cst_254 = arith.constant 1.000000e+00 : f32
    %576 = vector.broadcast %cst_254 : f32 to vector<8x256xf32>
    %577 = arith.addf %576, %575 : vector<8x256xf32>
    %578 = arith.divf %576, %577 : vector<8x256xf32>
    %579 = vector.extract_strided_slice %578 {offsets = [0, 0], sizes = [8, 128], strides = [1, 1]} : vector<8x256xf32> to vector<8x128xf32>
    %580 = vector.extract_strided_slice %578 {offsets = [0, 128], sizes = [8, 128], strides = [1, 1]} : vector<8x256xf32> to vector<8x128xf32>
    %581 = vector.extract_strided_slice %569 {offsets = [0, 256], sizes = [8, 128], strides = [1, 1]} : vector<8x384xf32> to vector<8x128xf32>
    %582 = vector.extract_strided_slice %570 {offsets = [0, 256], sizes = [8, 128], strides = [1, 1]} : vector<8x384xf32> to vector<8x128xf32>
    %583 = arith.addf %582, %434 : vector<8x128xf32>
    %584 = arith.mulf %579, %583 : vector<8x128xf32>
    %585 = arith.addf %581, %584 : vector<8x128xf32>
    %586 = math.tanh %585 : vector<8x128xf32>
    %cst_255 = arith.constant 1.000000e+00 : f32
    %587 = vector.broadcast %cst_255 : f32 to vector<8x128xf32>
    %588 = arith.subf %587, %580 : vector<8x128xf32>
    %589 = arith.mulf %588, %586 : vector<8x128xf32>
    %590 = arith.mulf %580, %565 : vector<8x128xf32>
    %591 = arith.addf %589, %590 : vector<8x128xf32>
    %c6_i32_256 = arith.constant 6 : i32
    %c8_i32_257 = arith.constant 8 : i32
    %592 = arith.muli %c6_i32_256, %c8_i32_257 : i32
    %593 = tpu.assume_multiple %592, 8 : i32
    %594 = arith.index_cast %593 : i32 to index
    %c0_258 = arith.constant 0 : index
    %595 = vector.load %arg11[%594, %c0_258] : memref<64x384xf32, #tpu.memory_space<vmem>>, vector<8x384xf32>
    %cst_259 = arith.constant dense<0.000000e+00> : vector<8x384xf32>
    %596 = tpu.matmul %591, %431, %cst_259 {dimension_numbers = #tpu.dot_dimension_numbers<[1], [0], [0], [1], [0, 0, 1, 1], [], []>} : vector<8x128xf32>, vector<128x384xf32>, vector<8x384xf32> -> vector<8x384xf32>
    %597 = vector.extract_strided_slice %595 {offsets = [0, 0], sizes = [8, 256], strides = [1, 1]} : vector<8x384xf32> to vector<8x256xf32>
    %598 = vector.extract_strided_slice %596 {offsets = [0, 0], sizes = [8, 256], strides = [1, 1]} : vector<8x384xf32> to vector<8x256xf32>
    %599 = arith.addf %597, %598 : vector<8x256xf32>
    %600 = arith.negf %599 : vector<8x256xf32>
    %601 = math.exp %600 : vector<8x256xf32>
    %cst_260 = arith.constant 1.000000e+00 : f32
    %602 = vector.broadcast %cst_260 : f32 to vector<8x256xf32>
    %603 = arith.addf %602, %601 : vector<8x256xf32>
    %604 = arith.divf %602, %603 : vector<8x256xf32>
    %605 = vector.extract_strided_slice %604 {offsets = [0, 0], sizes = [8, 128], strides = [1, 1]} : vector<8x256xf32> to vector<8x128xf32>
    %606 = vector.extract_strided_slice %604 {offsets = [0, 128], sizes = [8, 128], strides = [1, 1]} : vector<8x256xf32> to vector<8x128xf32>
    %607 = vector.extract_strided_slice %595 {offsets = [0, 256], sizes = [8, 128], strides = [1, 1]} : vector<8x384xf32> to vector<8x128xf32>
    %608 = vector.extract_strided_slice %596 {offsets = [0, 256], sizes = [8, 128], strides = [1, 1]} : vector<8x384xf32> to vector<8x128xf32>
    %609 = arith.addf %608, %434 : vector<8x128xf32>
    %610 = arith.mulf %605, %609 : vector<8x128xf32>
    %611 = arith.addf %607, %610 : vector<8x128xf32>
    %612 = math.tanh %611 : vector<8x128xf32>
    %cst_261 = arith.constant 1.000000e+00 : f32
    %613 = vector.broadcast %cst_261 : f32 to vector<8x128xf32>
    %614 = arith.subf %613, %606 : vector<8x128xf32>
    %615 = arith.mulf %614, %612 : vector<8x128xf32>
    %616 = arith.mulf %606, %591 : vector<8x128xf32>
    %617 = arith.addf %615, %616 : vector<8x128xf32>
    %c7_i32_262 = arith.constant 7 : i32
    %c8_i32_263 = arith.constant 8 : i32
    %618 = arith.muli %c7_i32_262, %c8_i32_263 : i32
    %619 = tpu.assume_multiple %618, 8 : i32
    %620 = arith.index_cast %619 : i32 to index
    %c0_264 = arith.constant 0 : index
    %621 = vector.load %arg11[%620, %c0_264] : memref<64x384xf32, #tpu.memory_space<vmem>>, vector<8x384xf32>
    %cst_265 = arith.constant dense<0.000000e+00> : vector<8x384xf32>
    %622 = tpu.matmul %617, %431, %cst_265 {dimension_numbers = #tpu.dot_dimension_numbers<[1], [0], [0], [1], [0, 0, 1, 1], [], []>} : vector<8x128xf32>, vector<128x384xf32>, vector<8x384xf32> -> vector<8x384xf32>
    %623 = vector.extract_strided_slice %621 {offsets = [0, 0], sizes = [8, 256], strides = [1, 1]} : vector<8x384xf32> to vector<8x256xf32>
    %624 = vector.extract_strided_slice %622 {offsets = [0, 0], sizes = [8, 256], strides = [1, 1]} : vector<8x384xf32> to vector<8x256xf32>
    %625 = arith.addf %623, %624 : vector<8x256xf32>
    %626 = arith.negf %625 : vector<8x256xf32>
    %627 = math.exp %626 : vector<8x256xf32>
    %cst_266 = arith.constant 1.000000e+00 : f32
    %628 = vector.broadcast %cst_266 : f32 to vector<8x256xf32>
    %629 = arith.addf %628, %627 : vector<8x256xf32>
    %630 = arith.divf %628, %629 : vector<8x256xf32>
    %631 = vector.extract_strided_slice %630 {offsets = [0, 0], sizes = [8, 128], strides = [1, 1]} : vector<8x256xf32> to vector<8x128xf32>
    %632 = vector.extract_strided_slice %630 {offsets = [0, 128], sizes = [8, 128], strides = [1, 1]} : vector<8x256xf32> to vector<8x128xf32>
    %633 = vector.extract_strided_slice %621 {offsets = [0, 256], sizes = [8, 128], strides = [1, 1]} : vector<8x384xf32> to vector<8x128xf32>
    %634 = vector.extract_strided_slice %622 {offsets = [0, 256], sizes = [8, 128], strides = [1, 1]} : vector<8x384xf32> to vector<8x128xf32>
    %635 = arith.addf %634, %434 : vector<8x128xf32>
    %636 = arith.mulf %631, %635 : vector<8x128xf32>
    %637 = arith.addf %633, %636 : vector<8x128xf32>
    %638 = math.tanh %637 : vector<8x128xf32>
    %cst_267 = arith.constant 1.000000e+00 : f32
    %639 = vector.broadcast %cst_267 : f32 to vector<8x128xf32>
    %640 = arith.subf %639, %632 : vector<8x128xf32>
    %641 = arith.mulf %640, %638 : vector<8x128xf32>
    %642 = arith.mulf %632, %617 : vector<8x128xf32>
    %643 = arith.addf %641, %642 : vector<8x128xf32>
    %c8_i32_268 = arith.constant 8 : i32
    %c0_269 = arith.constant 0 : index
    %c0_270 = arith.constant 0 : index
    %644 = vector.load %arg7[%c0_269, %c0_270] : memref<128x128xf32, #tpu.memory_space<vmem>>, vector<128x128xf32>
    %cst_271 = arith.constant dense<0.000000e+00> : vector<8x128xf32>
    %645 = tpu.matmul %643, %644, %cst_271 {dimension_numbers = #tpu.dot_dimension_numbers<[1], [0], [0], [1], [0, 0, 1, 1], [], []>} : vector<8x128xf32>, vector<128x128xf32>, vector<8x128xf32> -> vector<8x128xf32>
    %c0_272 = arith.constant 0 : index
    %c0_273 = arith.constant 0 : index
    %646 = vector.load %arg8[%c0_272, %c0_273] : memref<1x128xf32, #tpu.memory_space<vmem>>, vector<1x128xf32>
    %647 = vector.broadcast %646 : vector<1x128xf32> to vector<8x128xf32>
    %648 = arith.addf %645, %647 : vector<8x128xf32>
    %c0_274 = arith.constant 0 : index
    %c0_275 = arith.constant 0 : index
    %649 = vector.load %arg9[%c0_274, %c0_275] : memref<8x128xf32, #tpu.memory_space<vmem>>, vector<8x128xf32>
    tpu.vector_store %arg9[%c0_274, %c0_275], %648 {strides = array<i32>} : memref<8x128xf32, #tpu.memory_space<vmem>>, vector<8x128xf32>,
    return
  }
  func.func @transform_0(%arg0: i32, %arg1: memref<64xi32, #tpu.memory_space<smem>>) -> (i32, i32) {
    %c0_i32 = arith.constant 0 : i32
    %c0_i32_0 = arith.constant 0 : i32
    %c0_i32_1 = arith.constant 0 : i32
    return %c0_i32, %c0_i32_0 : i32, i32
  }
  func.func @transform_1(%arg0: i32, %arg1: memref<64xi32, #tpu.memory_space<smem>>) -> (i32, i32) {
    %c0_i32 = arith.constant 0 : i32
    %c0_i32_0 = arith.constant 0 : i32
    %c0_i32_1 = arith.constant 0 : i32
    return %c0_i32, %c0_i32_0 : i32, i32
  }
  func.func @transform_2(%arg0: i32, %arg1: memref<64xi32, #tpu.memory_space<smem>>) -> (i32, i32) {
    %c0_i32 = arith.constant 0 : i32
    %c0_i32_0 = arith.constant 0 : i32
    %c0_i32_1 = arith.constant 0 : i32
    return %c0_i32, %c0_i32_0 : i32, i32
  }
  func.func @transform_3(%arg0: i32, %arg1: memref<64xi32, #tpu.memory_space<smem>>) -> (i32, i32) {
    %c0_i32 = arith.constant 0 : i32
    %c0_i32_0 = arith.constant 0 : i32
    %c0_i32_1 = arith.constant 0 : i32
    return %c0_i32, %c0_i32_0 : i32, i32
  }
  func.func @transform_4(%arg0: i32, %arg1: memref<64xi32, #tpu.memory_space<smem>>) -> (i32, i32) {
    %c0_i32 = arith.constant 0 : i32
    %c0_i32_0 = arith.constant 0 : i32
    %c0_i32_1 = arith.constant 0 : i32
    return %c0_i32, %c0_i32_0 : i32, i32
  }
  func.func @transform_5(%arg0: i32, %arg1: memref<64xi32, #tpu.memory_space<smem>>) -> (i32, i32) {
    %c0_i32 = arith.constant 0 : i32
    %c0_i32_0 = arith.constant 0 : i32
    %c0_i32_1 = arith.constant 0 : i32
    return %c0_i32, %c0_i32_0 : i32, i32
  }
  func.func @transform_6(%arg0: i32, %arg1: memref<64xi32, #tpu.memory_space<smem>>) -> (i32, i32) {
    %c0_i32 = arith.constant 0 : i32
    %c0_i32_0 = arith.constant 0 : i32
    %c0_i32_1 = arith.constant 0 : i32
    return %c0_i32, %c0_i32_0 : i32, i32
  }
  func.func @transform_7(%arg0: i32, %arg1: memref<64xi32, #tpu.memory_space<smem>>) -> (i32, i32) {
    %c0_i32 = arith.constant 0 : i32
    %c0_i32_0 = arith.constant 0 : i32
    %c0_i32_1 = arith.constant 0 : i32
    return %c0_i32, %c0_i32_0 : i32, i32
  }
}

</mosaic_0001>

<llo_original>
// kernel: simple_qa_forward.1
$region0: #{simple_qa_forward.1}
  #allocation0 [shape = 'u32[]', space=smem, size = 0x4, offset = 0x4, fixed_abs, tag = 'smem constant byte address 0x4 - core index']
  #allocation1 [shape = 'u32[144,128]{1,0:T(1,128)}', space=vmem, size = 0x12000, scoped, tag = 'internal scratch']
  #allocation2 [shape = 'f32[64,32]{1,0:T(8,128)}', space=vmem, size = 0x8000, scoped, tag = 'scratch operand']
  #allocation3 [shape = 'f32[64,384]{1,0:T(8,128)}', space=vmem, size = 0x18000, scoped, tag = 'scratch operand']
  #allocation4 [shape = 's32[1]{0}', space=sflag, size = 0x4, scoped, tag = 'scoped memory for simple_qa_forward.1']
  #allocation5 [shape = 'u8[512]{0}', space=smem, size = 0x200, scoped, tag = 'prefetched SMEM operand 0']
  %s0 = inlined_call_operand.vmem [shape: s32[64], index: 0, kind: input, shape index: {}]
  %s1 = inlined_call_operand.vmem [shape: f32[104,32], index: 1, kind: input, shape index: {}]
  %s2 = inlined_call_operand.vmem [shape: f32[32,384], index: 2, kind: input, shape index: {}]
  %s3 = inlined_call_operand.vmem [shape: f32[128,384], index: 3, kind: input, shape index: {}]
  %s4 = inlined_call_operand.vmem [shape: f32[1,384], index: 4, kind: input, shape index: {}]
  %s5 = inlined_call_operand.vmem [shape: f32[1,128], index: 5, kind: input, shape index: {}]
  %s6 = inlined_call_operand.vmem [shape: f32[128,128], index: 6, kind: input, shape index: {}]
  %s7 = inlined_call_operand.vmem [shape: f32[1,128], index: 7, kind: input, shape index: {}]
  %s8 = inlined_call_operand.vmem [shape: f32[8,128], index: 8, kind: output, shape index: {}]
  %s9 = sld [smem:[#allocation0]]
  $region38: #{simple_qa_forward.1} parent=0
    _
  %s11 = ssub.s32 1, %s9
  %s12 = scalar_select 0, %s11, %s9
  %s13 = sshll.u32 %s0, 4
  %s14 = int_to_ptr.vmem [resolvable:$true] %s13
  %16 = dma.vmem_to_smem %s14, 16, [#allocation5], [#allocation4]
  %17 = dma.done [#allocation4], 16
  %18 = sfence
  // Predicated region
  $region2: #{simple_qa_forward.1} parent=0 // pred_check
    _
  $region3: #{simple_qa_forward.1} parent=0 // pred_check_branch
    %20 = sbr.rel (0) target = $region5
  $region4: #{simple_qa_forward.1} parent=0 // pred_region
    _
  $region5: #{simple_qa_forward.1} parent=0 // pred_fallthru
    _
  // Predicated region
  $region6: #{simple_qa_forward.1} parent=0 // pred_check
    _
  $region7: #{simple_qa_forward.1} parent=0 // pred_check_branch
    %22 = sbr.rel (0) target = $region9
  $region8: #{simple_qa_forward.1} parent=0 // pred_region
    _
  $region9: #{simple_qa_forward.1} parent=0 // pred_fallthru
    _
  // Predicated region
  $region10: #{simple_qa_forward.1} parent=0 // pred_check
    _
  $region11: #{simple_qa_forward.1} parent=0 // pred_check_branch
    %24 = sbr.rel (0) target = $region13
  $region12: #{simple_qa_forward.1} parent=0 // pred_region
    _
  $region13: #{simple_qa_forward.1} parent=0 // pred_fallthru
    _
  // Predicated region
  $region14: #{simple_qa_forward.1} parent=0 // pred_check
    _
  $region15: #{simple_qa_forward.1} parent=0 // pred_check_branch
    %26 = sbr.rel (0) target = $region17
  $region16: #{simple_qa_forward.1} parent=0 // pred_region
    _
  $region17: #{simple_qa_forward.1} parent=0 // pred_fallthru
    _
  // Predicated region
  $region18: #{simple_qa_forward.1} parent=0 // pred_check
    _
  $region19: #{simple_qa_forward.1} parent=0 // pred_check_branch
    %28 = sbr.rel (0) target = $region21
  $region20: #{simple_qa_forward.1} parent=0 // pred_region
    _
  $region21: #{simple_qa_forward.1} parent=0 // pred_fallthru
    _
  // Predicated region
  $region22: #{simple_qa_forward.1} parent=0 // pred_check
    _
  $region23: #{simple_qa_forward.1} parent=0 // pred_check_branch
    %30 = sbr.rel (0) target = $region25
  $region24: #{simple_qa_forward.1} parent=0 // pred_region
    _
  $region25: #{simple_qa_forward.1} parent=0 // pred_fallthru
    _
  // Predicated region
  $region26: #{simple_qa_forward.1} parent=0 // pred_check
    _
  $region27: #{simple_qa_forward.1} parent=0 // pred_check_branch
    %32 = sbr.rel (0) target = $region29
  $region28: #{simple_qa_forward.1} parent=0 // pred_region
    _
  $region29: #{simple_qa_forward.1} parent=0 // pred_fallthru
    _
  %s33 = sld [smem:[#allocation5]]
  %s34 = scalar_lea.vmem %s1, %s33
  %v35 = vld [vmem:[%s34] sm:$0x1]
  %s36 = sld [smem:[#allocation5 + $0x1]]
  %s37 = scalar_lea.vmem %s1, %s36
  %v38 = vld [vmem:[%s37] sm:$0x1]
  %s39 = sld [smem:[#allocation5 + $0x2]]
  %s40 = scalar_lea.vmem %s1, %s39
  %v41 = vld [vmem:[%s40] sm:$0x1]
  %s42 = sld [smem:[#allocation5 + $0x3]]
  %s43 = scalar_lea.vmem %s1, %s42
  %v44 = vld [vmem:[%s43] sm:$0x1]
  %s45 = sld [smem:[#allocation5 + $0x4]]
  %s46 = scalar_lea.vmem %s1, %s45
  %v47 = vld [vmem:[%s46] sm:$0x1]
  %s48 = sld [smem:[#allocation5 + $0x5]]
  %s49 = scalar_lea.vmem %s1, %s48
  %v50 = vld [vmem:[%s49] sm:$0x1]
  %s51 = sld [smem:[#allocation5 + $0x6]]
  %s52 = scalar_lea.vmem %s1, %s51
  %v53 = vld [vmem:[%s52] sm:$0x1]
  %s54 = sld [smem:[#allocation5 + $0x7]]
  %s55 = scalar_lea.vmem %s1, %s54
  %v56 = vld [vmem:[%s55] sm:$0x1]
  %v58 = vrot.slane %v38, 7
  %v61 = vrot.slane %v41, 6
  %v64 = vrot.slane %v44, 5
  %v67 = vrot.slane %v47, 4
  %v70 = vrot.slane %v50, 3
  %v73 = vrot.slane %v53, 2
  %v76 = vrot.slane %v56, 1
  %vm78 = vcmask 1040384
  %v79 = vsel %vm78, %v35, %v58
  %vm80 = vcmask 1041408
  %v81 = vsel %vm80, %v79, %v61
  %vm82 = vcmask 1042432
  %v83 = vsel %vm82, %v81, %v64
  %vm84 = vcmask 1043456
  %v85 = vsel %vm84, %v83, %v67
  %vm86 = vcmask 1044480
  %v87 = vsel %vm86, %v85, %v70
  %vm88 = vcmask 1045504
  %v89 = vsel %vm88, %v87, %v73
  %vm90 = vcmask 1046528
  %v91 = vsel %vm90, %v89, %v76
  %vm92 = vcmask 261120
  %93 = vst.msk [vmem:[#allocation2] sm:$0xff] %vm92, %v91
  %s94 = sld [smem:[#allocation5 + $0x8]]
  %s95 = scalar_lea.vmem %s1, %s94
  %v96 = vld [vmem:[%s95] sm:$0x1]
  %s97 = sld [smem:[#allocation5 + $0x9]]
  %s98 = scalar_lea.vmem %s1, %s97
  %v99 = vld [vmem:[%s98] sm:$0x1]
  %s100 = sld [smem:[#allocation5 + $0xa]]
  %s101 = scalar_lea.vmem %s1, %s100
  %v102 = vld [vmem:[%s101] sm:$0x1]
  %s103 = sld [smem:[#allocation5 + $0xb]]
  %s104 = scalar_lea.vmem %s1, %s103
  %v105 = vld [vmem:[%s104] sm:$0x1]
  %s106 = sld [smem:[#allocation5 + $0xc]]
  %s107 = scalar_lea.vmem %s1, %s106
  %v108 = vld [vmem:[%s107] sm:$0x1]
  %s109 = sld [smem:[#allocation5 + $0xd]]
  %s110 = scalar_lea.vmem %s1, %s109
  %v111 = vld [vmem:[%s110] sm:$0x1]
  %s112 = sld [smem:[#allocation5 + $0xe]]
  %s113 = scalar_lea.vmem %s1, %s112
  %v114 = vld [vmem:[%s113] sm:$0x1]
  %s115 = sld [smem:[#allocation5 + $0xf]]
  %s116 = scalar_lea.vmem %s1, %s115
  %v117 = vld [vmem:[%s116] sm:$0x1]
  %v119 = vrot.slane %v99, 7
  %v122 = vrot.slane %v102, 6
  %v125 = vrot.slane %v105, 5
  %v128 = vrot.slane %v108, 4
  %v131 = vrot.slane %v111, 3
  %v134 = vrot.slane %v114, 2
  %v137 = vrot.slane %v117, 1
  %v139 = vsel %vm78, %v96, %v119
  %v140 = vsel %vm80, %v139, %v122
  %v141 = vsel %vm82, %v140, %v125
  %v142 = vsel %vm84, %v141, %v128
  %v143 = vsel %vm86, %v142, %v131
  %v144 = vsel %vm88, %v143, %v134
  %v145 = vsel %vm90, %v144, %v137
  %s146 = scalar_lea.vmem [#allocation2], 8
  %147 = vst.msk [vmem:[%s146] sm:$0xff] %vm92, %v145
  %s148 = sld [smem:[#allocation5 + $0x10]]
  %s149 = scalar_lea.vmem %s1, %s148
  %v150 = vld [vmem:[%s149] sm:$0x1]
  %s151 = sld [smem:[#allocation5 + $0x11]]
  %s152 = scalar_lea.vmem %s1, %s151
  %v153 = vld [vmem:[%s152] sm:$0x1]
  %s154 = sld [smem:[#allocation5 + $0x12]]
  %s155 = scalar_lea.vmem %s1, %s154
  %v156 = vld [vmem:[%s155] sm:$0x1]
  %s157 = sld [smem:[#allocation5 + $0x13]]
  %s158 = scalar_lea.vmem %s1, %s157
  %v159 = vld [vmem:[%s158] sm:$0x1]
  %s160 = sld [smem:[#allocation5 + $0x14]]
  %s161 = scalar_lea.vmem %s1, %s160
  %v162 = vld [vmem:[%s161] sm:$0x1]
  %s163 = sld [smem:[#allocation5 + $0x15]]
  %s164 = scalar_lea.vmem %s1, %s163
  %v165 = vld [vmem:[%s164] sm:$0x1]
  %s166 = sld [smem:[#allocation5 + $0x16]]
  %s167 = scalar_lea.vmem %s1, %s166
  %v168 = vld [vmem:[%s167] sm:$0x1]
  %s169 = sld [smem:[#allocation5 + $0x17]]
  %s170 = scalar_lea.vmem %s1, %s169
  %v171 = vld [vmem:[%s170] sm:$0x1]
  %v173 = vrot.slane %v153, 7
  %v176 = vrot.slane %v156, 6
  %v179 = vrot.slane %v159, 5
  %v182 = vrot.slane %v162, 4
  %v185 = vrot.slane %v165, 3
  %v188 = vrot.slane %v168, 2
  %v191 = vrot.slane %v171, 1
  %v193 = vsel %vm78, %v150, %v173
  %v194 = vsel %vm80, %v193, %v176
  %v195 = vsel %vm82, %v194, %v179
  %v196 = vsel %vm84, %v195, %v182
  %v197 = vsel %vm86, %v196, %v185
  %v198 = vsel %vm88, %v197, %v188
  %v199 = vsel %vm90, %v198, %v191
  %s200 = scalar_lea.vmem [#allocation2], 16
  %201 = vst.msk [vmem:[%s200] sm:$0xff] %vm92, %v199
  %s202 = sld [smem:[#allocation5 + $0x18]]
  %s203 = scalar_lea.vmem %s1, %s202
  %v204 = vld [vmem:[%s203] sm:$0x1]
  %s205 = sld [smem:[#allocation5 + $0x19]]
  %s206 = scalar_lea.vmem %s1, %s205
  %v207 = vld [vmem:[%s206] sm:$0x1]
  %s208 = sld [smem:[#allocation5 + $0x1a]]
  %s209 = scalar_lea.vmem %s1, %s208
  %v210 = vld [vmem:[%s209] sm:$0x1]
  %s211 = sld [smem:[#allocation5 + $0x1b]]
  %s212 = scalar_lea.vmem %s1, %s211
  %v213 = vld [vmem:[%s212] sm:$0x1]
  %s214 = sld [smem:[#allocation5 + $0x1c]]
  %s215 = scalar_lea.vmem %s1, %s214
  %v216 = vld [vmem:[%s215] sm:$0x1]
  %s217 = sld [smem:[#allocation5 + $0x1d]]
  %s218 = scalar_lea.vmem %s1, %s217
  %v219 = vld [vmem:[%s218] sm:$0x1]
  %s220 = sld [smem:[#allocation5 + $0x1e]]
  %s221 = scalar_lea.vmem %s1, %s220
  %v222 = vld [vmem:[%s221] sm:$0x1]
  %s223 = sld [smem:[#allocation5 + $0x1f]]
  %s224 = scalar_lea.vmem %s1, %s223
  %v225 = vld [vmem:[%s224] sm:$0x1]
  %v227 = vrot.slane %v207, 7
  %v230 = vrot.slane %v210, 6
  %v233 = vrot.slane %v213, 5
  %v236 = vrot.slane %v216, 4
  %v239 = vrot.slane %v219, 3
  %v242 = vrot.slane %v222, 2
  %v245 = vrot.slane %v225, 1
  %v247 = vsel %vm78, %v204, %v227
  %v248 = vsel %vm80, %v247, %v230
  %v249 = vsel %vm82, %v248, %v233
  %v250 = vsel %vm84, %v249, %v236
  %v251 = vsel %vm86, %v250, %v239
  %v252 = vsel %vm88, %v251, %v242
  %v253 = vsel %vm90, %v252, %v245
  %s254 = scalar_lea.vmem [#allocation2], 24
  %255 = vst.msk [vmem:[%s254] sm:$0xff] %vm92, %v253
  %s256 = sld [smem:[#allocation5 + $0x20]]
  %s257 = scalar_lea.vmem %s1, %s256
  %v258 = vld [vmem:[%s257] sm:$0x1]
  %s259 = sld [smem:[#allocation5 + $0x21]]
  %s260 = scalar_lea.vmem %s1, %s259
  %v261 = vld [vmem:[%s260] sm:$0x1]
  %s262 = sld [smem:[#allocation5 + $0x22]]
  %s263 = scalar_lea.vmem %s1, %s262
  %v264 = vld [vmem:[%s263] sm:$0x1]
  %s265 = sld [smem:[#allocation5 + $0x23]]
  %s266 = scalar_lea.vmem %s1, %s265
  %v267 = vld [vmem:[%s266] sm:$0x1]
  %s268 = sld [smem:[#allocation5 + $0x24]]
  %s269 = scalar_lea.vmem %s1, %s268
  %v270 = vld [vmem:[%s269] sm:$0x1]
  %s271 = sld [smem:[#allocation5 + $0x25]]
  %s272 = scalar_lea.vmem %s1, %s271
  %v273 = vld [vmem:[%s272] sm:$0x1]
  %s274 = sld [smem:[#allocation5 + $0x26]]
  %s275 = scalar_lea.vmem %s1, %s274
  %v276 = vld [vmem:[%s275] sm:$0x1]
  %s277 = sld [smem:[#allocation5 + $0x27]]
  %s278 = scalar_lea.vmem %s1, %s277
  %v279 = vld [vmem:[%s278] sm:$0x1]
  %v281 = vrot.slane %v261, 7
  %v284 = vrot.slane %v264, 6
  %v287 = vrot.slane %v267, 5
  %v290 = vrot.slane %v270, 4
  %v293 = vrot.slane %v273, 3
  %v296 = vrot.slane %v276, 2
  %v299 = vrot.slane %v279, 1
  %v301 = vsel %vm78, %v258, %v281
  %v302 = vsel %vm80, %v301, %v284
  %v303 = vsel %vm82, %v302, %v287
  %v304 = vsel %vm84, %v303, %v290
  %v305 = vsel %vm86, %v304, %v293
  %v306 = vsel %vm88, %v305, %v296
  %v307 = vsel %vm90, %v306, %v299
  %s308 = scalar_lea.vmem [#allocation2], 32
  %309 = vst.msk [vmem:[%s308] sm:$0xff] %vm92, %v307
  %s310 = sld [smem:[#allocation5 + $0x28]]
  %s311 = scalar_lea.vmem %s1, %s310
  %v312 = vld [vmem:[%s311] sm:$0x1]
  %s313 = sld [smem:[#allocation5 + $0x29]]
  %s314 = scalar_lea.vmem %s1, %s313
  %v315 = vld [vmem:[%s314] sm:$0x1]
  %s316 = sld [smem:[#allocation5 + $0x2a]]
  %s317 = scalar_lea.vmem %s1, %s316
  %v318 = vld [vmem:[%s317] sm:$0x1]
  %s319 = sld [smem:[#allocation5 + $0x2b]]
  %s320 = scalar_lea.vmem %s1, %s319
  %v321 = vld [vmem:[%s320] sm:$0x1]
  %s322 = sld [smem:[#allocation5 + $0x2c]]
  %s323 = scalar_lea.vmem %s1, %s322
  %v324 = vld [vmem:[%s323] sm:$0x1]
  %s325 = sld [smem:[#allocation5 + $0x2d]]
  %s326 = scalar_lea.vmem %s1, %s325
  %v327 = vld [vmem:[%s326] sm:$0x1]
  %s328 = sld [smem:[#allocation5 + $0x2e]]
  %s329 = scalar_lea.vmem %s1, %s328
  %v330 = vld [vmem:[%s329] sm:$0x1]
  %s331 = sld [smem:[#allocation5 + $0x2f]]
  %s332 = scalar_lea.vmem %s1, %s331
  %v333 = vld [vmem:[%s332] sm:$0x1]
  %v335 = vrot.slane %v315, 7
  %v338 = vrot.slane %v318, 6
  %v341 = vrot.slane %v321, 5
  %v344 = vrot.slane %v324, 4
  %v347 = vrot.slane %v327, 3
  %v350 = vrot.slane %v330, 2
  %v353 = vrot.slane %v333, 1
  %v355 = vsel %vm78, %v312, %v335
  %v356 = vsel %vm80, %v355, %v338
  %v357 = vsel %vm82, %v356, %v341
  %v358 = vsel %vm84, %v357, %v344
  %v359 = vsel %vm86, %v358, %v347
  %v360 = vsel %vm88, %v359, %v350
  %v361 = vsel %vm90, %v360, %v353
  %s362 = scalar_lea.vmem [#allocation2], 40
  %363 = vst.msk [vmem:[%s362] sm:$0xff] %vm92, %v361
  %s364 = sld [smem:[#allocation5 + $0x30]]
  %s365 = scalar_lea.vmem %s1, %s364
  %v366 = vld [vmem:[%s365] sm:$0x1]
  %s367 = sld [smem:[#allocation5 + $0x31]]
  %s368 = scalar_lea.vmem %s1, %s367
  %v369 = vld [vmem:[%s368] sm:$0x1]
  %s370 = sld [smem:[#allocation5 + $0x32]]
  %s371 = scalar_lea.vmem %s1, %s370
  %v372 = vld [vmem:[%s371] sm:$0x1]
  %s373 = sld [smem:[#allocation5 + $0x33]]
  %s374 = scalar_lea.vmem %s1, %s373
  %v375 = vld [vmem:[%s374] sm:$0x1]
  %s376 = sld [smem:[#allocation5 + $0x34]]
  %s377 = scalar_lea.vmem %s1, %s376
  %v378 = vld [vmem:[%s377] sm:$0x1]
  %s379 = sld [smem:[#allocation5 + $0x35]]
  %s380 = scalar_lea.vmem %s1, %s379
  %v381 = vld [vmem:[%s380] sm:$0x1]
  %s382 = sld [smem:[#allocation5 + $0x36]]
  %s383 = scalar_lea.vmem %s1, %s382
  %v384 = vld [vmem:[%s383] sm:$0x1]
  %s385 = sld [smem:[#allocation5 + $0x37]]
  %s386 = scalar_lea.vmem %s1, %s385
  %v387 = vld [vmem:[%s386] sm:$0x1]
  %v389 = vrot.slane %v369, 7
  %v392 = vrot.slane %v372, 6
  %v395 = vrot.slane %v375, 5
  %v398 = vrot.slane %v378, 4
  %v401 = vrot.slane %v381, 3
  %v404 = vrot.slane %v384, 2
  %v407 = vrot.slane %v387, 1
  %v409 = vsel %vm78, %v366, %v389
  %v410 = vsel %vm80, %v409, %v392
  %v411 = vsel %vm82, %v410, %v395
  %v412 = vsel %vm84, %v411, %v398
  %v413 = vsel %vm86, %v412, %v401
  %v414 = vsel %vm88, %v413, %v404
  %v415 = vsel %vm90, %v414, %v407
  %s416 = scalar_lea.vmem [#allocation2], 48
  %417 = vst.msk [vmem:[%s416] sm:$0xff] %vm92, %v415
  %s418 = sld [smem:[#allocation5 + $0x38]]
  %s419 = scalar_lea.vmem %s1, %s418
  %v420 = vld [vmem:[%s419] sm:$0x1]
  %s421 = sld [smem:[#allocation5 + $0x39]]
  %s422 = scalar_lea.vmem %s1, %s421
  %v423 = vld [vmem:[%s422] sm:$0x1]
  %s424 = sld [smem:[#allocation5 + $0x3a]]
  %s425 = scalar_lea.vmem %s1, %s424
  %v426 = vld [vmem:[%s425] sm:$0x1]
  %s427 = sld [smem:[#allocation5 + $0x3b]]
  %s428 = scalar_lea.vmem %s1, %s427
  %v429 = vld [vmem:[%s428] sm:$0x1]
  %s430 = sld [smem:[#allocation5 + $0x3c]]
  %s431 = scalar_lea.vmem %s1, %s430
  %v432 = vld [vmem:[%s431] sm:$0x1]
  %s433 = sld [smem:[#allocation5 + $0x3d]]
  %s434 = scalar_lea.vmem %s1, %s433
  %v435 = vld [vmem:[%s434] sm:$0x1]
  %s436 = sld [smem:[#allocation5 + $0x3e]]
  %s437 = scalar_lea.vmem %s1, %s436
  %v438 = vld [vmem:[%s437] sm:$0x1]
  %s439 = sld [smem:[#allocation5 + $0x3f]]
  %s440 = scalar_lea.vmem %s1, %s439
  %v441 = vld [vmem:[%s440] sm:$0x1]
  %v443 = vrot.slane %v423, 7
  %v446 = vrot.slane %v426, 6
  %v449 = vrot.slane %v429, 5
  %v452 = vrot.slane %v432, 4
  %v455 = vrot.slane %v435, 3
  %v458 = vrot.slane %v438, 2
  %v461 = vrot.slane %v441, 1
  %v463 = vsel %vm78, %v420, %v443
  %v464 = vsel %vm80, %v463, %v446
  %v465 = vsel %vm82, %v464, %v449
  %v466 = vsel %vm84, %v465, %v452
  %v467 = vsel %vm86, %v466, %v455
  %v468 = vsel %vm88, %v467, %v458
  %v469 = vsel %vm90, %v468, %v461
  %s470 = scalar_lea.vmem [#allocation2], 56
  %471 = vst.msk [vmem:[%s470] sm:$0xff] %vm92, %v469
  %v472 = vld [vmem:[%s2] sm:$0xff]
  %v473 = vld [vmem:[%s2 + $0x8] sm:$0xff]
  %v474 = vld [vmem:[%s2 + $0x10] sm:$0xff]
  %v475 = vld [vmem:[%s2 + $0x18] sm:$0xff]
  %v476 = vld [vmem:[%s2 + $0x20] sm:$0xff]
  %v477 = vld [vmem:[%s2 + $0x28] sm:$0xff]
  %v478 = vld [vmem:[%s2 + $0x30] sm:$0xff]
  %v479 = vld [vmem:[%s2 + $0x38] sm:$0xff]
  %v480 = vld [vmem:[%s2 + $0x40] sm:$0xff]
  %v481 = vld [vmem:[%s2 + $0x48] sm:$0xff]
  %v482 = vld [vmem:[%s2 + $0x50] sm:$0xff]
  %v483 = vld [vmem:[%s2 + $0x58] sm:$0xff]
  %v484 = vld [vmem:[%s4] sm:$0x7]
  %v485 = vld [vmem:[#allocation2] sm:$0xff]
  %v486 = vld [vmem:[#allocation2 + $0x8] sm:$0xff]
  %v487 = vld [vmem:[#allocation2 + $0x10] sm:$0xff]
  %v488 = vld [vmem:[#allocation2 + $0x18] sm:$0xff]
  %v489 = vld [vmem:[#allocation2 + $0x20] sm:$0xff]
  %v490 = vld [vmem:[#allocation2 + $0x28] sm:$0xff]
  %v491 = vld [vmem:[#allocation2 + $0x30] sm:$0xff]
  %v492 = vld [vmem:[#allocation2 + $0x38] sm:$0xff]
  %v494 = vlaneseq
  %v495 = vshrl.u32 %v494, 7
  %v496 = vsub.s32 0, %v495
  %v497 = vrot.slane %v484, %v496
  %v498 = vlaneseq
  %v499 = vshrl.u32 %v498, 7
  %v500 = vsub.s32 1, %v499
  %v501 = vrot.slane %v484, %v500
  %v502 = vlaneseq
  %v503 = vshrl.u32 %v502, 7
  %v504 = vsub.s32 2, %v503
  %v505 = vrot.slane %v484, %v504
  %v510 = vsel %vm92, %v485, 0
  %v513 = vsel %vm92, %v486, 0
  %v516 = vsel %vm92, %v487, 0
  %v519 = vsel %vm92, %v488, 0
  %v522 = vsel %vm92, %v489, 0
  %v525 = vsel %vm92, %v490, 0
  %v528 = vsel %vm92, %v491, 0
  %v531 = vsel %vm92, %v492, 0
  %533 = vmatprep.subr.mxu0 %v473
  %534 = vmatpush1.msra.mxu0 %v472
  %535 = vmatprep.subr.mxu0 %v476
  %536 = vmatpush1.msra.mxu0 %v475
  %537 = vmatprep.subr.mxu0 %v479
  %538 = vmatpush1.msra.mxu0 %v478
  %539 = vmatprep.subr.mxu0 %v482
  %540 = vmatpush1.msra.mxu0 %v481
  %541 = vmatprep.subr.mxu0 0.0
  %542 = vmatpush1.msra.mxu0 0.0
  %543 = vmatprep.subr.mxu0 0.0
  %544 = vmatpush1.msra.mxu0 0.0
  %545 = vmatprep.subr.mxu0 0.0
  %546 = vmatpush1.msra.mxu0 0.0
  %547 = vmatprep.subr.mxu0 0.0
  %548 = vmatpush1.msra.mxu0 0.0
  %549 = vmatprep.subr.mxu0 0.0
  %550 = vmatpush1.msra.mxu0 0.0
  %551 = vmatprep.subr.mxu0 0.0
  %552 = vmatpush1.msra.mxu0 0.0
  %553 = vmatprep.subr.mxu0 0.0
  %554 = vmatpush1.msra.mxu0 0.0
  %555 = vmatprep.subr.mxu0 0.0
  %556 = vmatpush1.msra.mxu0 0.0
  %557 = vmatprep.subr.mxu0 0.0
  %558 = vmatpush1.msra.mxu0 0.0
  %559 = vmatprep.subr.mxu0 0.0
  %560 = vmatpush1.msra.mxu0 0.0
  %561 = vmatprep.subr.mxu0 0.0
  %562 = vmatpush1.msra.mxu0 0.0
  %563 = vmatprep.subr.mxu0 0.0
  %564 = vmatpush1.msra.mxu0 0.0
  %565 = vmatprep.subr.mxu0 0.0
  %566 = vmatpush1.msra.mxu0 0.0
  %567 = vmatprep.subr.mxu0 0.0
  %568 = vmatpush1.msra.mxu0 0.0
  %569 = vmatprep.subr.mxu0 0.0
  %570 = vmatpush1.msra.mxu0 0.0
  %571 = vmatprep.subr.mxu0 0.0
  %572 = vmatpush1.msra.mxu0 0.0
  %573 = vmatprep.subr.mxu0 0.0
  %574 = vmatpush1.msra.mxu0 0.0
  %575 = vmatprep.subr.mxu0 0.0
  %576 = vmatpush1.msra.mxu0 0.0
  %577 = vmatprep.subr.mxu0 0.0
  %578 = vmatpush1.msra.mxu0 0.0
  %579 = vmatprep.subr.mxu0 0.0
  %580 = vmatpush1.msra.mxu0 0.0
  %581 = vmatprep.subr.mxu0 0.0
  %582 = vmatpush1.msra.mxu0 0.0
  %583 = vmatprep.subr.mxu0 0.0
  %584 = vmatpush1.msra.mxu0 0.0
  %585 = vmatprep.subr.mxu0 0.0
  %586 = vmatpush1.msra.mxu0 0.0
  %587 = vmatprep.subr.mxu0 0.0
  %588 = vmatpush1.msra.mxu0 0.0
  %589 = vmatprep.subr.mxu0 0.0
  %590 = vmatpush1.msra.mxu0 0.0
  %591 = vmatprep.subr.mxu0 0.0
  %592 = vmatpush1.msra.mxu0 0.0
  %593 = vmatprep.subr.mxu0 0.0
  %594 = vmatpush1.msra.mxu0 0.0
  %595 = vmatprep.subr.mxu0 0.0
  %596 = vmatpush1.msra.mxu0 0.0
  %597 = vmatprep.mubr.f32.mxu0 0.0
  %598 = vmatmul.mubr.f32.gmra.mrb[0].mxu0 %v510
  %v599 = vpop.f32.mrb[0].mxu0
  %v600 = vadd.f32 %v497, %v599
  %v601 = vpop.f32.mrb[0].mxu0
  %v602 = vadd.f32 %v501, %v601
  %603 = vmatprep.mubr.f32.mxu0 0.0
  %604 = vmatmul.mubr.f32.gmra.mrb[0].mxu0 %v513
  %v605 = vpop.f32.mrb[0].mxu0
  %v606 = vadd.f32 %v497, %v605
  %v607 = vpop.f32.mrb[0].mxu0
  %v608 = vadd.f32 %v501, %v607
  %609 = vmatprep.mubr.f32.mxu0 0.0
  %610 = vmatmul.mubr.f32.gmra.mrb[0].mxu0 %v516
  %v611 = vpop.f32.mrb[0].mxu0
  %v612 = vadd.f32 %v497, %v611
  %v613 = vpop.f32.mrb[0].mxu0
  %v614 = vadd.f32 %v501, %v613
  %615 = vmatprep.mubr.f32.mxu0 0.0
  %616 = vmatmul.mubr.f32.gmra.mrb[0].mxu0 %v519
  %v617 = vpop.f32.mrb[0].mxu0
  %v618 = vadd.f32 %v497, %v617
  %v619 = vpop.f32.mrb[0].mxu0
  %v620 = vadd.f32 %v501, %v619
  %621 = vmatprep.mubr.f32.mxu0 0.0
  %622 = vmatmul.mubr.f32.gmra.mrb[0].mxu0 %v522
  %v623 = vpop.f32.mrb[0].mxu0
  %v624 = vadd.f32 %v497, %v623
  %v625 = vpop.f32.mrb[0].mxu0
  %v626 = vadd.f32 %v501, %v625
  %627 = vmatprep.mubr.f32.mxu0 0.0
  %628 = vmatmul.mubr.f32.gmra.mrb[0].mxu0 %v525
  %v629 = vpop.f32.mrb[0].mxu0
  %v630 = vadd.f32 %v497, %v629
  %v631 = vpop.f32.mrb[0].mxu0
  %v632 = vadd.f32 %v501, %v631
  %633 = vmatprep.mubr.f32.mxu0 0.0
  %634 = vmatmul.mubr.f32.gmra.mrb[0].mxu0 %v528
  %v635 = vpop.f32.mrb[0].mxu0
  %v636 = vadd.f32 %v497, %v635
  %v637 = vpop.f32.mrb[0].mxu0
  %v638 = vadd.f32 %v501, %v637
  %639 = vmatprep.mubr.f32.mxu0 0.0
  %640 = vmatmul.mubr.f32.gmra.mrb[0].mxu0 %v531
  %v641 = vpop.f32.mrb[0].mxu0
  %v642 = vadd.f32 %v497, %v641
  %v643 = vpop.f32.mrb[0].mxu0
  %v644 = vadd.f32 %v501, %v643
  %645 = vdwg.mxu0
  %646 = vmatprep.subr.mxu0 0.0
  %647 = vmatpush1.msra.mxu0 %v474
  %648 = vmatprep.subr.mxu0 0.0
  %649 = vmatpush1.msra.mxu0 %v477
  %650 = vmatprep.subr.mxu0 0.0
  %651 = vmatpush1.msra.mxu0 %v480
  %652 = vmatprep.subr.mxu0 0.0
  %653 = vmatpush1.msra.mxu0 %v483
  %654 = vmatprep.subr.mxu0 0.0
  %655 = vmatpush1.msra.mxu0 0.0
  %656 = vmatprep.subr.mxu0 0.0
  %657 = vmatpush1.msra.mxu0 0.0
  %658 = vmatprep.subr.mxu0 0.0
  %659 = vmatpush1.msra.mxu0 0.0
  %660 = vmatprep.subr.mxu0 0.0
  %661 = vmatpush1.msra.mxu0 0.0
  %662 = vmatprep.subr.mxu0 0.0
  %663 = vmatpush1.msra.mxu0 0.0
  %664 = vmatprep.subr.mxu0 0.0
  %665 = vmatpush1.msra.mxu0 0.0
  %666 = vmatprep.subr.mxu0 0.0
  %667 = vmatpush1.msra.mxu0 0.0
  %668 = vmatprep.subr.mxu0 0.0
  %669 = vmatpush1.msra.mxu0 0.0
  %670 = vmatprep.subr.mxu0 0.0
  %671 = vmatpush1.msra.mxu0 0.0
  %672 = vmatprep.subr.mxu0 0.0
  %673 = vmatpush1.msra.mxu0 0.0
  %674 = vmatprep.subr.mxu0 0.0
  %675 = vmatpush1.msra.mxu0 0.0
  %676 = vmatprep.subr.mxu0 0.0
  %677 = vmatpush1.msra.mxu0 0.0
  %678 = vmatprep.subr.mxu0 0.0
  %679 = vmatpush1.msra.mxu0 0.0
  %680 = vmatprep.subr.mxu0 0.0
  %681 = vmatpush1.msra.mxu0 0.0
  %682 = vmatprep.subr.mxu0 0.0
  %683 = vmatpush1.msra.mxu0 0.0
  %684 = vmatprep.subr.mxu0 0.0
  %685 = vmatpush1.msra.mxu0 0.0
  %686 = vmatprep.subr.mxu0 0.0
  %687 = vmatpush1.msra.mxu0 0.0
  %688 = vmatprep.subr.mxu0 0.0
  %689 = vmatpush1.msra.mxu0 0.0
  %690 = vmatprep.subr.mxu0 0.0
  %691 = vmatpush1.msra.mxu0 0.0
  %692 = vmatprep.subr.mxu0 0.0
  %693 = vmatpush1.msra.mxu0 0.0
  %694 = vmatprep.subr.mxu0 0.0
  %695 = vmatpush1.msra.mxu0 0.0
  %696 = vmatprep.subr.mxu0 0.0
  %697 = vmatpush1.msra.mxu0 0.0
  %698 = vmatprep.subr.mxu0 0.0
  %699 = vmatpush1.msra.mxu0 0.0
  %700 = vmatprep.subr.mxu0 0.0
  %701 = vmatpush1.msra.mxu0 0.0
  %702 = vmatprep.subr.mxu0 0.0
  %703 = vmatpush1.msra.mxu0 0.0
  %704 = vmatprep.subr.mxu0 0.0
  %705 = vmatpush1.msra.mxu0 0.0
  %706 = vmatprep.subr.mxu0 0.0
  %707 = vmatpush1.msra.mxu0 0.0
  %708 = vmatprep.subr.mxu0 0.0
  %709 = vmatpush1.msra.mxu0 0.0
  %710 = vmatprep.mubr.f32.mxu0 0.0
  %711 = vmatmul.mubr.f32.gmra.mrb[0].mxu0 %v510
  %v712 = vpop.f32.mrb[0].mxu0
  %v713 = vadd.f32 %v505, %v712
  %v714 = vpop.f32.mrb[0].mxu0
  %715 = vmatprep.mubr.f32.mxu0 0.0
  %716 = vmatmul.mubr.f32.gmra.mrb[0].mxu0 %v513
  %v717 = vpop.f32.mrb[0].mxu0
  %v718 = vadd.f32 %v505, %v717
  %v719 = vpop.f32.mrb[0].mxu0
  %720 = vmatprep.mubr.f32.mxu0 0.0
  %721 = vmatmul.mubr.f32.gmra.mrb[0].mxu0 %v516
  %v722 = vpop.f32.mrb[0].mxu0
  %v723 = vadd.f32 %v505, %v722
  %v724 = vpop.f32.mrb[0].mxu0
  %725 = vmatprep.mubr.f32.mxu0 0.0
  %726 = vmatmul.mubr.f32.gmra.mrb[0].mxu0 %v519
  %v727 = vpop.f32.mrb[0].mxu0
  %v728 = vadd.f32 %v505, %v727
  %v729 = vpop.f32.mrb[0].mxu0
  %730 = vmatprep.mubr.f32.mxu0 0.0
  %731 = vmatmul.mubr.f32.gmra.mrb[0].mxu0 %v522
  %v732 = vpop.f32.mrb[0].mxu0
  %v733 = vadd.f32 %v505, %v732
  %v734 = vpop.f32.mrb[0].mxu0
  %735 = vmatprep.mubr.f32.mxu0 0.0
  %736 = vmatmul.mubr.f32.gmra.mrb[0].mxu0 %v525
  %v737 = vpop.f32.mrb[0].mxu0
  %v738 = vadd.f32 %v505, %v737
  %v739 = vpop.f32.mrb[0].mxu0
  %740 = vmatprep.mubr.f32.mxu0 0.0
  %741 = vmatmul.mubr.f32.gmra.mrb[0].mxu0 %v528
  %v742 = vpop.f32.mrb[0].mxu0
  %v743 = vadd.f32 %v505, %v742
  %v744 = vpop.f32.mrb[0].mxu0
  %745 = vmatprep.mubr.f32.mxu0 0.0
  %746 = vmatmul.mubr.f32.gmra.mrb[0].mxu0 %v531
  %v747 = vpop.f32.mrb[0].mxu0
  %v748 = vadd.f32 %v505, %v747
  %v749 = vpop.f32.mrb[0].mxu0
  %750 = vdwg.mxu0
  %751 = vst [vmem:[#allocation3] sm:$0xff] %v600
  %752 = vst [vmem:[#allocation3 + $0x8] sm:$0xff] %v602
  %753 = vst [vmem:[#allocation3 + $0x10] sm:$0xff] %v713
  %754 = vst [vmem:[#allocation3 + $0x18] sm:$0xff] %v606
  %755 = vst [vmem:[#allocation3 + $0x20] sm:$0xff] %v608
  %756 = vst [vmem:[#allocation3 + $0x28] sm:$0xff] %v718
  %757 = vst [vmem:[#allocation3 + $0x30] sm:$0xff] %v612
  %758 = vst [vmem:[#allocation3 + $0x38] sm:$0xff] %v614
  %759 = vst [vmem:[#allocation3 + $0x40] sm:$0xff] %v723
  %760 = vst [vmem:[#allocation3 + $0x48] sm:$0xff] %v618
  %761 = vst [vmem:[#allocation3 + $0x50] sm:$0xff] %v620
  %762 = vst [vmem:[#allocation3 + $0x58] sm:$0xff] %v728
  %763 = vst [vmem:[#allocation3 + $0x60] sm:$0xff] %v624
  %764 = vst [vmem:[#allocation3 + $0x68] sm:$0xff] %v626
  %765 = vst [vmem:[#allocation3 + $0x70] sm:$0xff] %v733
  %766 = vst [vmem:[#allocation3 + $0x78] sm:$0xff] %v630
  %767 = vst [vmem:[#allocation3 + $0x80] sm:$0xff] %v632
  %768 = vst [vmem:[#allocation3 + $0x88] sm:$0xff] %v738
  %769 = vst [vmem:[#allocation3 + $0x90] sm:$0xff] %v636
  %770 = vst [vmem:[#allocation3 + $0x98] sm:$0xff] %v638
  %771 = vst [vmem:[#allocation3 + $0xa0] sm:$0xff] %v743
  %772 = vst [vmem:[#allocation3 + $0xa8] sm:$0xff] %v642
  %773 = vst [vmem:[#allocation3 + $0xb0] sm:$0xff] %v644
  %774 = vst [vmem:[#allocation3 + $0xb8] sm:$0xff] %v748
  %v775 = vld [vmem:[%s3] sm:$0xff]
  %v776 = vld [vmem:[%s3 + $0x8] sm:$0xff]
  %v777 = vld [vmem:[%s3 + $0x10] sm:$0xff]
  %v778 = vld [vmem:[%s3 + $0x18] sm:$0xff]
  %v779 = vld [vmem:[%s3 + $0x20] sm:$0xff]
  %v780 = vld [vmem:[%s3 + $0x28] sm:$0xff]
  %v781 = vld [vmem:[%s3 + $0x30] sm:$0xff]
  %v782 = vld [vmem:[%s3 + $0x38] sm:$0xff]
  %v783 = vld [vmem:[%s3 + $0x40] sm:$0xff]
  %v784 = vld [vmem:[%s3 + $0x48] sm:$0xff]
  %v785 = vld [vmem:[%s3 + $0x50] sm:$0xff]
  %v786 = vld [vmem:[%s3 + $0x58] sm:$0xff]
  %v787 = vld [vmem:[%s3 + $0x60] sm:$0xff]
  %v788 = vld [vmem:[%s3 + $0x68] sm:$0xff]
  %v789 = vld [vmem:[%s3 + $0x70] sm:$0xff]
  %v790 = vld [vmem:[%s3 + $0x78] sm:$0xff]
  %v791 = vld [vmem:[%s3 + $0x80] sm:$0xff]
  %v792 = vld [vmem:[%s3 + $0x88] sm:$0xff]
  %v793 = vld [vmem:[%s3 + $0x90] sm:$0xff]
  %v794 = vld [vmem:[%s3 + $0x98] sm:$0xff]
  %v795 = vld [vmem:[%s3 + $0xa0] sm:$0xff]
  %v796 = vld [vmem:[%s3 + $0xa8] sm:$0xff]
  %v797 = vld [vmem:[%s3 + $0xb0] sm:$0xff]
  %v798 = vld [vmem:[%s3 + $0xb8] sm:$0xff]
  %v799 = vld [vmem:[%s3 + $0xc0] sm:$0xff]
  %v800 = vld [vmem:[%s3 + $0xc8] sm:$0xff]
  %v801 = vld [vmem:[%s3 + $0xd0] sm:$0xff]
  %v802 = vld [vmem:[%s3 + $0xd8] sm:$0xff]
  %v803 = vld [vmem:[%s3 + $0xe0] sm:$0xff]
  %v804 = vld [vmem:[%s3 + $0xe8] sm:$0xff]
  %v805 = vld [vmem:[%s3 + $0xf0] sm:$0xff]
  %v806 = vld [vmem:[%s3 + $0xf8] sm:$0xff]
  %v807 = vld [vmem:[%s3 + $0x100] sm:$0xff]
  %v808 = vld [vmem:[%s3 + $0x108] sm:$0xff]
  %v809 = vld [vmem:[%s3 + $0x110] sm:$0xff]
  %v810 = vld [vmem:[%s3 + $0x118] sm:$0xff]
  %v811 = vld [vmem:[%s3 + $0x120] sm:$0xff]
  %v812 = vld [vmem:[%s3 + $0x128] sm:$0xff]
  %v813 = vld [vmem:[%s3 + $0x130] sm:$0xff]
  %v814 = vld [vmem:[%s3 + $0x138] sm:$0xff]
  %v815 = vld [vmem:[%s3 + $0x140] sm:$0xff]
  %v816 = vld [vmem:[%s3 + $0x148] sm:$0xff]
  %v817 = vld [vmem:[%s3 + $0x150] sm:$0xff]
  %v818 = vld [vmem:[%s3 + $0x158] sm:$0xff]
  %v819 = vld [vmem:[%s3 + $0x160] sm:$0xff]
  %v820 = vld [vmem:[%s3 + $0x168] sm:$0xff]
  %v821 = vld [vmem:[%s3 + $0x170] sm:$0xff]
  %v822 = vld [vmem:[%s3 + $0x178] sm:$0xff]
  %v823 = vld [vmem:[%s5] sm:$0x1]
  %v825 = vlaneseq
  %v826 = vshrl.u32 %v825, 7
  %v827 = vsub.s32 0, %v826
  %v828 = vrot.slane %v823, %v827
  %s830 = smul.u32 0, 3
  %s831 = smul.addr %s830, 8
  %s832 = scalar_lea.vmem [#allocation3], %s831
  %v833 = vld [vmem:[%s832] sm:$0xff]
  %v834 = vld [vmem:[%s832 + $0x8] sm:$0xff]
  %v835 = vld [vmem:[%s832 + $0x10] sm:$0xff]
  %836 = vmatprep.subr.mxu0 %v776
  %837 = vmatpush1.msra.mxu0 %v775
  %838 = vmatprep.subr.mxu0 %v779
  %839 = vmatpush1.msra.mxu0 %v778
  %840 = vmatprep.subr.mxu0 %v782
  %841 = vmatpush1.msra.mxu0 %v781
  %842 = vmatprep.subr.mxu0 %v785
  %843 = vmatpush1.msra.mxu0 %v784
  %844 = vmatprep.subr.mxu0 %v788
  %845 = vmatpush1.msra.mxu0 %v787
  %846 = vmatprep.subr.mxu0 %v791
  %847 = vmatpush1.msra.mxu0 %v790
  %848 = vmatprep.subr.mxu0 %v794
  %849 = vmatpush1.msra.mxu0 %v793
  %850 = vmatprep.subr.mxu0 %v797
  %851 = vmatpush1.msra.mxu0 %v796
  %852 = vmatprep.subr.mxu0 %v800
  %853 = vmatpush1.msra.mxu0 %v799
  %854 = vmatprep.subr.mxu0 %v803
  %855 = vmatpush1.msra.mxu0 %v802
  %856 = vmatprep.subr.mxu0 %v806
  %857 = vmatpush1.msra.mxu0 %v805
  %858 = vmatprep.subr.mxu0 %v809
  %859 = vmatpush1.msra.mxu0 %v808
  %860 = vmatprep.subr.mxu0 %v812
  %861 = vmatpush1.msra.mxu0 %v811
  %862 = vmatprep.subr.mxu0 %v815
  %863 = vmatpush1.msra.mxu0 %v814
  %864 = vmatprep.subr.mxu0 %v818
  %865 = vmatpush1.msra.mxu0 %v817
  %866 = vmatprep.subr.mxu0 %v821
  %867 = vmatpush1.msra.mxu0 %v820
  %868 = vmatprep.subr.mxu0 0.0
  %869 = vmatpush1.msra.mxu0 0.0
  %870 = vmatprep.subr.mxu0 0.0
  %871 = vmatpush1.msra.mxu0 0.0
  %872 = vmatprep.subr.mxu0 0.0
  %873 = vmatpush1.msra.mxu0 0.0
  %874 = vmatprep.subr.mxu0 0.0
  %875 = vmatpush1.msra.mxu0 0.0
  %876 = vmatprep.subr.mxu0 0.0
  %877 = vmatpush1.msra.mxu0 0.0
  %878 = vmatprep.subr.mxu0 0.0
  %879 = vmatpush1.msra.mxu0 0.0
  %880 = vmatprep.subr.mxu0 0.0
  %881 = vmatpush1.msra.mxu0 0.0
  %882 = vmatprep.subr.mxu0 0.0
  %883 = vmatpush1.msra.mxu0 0.0
  %884 = vmatprep.subr.mxu0 0.0
  %885 = vmatpush1.msra.mxu0 0.0
  %886 = vmatprep.subr.mxu0 0.0
  %887 = vmatpush1.msra.mxu0 0.0
  %888 = vmatprep.subr.mxu0 0.0
  %889 = vmatpush1.msra.mxu0 0.0
  %890 = vmatprep.subr.mxu0 0.0
  %891 = vmatpush1.msra.mxu0 0.0
  %892 = vmatprep.subr.mxu0 0.0
  %893 = vmatpush1.msra.mxu0 0.0
  %894 = vmatprep.subr.mxu0 0.0
  %895 = vmatpush1.msra.mxu0 0.0
  %896 = vmatprep.subr.mxu0 0.0
  %897 = vmatpush1.msra.mxu0 0.0
  %898 = vmatprep.subr.mxu0 0.0
  %899 = vmatpush1.msra.mxu0 0.0
  %900 = vmatprep.mubr.f32.mxu0 0.0
  %901 = vmatmul.mubr.f32.gmra.mrb[0].mxu0 0.0
  %v902 = vpop.f32.mrb[0].mxu0
  %v903 = vadd.f32 0.0, %v902
  %v904 = vpop.f32.mrb[0].mxu0
  %v905 = vadd.f32 0.0, %v904
  %906 = vdwg.mxu0
  %907 = vmatprep.subr.mxu0 0.0
  %908 = vmatpush1.msra.mxu0 %v777
  %909 = vmatprep.subr.mxu0 0.0
  %910 = vmatpush1.msra.mxu0 %v780
  %911 = vmatprep.subr.mxu0 0.0
  %912 = vmatpush1.msra.mxu0 %v783
  %913 = vmatprep.subr.mxu0 0.0
  %914 = vmatpush1.msra.mxu0 %v786
  %915 = vmatprep.subr.mxu0 0.0
  %916 = vmatpush1.msra.mxu0 %v789
  %917 = vmatprep.subr.mxu0 0.0
  %918 = vmatpush1.msra.mxu0 %v792
  %919 = vmatprep.subr.mxu0 0.0
  %920 = vmatpush1.msra.mxu0 %v795
  %921 = vmatprep.subr.mxu0 0.0
  %922 = vmatpush1.msra.mxu0 %v798
  %923 = vmatprep.subr.mxu0 0.0
  %924 = vmatpush1.msra.mxu0 %v801
  %925 = vmatprep.subr.mxu0 0.0
  %926 = vmatpush1.msra.mxu0 %v804
  %927 = vmatprep.subr.mxu0 0.0
  %928 = vmatpush1.msra.mxu0 %v807
  %929 = vmatprep.subr.mxu0 0.0
  %930 = vmatpush1.msra.mxu0 %v810
  %931 = vmatprep.subr.mxu0 0.0
  %932 = vmatpush1.msra.mxu0 %v813
  %933 = vmatprep.subr.mxu0 0.0
  %934 = vmatpush1.msra.mxu0 %v816
  %935 = vmatprep.subr.mxu0 0.0
  %936 = vmatpush1.msra.mxu0 %v819
  %937 = vmatprep.subr.mxu0 0.0
  %938 = vmatpush1.msra.mxu0 %v822
  %939 = vmatprep.subr.mxu0 0.0
  %940 = vmatpush1.msra.mxu0 0.0
  %941 = vmatprep.subr.mxu0 0.0
  %942 = vmatpush1.msra.mxu0 0.0
  %943 = vmatprep.subr.mxu0 0.0
  %944 = vmatpush1.msra.mxu0 0.0
  %945 = vmatprep.subr.mxu0 0.0
  %946 = vmatpush1.msra.mxu0 0.0
  %947 = vmatprep.subr.mxu0 0.0
  %948 = vmatpush1.msra.mxu0 0.0
  %949 = vmatprep.subr.mxu0 0.0
  %950 = vmatpush1.msra.mxu0 0.0
  %951 = vmatprep.subr.mxu0 0.0
  %952 = vmatpush1.msra.mxu0 0.0
  %953 = vmatprep.subr.mxu0 0.0
  %954 = vmatpush1.msra.mxu0 0.0
  %955 = vmatprep.subr.mxu0 0.0
  %956 = vmatpush1.msra.mxu0 0.0
  %957 = vmatprep.subr.mxu0 0.0
  %958 = vmatpush1.msra.mxu0 0.0
  %959 = vmatprep.subr.mxu0 0.0
  %960 = vmatpush1.msra.mxu0 0.0
  %961 = vmatprep.subr.mxu0 0.0
  %962 = vmatpush1.msra.mxu0 0.0
  %963 = vmatprep.subr.mxu0 0.0
  %964 = vmatpush1.msra.mxu0 0.0
  %965 = vmatprep.subr.mxu0 0.0
  %966 = vmatpush1.msra.mxu0 0.0
  %967 = vmatprep.subr.mxu0 0.0
  %968 = vmatpush1.msra.mxu0 0.0
  %969 = vmatprep.subr.mxu0 0.0
  %970 = vmatpush1.msra.mxu0 0.0
  %971 = vmatprep.mubr.f32.mxu0 0.0
  %972 = vmatmul.mubr.f32.gmra.mrb[0].mxu0 0.0
  %v973 = vpop.f32.mrb[0].mxu0
  %v974 = vadd.f32 0.0, %v973
  %v975 = vpop.f32.mrb[0].mxu0
  %976 = vdwg.mxu0
  %v977 = vadd.f32 %v833, %v903
  %v978 = vadd.f32 %v834, %v905
  %v979 = vxor.u32 %v977, 2147483648
  %v980 = vxor.u32 %v978, 2147483648
  %v981 = vmul.f32 %v979, 1.442695
  %v982 = vpow.pop %v981
  %v983 = vmul.f32 %v980, 1.442695
  %v984 = vpow.pop %v983
  %v985 = vadd.f32 %v982, 1.0
  %v986 = vadd.f32 %v984, 1.0
  %v987 = vrcp.pop %v985
  %v988 = vmul.f32 1.0, %v987
  %v989 = vrcp.pop %v986
  %v990 = vmul.f32 1.0, %v989
  %v991 = vadd.f32 %v974, %v828
  %v992 = vmul.f32 %v988, %v991
  %v993 = vadd.f32 %v835, %v992
  %v994 = vtanh.pop %v993
  %v995 = vsub.f32 1.0, %v990
  %v996 = vmul.f32 %v995, %v994
  %v997 = vmul.f32 %v990, 0.0
  %v998 = vadd.f32 %v996, %v997
  %s999 = smul.u32 1, 3
  %s1000 = smul.addr %s999, 8
  %s1001 = scalar_lea.vmem [#allocation3], %s1000
  %v1002 = vld [vmem:[%s1001] sm:$0xff]
  %v1003 = vld [vmem:[%s1001 + $0x8] sm:$0xff]
  %v1004 = vld [vmem:[%s1001 + $0x10] sm:$0xff]
  %1005 = vmatprep.subr.mxu0 %v776
  %1006 = vmatpush1.msra.mxu0 %v775
  %1007 = vmatprep.subr.mxu0 %v779
  %1008 = vmatpush1.msra.mxu0 %v778
  %1009 = vmatprep.subr.mxu0 %v782
  %1010 = vmatpush1.msra.mxu0 %v781
  %1011 = vmatprep.subr.mxu0 %v785
  %1012 = vmatpush1.msra.mxu0 %v784
  %1013 = vmatprep.subr.mxu0 %v788
  %1014 = vmatpush1.msra.mxu0 %v787
  %1015 = vmatprep.subr.mxu0 %v791
  %1016 = vmatpush1.msra.mxu0 %v790
  %1017 = vmatprep.subr.mxu0 %v794
  %1018 = vmatpush1.msra.mxu0 %v793
  %1019 = vmatprep.subr.mxu0 %v797
  %1020 = vmatpush1.msra.mxu0 %v796
  %1021 = vmatprep.subr.mxu0 %v800
  %1022 = vmatpush1.msra.mxu0 %v799
  %1023 = vmatprep.subr.mxu0 %v803
  %1024 = vmatpush1.msra.mxu0 %v802
  %1025 = vmatprep.subr.mxu0 %v806
  %1026 = vmatpush1.msra.mxu0 %v805
  %1027 = vmatprep.subr.mxu0 %v809
  %1028 = vmatpush1.msra.mxu0 %v808
  %1029 = vmatprep.subr.mxu0 %v812
  %1030 = vmatpush1.msra.mxu0 %v811
  %1031 = vmatprep.subr.mxu0 %v815
  %1032 = vmatpush1.msra.mxu0 %v814
  %1033 = vmatprep.subr.mxu0 %v818
  %1034 = vmatpush1.msra.mxu0 %v817
  %1035 = vmatprep.subr.mxu0 %v821
  %1036 = vmatpush1.msra.mxu0 %v820
  %1037 = vmatprep.subr.mxu0 0.0
  %1038 = vmatpush1.msra.mxu0 0.0
  %1039 = vmatprep.subr.mxu0 0.0
  %1040 = vmatpush1.msra.mxu0 0.0
  %1041 = vmatprep.subr.mxu0 0.0
  %1042 = vmatpush1.msra.mxu0 0.0
  %1043 = vmatprep.subr.mxu0 0.0
  %1044 = vmatpush1.msra.mxu0 0.0
  %1045 = vmatprep.subr.mxu0 0.0
  %1046 = vmatpush1.msra.mxu0 0.0
  %1047 = vmatprep.subr.mxu0 0.0
  %1048 = vmatpush1.msra.mxu0 0.0
  %1049 = vmatprep.subr.mxu0 0.0
  %1050 = vmatpush1.msra.mxu0 0.0
  %1051 = vmatprep.subr.mxu0 0.0
  %1052 = vmatpush1.msra.mxu0 0.0
  %1053 = vmatprep.subr.mxu0 0.0
  %1054 = vmatpush1.msra.mxu0 0.0
  %1055 = vmatprep.subr.mxu0 0.0
  %1056 = vmatpush1.msra.mxu0 0.0
  %1057 = vmatprep.subr.mxu0 0.0
  %1058 = vmatpush1.msra.mxu0 0.0
  %1059 = vmatprep.subr.mxu0 0.0
  %1060 = vmatpush1.msra.mxu0 0.0
  %1061 = vmatprep.subr.mxu0 0.0
  %1062 = vmatpush1.msra.mxu0 0.0
  %1063 = vmatprep.subr.mxu0 0.0
  %1064 = vmatpush1.msra.mxu0 0.0
  %1065 = vmatprep.subr.mxu0 0.0
  %1066 = vmatpush1.msra.mxu0 0.0
  %1067 = vmatprep.subr.mxu0 0.0
  %1068 = vmatpush1.msra.mxu0 0.0
  %1069 = vmatprep.mubr.f32.mxu0 0.0
  %1070 = vmatmul.mubr.f32.gmra.mrb[0].mxu0 %v998
  %v1071 = vpop.f32.mrb[0].mxu0
  %v1072 = vadd.f32 0.0, %v1071
  %v1073 = vpop.f32.mrb[0].mxu0
  %v1074 = vadd.f32 0.0, %v1073
  %1075 = vdwg.mxu0
  %1076 = vmatprep.subr.mxu0 0.0
  %1077 = vmatpush1.msra.mxu0 %v777
  %1078 = vmatprep.subr.mxu0 0.0
  %1079 = vmatpush1.msra.mxu0 %v780
  %1080 = vmatprep.subr.mxu0 0.0
  %1081 = vmatpush1.msra.mxu0 %v783
  %1082 = vmatprep.subr.mxu0 0.0
  %1083 = vmatpush1.msra.mxu0 %v786
  %1084 = vmatprep.subr.mxu0 0.0
  %1085 = vmatpush1.msra.mxu0 %v789
  %1086 = vmatprep.subr.mxu0 0.0
  %1087 = vmatpush1.msra.mxu0 %v792
  %1088 = vmatprep.subr.mxu0 0.0
  %1089 = vmatpush1.msra.mxu0 %v795
  %1090 = vmatprep.subr.mxu0 0.0
  %1091 = vmatpush1.msra.mxu0 %v798
  %1092 = vmatprep.subr.mxu0 0.0
  %1093 = vmatpush1.msra.mxu0 %v801
  %1094 = vmatprep.subr.mxu0 0.0
  %1095 = vmatpush1.msra.mxu0 %v804
  %1096 = vmatprep.subr.mxu0 0.0
  %1097 = vmatpush1.msra.mxu0 %v807
  %1098 = vmatprep.subr.mxu0 0.0
  %1099 = vmatpush1.msra.mxu0 %v810
  %1100 = vmatprep.subr.mxu0 0.0
  %1101 = vmatpush1.msra.mxu0 %v813
  %1102 = vmatprep.subr.mxu0 0.0
  %1103 = vmatpush1.msra.mxu0 %v816
  %1104 = vmatprep.subr.mxu0 0.0
  %1105 = vmatpush1.msra.mxu0 %v819
  %1106 = vmatprep.subr.mxu0 0.0
  %1107 = vmatpush1.msra.mxu0 %v822
  %1108 = vmatprep.subr.mxu0 0.0
  %1109 = vmatpush1.msra.mxu0 0.0
  %1110 = vmatprep.subr.mxu0 0.0
  %1111 = vmatpush1.msra.mxu0 0.0
  %1112 = vmatprep.subr.mxu0 0.0
  %1113 = vmatpush1.msra.mxu0 0.0
  %1114 = vmatprep.subr.mxu0 0.0
  %1115 = vmatpush1.msra.mxu0 0.0
  %1116 = vmatprep.subr.mxu0 0.0
  %1117 = vmatpush1.msra.mxu0 0.0
  %1118 = vmatprep.subr.mxu0 0.0
  %1119 = vmatpush1.msra.mxu0 0.0
  %1120 = vmatprep.subr.mxu0 0.0
  %1121 = vmatpush1.msra.mxu0 0.0
  %1122 = vmatprep.subr.mxu0 0.0
  %1123 = vmatpush1.msra.mxu0 0.0
  %1124 = vmatprep.subr.mxu0 0.0
  %1125 = vmatpush1.msra.mxu0 0.0
  %1126 = vmatprep.subr.mxu0 0.0
  %1127 = vmatpush1.msra.mxu0 0.0
  %1128 = vmatprep.subr.mxu0 0.0
  %1129 = vmatpush1.msra.mxu0 0.0
  %1130 = vmatprep.subr.mxu0 0.0
  %1131 = vmatpush1.msra.mxu0 0.0
  %1132 = vmatprep.subr.mxu0 0.0
  %1133 = vmatpush1.msra.mxu0 0.0
  %1134 = vmatprep.subr.mxu0 0.0
  %1135 = vmatpush1.msra.mxu0 0.0
  %1136 = vmatprep.subr.mxu0 0.0
  %1137 = vmatpush1.msra.mxu0 0.0
  %1138 = vmatprep.subr.mxu0 0.0
  %1139 = vmatpush1.msra.mxu0 0.0
  %1140 = vmatprep.mubr.f32.mxu0 0.0
  %1141 = vmatmul.mubr.f32.gmra.mrb[0].mxu0 %v998
  %v1142 = vpop.f32.mrb[0].mxu0
  %v1143 = vadd.f32 0.0, %v1142
  %v1144 = vpop.f32.mrb[0].mxu0
  %1145 = vdwg.mxu0
  %v1146 = vadd.f32 %v1002, %v1072
  %v1147 = vadd.f32 %v1003, %v1074
  %v1148 = vxor.u32 %v1146, 2147483648
  %v1149 = vxor.u32 %v1147, 2147483648
  %v1150 = vmul.f32 %v1148, 1.442695
  %v1151 = vpow.pop %v1150
  %v1152 = vmul.f32 %v1149, 1.442695
  %v1153 = vpow.pop %v1152
  %v1154 = vadd.f32 %v1151, 1.0
  %v1155 = vadd.f32 %v1153, 1.0
  %v1156 = vrcp.pop %v1154
  %v1157 = vmul.f32 1.0, %v1156
  %v1158 = vrcp.pop %v1155
  %v1159 = vmul.f32 1.0, %v1158
  %v1160 = vadd.f32 %v1143, %v828
  %v1161 = vmul.f32 %v1157, %v1160
  %v1162 = vadd.f32 %v1004, %v1161
  %v1163 = vtanh.pop %v1162
  %v1164 = vsub.f32 1.0, %v1159
  %v1165 = vmul.f32 %v1164, %v1163
  %v1166 = vmul.f32 %v1159, %v998
  %v1167 = vadd.f32 %v1165, %v1166
  %s1168 = smul.u32 2, 3
  %s1169 = smul.addr %s1168, 8
  %s1170 = scalar_lea.vmem [#allocation3], %s1169
  %v1171 = vld [vmem:[%s1170] sm:$0xff]
  %v1172 = vld [vmem:[%s1170 + $0x8] sm:$0xff]
  %v1173 = vld [vmem:[%s1170 + $0x10] sm:$0xff]
  %1174 = vmatprep.subr.mxu0 %v776
  %1175 = vmatpush1.msra.mxu0 %v775
  %1176 = vmatprep.subr.mxu0 %v779
  %1177 = vmatpush1.msra.mxu0 %v778
  %1178 = vmatprep.subr.mxu0 %v782
  %1179 = vmatpush1.msra.mxu0 %v781
  %1180 = vmatprep.subr.mxu0 %v785
  %1181 = vmatpush1.msra.mxu0 %v784
  %1182 = vmatprep.subr.mxu0 %v788
  %1183 = vmatpush1.msra.mxu0 %v787
  %1184 = vmatprep.subr.mxu0 %v791
  %1185 = vmatpush1.msra.mxu0 %v790
  %1186 = vmatprep.subr.mxu0 %v794
  %1187 = vmatpush1.msra.mxu0 %v793
  %1188 = vmatprep.subr.mxu0 %v797
  %1189 = vmatpush1.msra.mxu0 %v796
  %1190 = vmatprep.subr.mxu0 %v800
  %1191 = vmatpush1.msra.mxu0 %v799
  %1192 = vmatprep.subr.mxu0 %v803
  %1193 = vmatpush1.msra.mxu0 %v802
  %1194 = vmatprep.subr.mxu0 %v806
  %1195 = vmatpush1.msra.mxu0 %v805
  %1196 = vmatprep.subr.mxu0 %v809
  %1197 = vmatpush1.msra.mxu0 %v808
  %1198 = vmatprep.subr.mxu0 %v812
  %1199 = vmatpush1.msra.mxu0 %v811
  %1200 = vmatprep.subr.mxu0 %v815
  %1201 = vmatpush1.msra.mxu0 %v814
  %1202 = vmatprep.subr.mxu0 %v818
  %1203 = vmatpush1.msra.mxu0 %v817
  %1204 = vmatprep.subr.mxu0 %v821
  %1205 = vmatpush1.msra.mxu0 %v820
  %1206 = vmatprep.subr.mxu0 0.0
  %1207 = vmatpush1.msra.mxu0 0.0
  %1208 = vmatprep.subr.mxu0 0.0
  %1209 = vmatpush1.msra.mxu0 0.0
  %1210 = vmatprep.subr.mxu0 0.0
  %1211 = vmatpush1.msra.mxu0 0.0
  %1212 = vmatprep.subr.mxu0 0.0
  %1213 = vmatpush1.msra.mxu0 0.0
  %1214 = vmatprep.subr.mxu0 0.0
  %1215 = vmatpush1.msra.mxu0 0.0
  %1216 = vmatprep.subr.mxu0 0.0
  %1217 = vmatpush1.msra.mxu0 0.0
  %1218 = vmatprep.subr.mxu0 0.0
  %1219 = vmatpush1.msra.mxu0 0.0
  %1220 = vmatprep.subr.mxu0 0.0
  %1221 = vmatpush1.msra.mxu0 0.0
  %1222 = vmatprep.subr.mxu0 0.0
  %1223 = vmatpush1.msra.mxu0 0.0
  %1224 = vmatprep.subr.mxu0 0.0
  %1225 = vmatpush1.msra.mxu0 0.0
  %1226 = vmatprep.subr.mxu0 0.0
  %1227 = vmatpush1.msra.mxu0 0.0
  %1228 = vmatprep.subr.mxu0 0.0
  %1229 = vmatpush1.msra.mxu0 0.0
  %1230 = vmatprep.subr.mxu0 0.0
  %1231 = vmatpush1.msra.mxu0 0.0
  %1232 = vmatprep.subr.mxu0 0.0
  %1233 = vmatpush1.msra.mxu0 0.0
  %1234 = vmatprep.subr.mxu0 0.0
  %1235 = vmatpush1.msra.mxu0 0.0
  %1236 = vmatprep.subr.mxu0 0.0
  %1237 = vmatpush1.msra.mxu0 0.0
  %1238 = vmatprep.mubr.f32.mxu0 0.0
  %1239 = vmatmul.mubr.f32.gmra.mrb[0].mxu0 %v1167
  %v1240 = vpop.f32.mrb[0].mxu0
  %v1241 = vadd.f32 0.0, %v1240
  %v1242 = vpop.f32.mrb[0].mxu0
  %v1243 = vadd.f32 0.0, %v1242
  %1244 = vdwg.mxu0
  %1245 = vmatprep.subr.mxu0 0.0
  %1246 = vmatpush1.msra.mxu0 %v777
  %1247 = vmatprep.subr.mxu0 0.0
  %1248 = vmatpush1.msra.mxu0 %v780
  %1249 = vmatprep.subr.mxu0 0.0
  %1250 = vmatpush1.msra.mxu0 %v783
  %1251 = vmatprep.subr.mxu0 0.0
  %1252 = vmatpush1.msra.mxu0 %v786
  %1253 = vmatprep.subr.mxu0 0.0
  %1254 = vmatpush1.msra.mxu0 %v789
  %1255 = vmatprep.subr.mxu0 0.0
  %1256 = vmatpush1.msra.mxu0 %v792
  %1257 = vmatprep.subr.mxu0 0.0
  %1258 = vmatpush1.msra.mxu0 %v795
  %1259 = vmatprep.subr.mxu0 0.0
  %1260 = vmatpush1.msra.mxu0 %v798
  %1261 = vmatprep.subr.mxu0 0.0
  %1262 = vmatpush1.msra.mxu0 %v801
  %1263 = vmatprep.subr.mxu0 0.0
  %1264 = vmatpush1.msra.mxu0 %v804
  %1265 = vmatprep.subr.mxu0 0.0
  %1266 = vmatpush1.msra.mxu0 %v807
  %1267 = vmatprep.subr.mxu0 0.0
  %1268 = vmatpush1.msra.mxu0 %v810
  %1269 = vmatprep.subr.mxu0 0.0
  %1270 = vmatpush1.msra.mxu0 %v813
  %1271 = vmatprep.subr.mxu0 0.0
  %1272 = vmatpush1.msra.mxu0 %v816
  %1273 = vmatprep.subr.mxu0 0.0
  %1274 = vmatpush1.msra.mxu0 %v819
  %1275 = vmatprep.subr.mxu0 0.0
  %1276 = vmatpush1.msra.mxu0 %v822
  %1277 = vmatprep.subr.mxu0 0.0
  %1278 = vmatpush1.msra.mxu0 0.0
  %1279 = vmatprep.subr.mxu0 0.0
  %1280 = vmatpush1.msra.mxu0 0.0
  %1281 = vmatprep.subr.mxu0 0.0
  %1282 = vmatpush1.msra.mxu0 0.0
  %1283 = vmatprep.subr.mxu0 0.0
  %1284 = vmatpush1.msra.mxu0 0.0
  %1285 = vmatprep.subr.mxu0 0.0
  %1286 = vmatpush1.msra.mxu0 0.0
  %1287 = vmatprep.subr.mxu0 0.0
  %1288 = vmatpush1.msra.mxu0 0.0
  %1289 = vmatprep.subr.mxu0 0.0
  %1290 = vmatpush1.msra.mxu0 0.0
  %1291 = vmatprep.subr.mxu0 0.0
  %1292 = vmatpush1.msra.mxu0 0.0
  %1293 = vmatprep.subr.mxu0 0.0
  %1294 = vmatpush1.msra.mxu0 0.0
  %1295 = vmatprep.subr.mxu0 0.0
  %1296 = vmatpush1.msra.mxu0 0.0
  %1297 = vmatprep.subr.mxu0 0.0
  %1298 = vmatpush1.msra.mxu0 0.0
  %1299 = vmatprep.subr.mxu0 0.0
  %1300 = vmatpush1.msra.mxu0 0.0
  %1301 = vmatprep.subr.mxu0 0.0
  %1302 = vmatpush1.msra.mxu0 0.0
  %1303 = vmatprep.subr.mxu0 0.0
  %1304 = vmatpush1.msra.mxu0 0.0
  %1305 = vmatprep.subr.mxu0 0.0
  %1306 = vmatpush1.msra.mxu0 0.0
  %1307 = vmatprep.subr.mxu0 0.0
  %1308 = vmatpush1.msra.mxu0 0.0
  %1309 = vmatprep.mubr.f32.mxu0 0.0
  %1310 = vmatmul.mubr.f32.gmra.mrb[0].mxu0 %v1167
  %v1311 = vpop.f32.mrb[0].mxu0
  %v1312 = vadd.f32 0.0, %v1311
  %v1313 = vpop.f32.mrb[0].mxu0
  %1314 = vdwg.mxu0
  %v1315 = vadd.f32 %v1171, %v1241
  %v1316 = vadd.f32 %v1172, %v1243
  %v1317 = vxor.u32 %v1315, 2147483648
  %v1318 = vxor.u32 %v1316, 2147483648
  %v1319 = vmul.f32 %v1317, 1.442695
  %v1320 = vpow.pop %v1319
  %v1321 = vmul.f32 %v1318, 1.442695
  %v1322 = vpow.pop %v1321
  %v1323 = vadd.f32 %v1320, 1.0
  %v1324 = vadd.f32 %v1322, 1.0
  %v1325 = vrcp.pop %v1323
  %v1326 = vmul.f32 1.0, %v1325
  %v1327 = vrcp.pop %v1324
  %v1328 = vmul.f32 1.0, %v1327
  %v1329 = vadd.f32 %v1312, %v828
  %v1330 = vmul.f32 %v1326, %v1329
  %v1331 = vadd.f32 %v1173, %v1330
  %v1332 = vtanh.pop %v1331
  %v1333 = vsub.f32 1.0, %v1328
  %v1334 = vmul.f32 %v1333, %v1332
  %v1335 = vmul.f32 %v1328, %v1167
  %v1336 = vadd.f32 %v1334, %v1335
  %s1337 = smul.u32 3, 3
  %s1338 = smul.addr %s1337, 8
  %s1339 = scalar_lea.vmem [#allocation3], %s1338
  %v1340 = vld [vmem:[%s1339] sm:$0xff]
  %v1341 = vld [vmem:[%s1339 + $0x8] sm:$0xff]
  %v1342 = vld [vmem:[%s1339 + $0x10] sm:$0xff]
  %1343 = vmatprep.subr.mxu0 %v776
  %1344 = vmatpush1.msra.mxu0 %v775
  %1345 = vmatprep.subr.mxu0 %v779
  %1346 = vmatpush1.msra.mxu0 %v778
  %1347 = vmatprep.subr.mxu0 %v782
  %1348 = vmatpush1.msra.mxu0 %v781
  %1349 = vmatprep.subr.mxu0 %v785
  %1350 = vmatpush1.msra.mxu0 %v784
  %1351 = vmatprep.subr.mxu0 %v788
  %1352 = vmatpush1.msra.mxu0 %v787
  %1353 = vmatprep.subr.mxu0 %v791
  %1354 = vmatpush1.msra.mxu0 %v790
  %1355 = vmatprep.subr.mxu0 %v794
  %1356 = vmatpush1.msra.mxu0 %v793
  %1357 = vmatprep.subr.mxu0 %v797
  %1358 = vmatpush1.msra.mxu0 %v796
  %1359 = vmatprep.subr.mxu0 %v800
  %1360 = vmatpush1.msra.mxu0 %v799
  %1361 = vmatprep.subr.mxu0 %v803
  %1362 = vmatpush1.msra.mxu0 %v802
  %1363 = vmatprep.subr.mxu0 %v806
  %1364 = vmatpush1.msra.mxu0 %v805
  %1365 = vmatprep.subr.mxu0 %v809
  %1366 = vmatpush1.msra.mxu0 %v808
  %1367 = vmatprep.subr.mxu0 %v812
  %1368 = vmatpush1.msra.mxu0 %v811
  %1369 = vmatprep.subr.mxu0 %v815
  %1370 = vmatpush1.msra.mxu0 %v814
  %1371 = vmatprep.subr.mxu0 %v818
  %1372 = vmatpush1.msra.mxu0 %v817
  %1373 = vmatprep.subr.mxu0 %v821
  %1374 = vmatpush1.msra.mxu0 %v820
  %1375 = vmatprep.subr.mxu0 0.0
  %1376 = vmatpush1.msra.mxu0 0.0
  %1377 = vmatprep.subr.mxu0 0.0
  %1378 = vmatpush1.msra.mxu0 0.0
  %1379 = vmatprep.subr.mxu0 0.0
  %1380 = vmatpush1.msra.mxu0 0.0
  %1381 = vmatprep.subr.mxu0 0.0
  %1382 = vmatpush1.msra.mxu0 0.0
  %1383 = vmatprep.subr.mxu0 0.0
  %1384 = vmatpush1.msra.mxu0 0.0
  %1385 = vmatprep.subr.mxu0 0.0
  %1386 = vmatpush1.msra.mxu0 0.0
  %1387 = vmatprep.subr.mxu0 0.0
  %1388 = vmatpush1.msra.mxu0 0.0
  %1389 = vmatprep.subr.mxu0 0.0
  %1390 = vmatpush1.msra.mxu0 0.0
  %1391 = vmatprep.subr.mxu0 0.0
  %1392 = vmatpush1.msra.mxu0 0.0
  %1393 = vmatprep.subr.mxu0 0.0
  %1394 = vmatpush1.msra.mxu0 0.0
  %1395 = vmatprep.subr.mxu0 0.0
  %1396 = vmatpush1.msra.mxu0 0.0
  %1397 = vmatprep.subr.mxu0 0.0
  %1398 = vmatpush1.msra.mxu0 0.0
  %1399 = vmatprep.subr.mxu0 0.0
  %1400 = vmatpush1.msra.mxu0 0.0
  %1401 = vmatprep.subr.mxu0 0.0
  %1402 = vmatpush1.msra.mxu0 0.0
  %1403 = vmatprep.subr.mxu0 0.0
  %1404 = vmatpush1.msra.mxu0 0.0
  %1405 = vmatprep.subr.mxu0 0.0
  %1406 = vmatpush1.msra.mxu0 0.0
  %1407 = vmatprep.mubr.f32.mxu0 0.0
  %1408 = vmatmul.mubr.f32.gmra.mrb[0].mxu0 %v1336
  %v1409 = vpop.f32.mrb[0].mxu0
  %v1410 = vadd.f32 0.0, %v1409
  %v1411 = vpop.f32.mrb[0].mxu0
  %v1412 = vadd.f32 0.0, %v1411
  %1413 = vdwg.mxu0
  %1414 = vmatprep.subr.mxu0 0.0
  %1415 = vmatpush1.msra.mxu0 %v777
  %1416 = vmatprep.subr.mxu0 0.0
  %1417 = vmatpush1.msra.mxu0 %v780
  %1418 = vmatprep.subr.mxu0 0.0
  %1419 = vmatpush1.msra.mxu0 %v783
  %1420 = vmatprep.subr.mxu0 0.0
  %1421 = vmatpush1.msra.mxu0 %v786
  %1422 = vmatprep.subr.mxu0 0.0
  %1423 = vmatpush1.msra.mxu0 %v789
  %1424 = vmatprep.subr.mxu0 0.0
  %1425 = vmatpush1.msra.mxu0 %v792
  %1426 = vmatprep.subr.mxu0 0.0
  %1427 = vmatpush1.msra.mxu0 %v795
  %1428 = vmatprep.subr.mxu0 0.0
  %1429 = vmatpush1.msra.mxu0 %v798
  %1430 = vmatprep.subr.mxu0 0.0
  %1431 = vmatpush1.msra.mxu0 %v801
  %1432 = vmatprep.subr.mxu0 0.0
  %1433 = vmatpush1.msra.mxu0 %v804
  %1434 = vmatprep.subr.mxu0 0.0
  %1435 = vmatpush1.msra.mxu0 %v807
  %1436 = vmatprep.subr.mxu0 0.0
  %1437 = vmatpush1.msra.mxu0 %v810
  %1438 = vmatprep.subr.mxu0 0.0
  %1439 = vmatpush1.msra.mxu0 %v813
  %1440 = vmatprep.subr.mxu0 0.0
  %1441 = vmatpush1.msra.mxu0 %v816
  %1442 = vmatprep.subr.mxu0 0.0
  %1443 = vmatpush1.msra.mxu0 %v819
  %1444 = vmatprep.subr.mxu0 0.0
  %1445 = vmatpush1.msra.mxu0 %v822
  %1446 = vmatprep.subr.mxu0 0.0
  %1447 = vmatpush1.msra.mxu0 0.0
  %1448 = vmatprep.subr.mxu0 0.0
  %1449 = vmatpush1.msra.mxu0 0.0
  %1450 = vmatprep.subr.mxu0 0.0
  %1451 = vmatpush1.msra.mxu0 0.0
  %1452 = vmatprep.subr.mxu0 0.0
  %1453 = vmatpush1.msra.mxu0 0.0
  %1454 = vmatprep.subr.mxu0 0.0
  %1455 = vmatpush1.msra.mxu0 0.0
  %1456 = vmatprep.subr.mxu0 0.0
  %1457 = vmatpush1.msra.mxu0 0.0
  %1458 = vmatprep.subr.mxu0 0.0
  %1459 = vmatpush1.msra.mxu0 0.0
  %1460 = vmatprep.subr.mxu0 0.0
  %1461 = vmatpush1.msra.mxu0 0.0
  %1462 = vmatprep.subr.mxu0 0.0
  %1463 = vmatpush1.msra.mxu0 0.0
  %1464 = vmatprep.subr.mxu0 0.0
  %1465 = vmatpush1.msra.mxu0 0.0
  %1466 = vmatprep.subr.mxu0 0.0
  %1467 = vmatpush1.msra.mxu0 0.0
  %1468 = vmatprep.subr.mxu0 0.0
  %1469 = vmatpush1.msra.mxu0 0.0
  %1470 = vmatprep.subr.mxu0 0.0
  %1471 = vmatpush1.msra.mxu0 0.0
  %1472 = vmatprep.subr.mxu0 0.0
  %1473 = vmatpush1.msra.mxu0 0.0
  %1474 = vmatprep.subr.mxu0 0.0
  %1475 = vmatpush1.msra.mxu0 0.0
  %1476 = vmatprep.subr.mxu0 0.0
  %1477 = vmatpush1.msra.mxu0 0.0
  %1478 = vmatprep.mubr.f32.mxu0 0.0
  %1479 = vmatmul.mubr.f32.gmra.mrb[0].mxu0 %v1336
  %v1480 = vpop.f32.mrb[0].mxu0
  %v1481 = vadd.f32 0.0, %v1480
  %v1482 = vpop.f32.mrb[0].mxu0
  %1483 = vdwg.mxu0
  %v1484 = vadd.f32 %v1340, %v1410
  %v1485 = vadd.f32 %v1341, %v1412
  %v1486 = vxor.u32 %v1484, 2147483648
  %v1487 = vxor.u32 %v1485, 2147483648
  %v1488 = vmul.f32 %v1486, 1.442695
  %v1489 = vpow.pop %v1488
  %v1490 = vmul.f32 %v1487, 1.442695
  %v1491 = vpow.pop %v1490
  %v1492 = vadd.f32 %v1489, 1.0
  %v1493 = vadd.f32 %v1491, 1.0
  %v1494 = vrcp.pop %v1492
  %v1495 = vmul.f32 1.0, %v1494
  %v1496 = vrcp.pop %v1493
  %v1497 = vmul.f32 1.0, %v1496
  %v1498 = vadd.f32 %v1481, %v828
  %v1499 = vmul.f32 %v1495, %v1498
  %v1500 = vadd.f32 %v1342, %v1499
  %v1501 = vtanh.pop %v1500
  %v1502 = vsub.f32 1.0, %v1497
  %v1503 = vmul.f32 %v1502, %v1501
  %v1504 = vmul.f32 %v1497, %v1336
  %v1505 = vadd.f32 %v1503, %v1504
  %s1506 = smul.u32 4, 3
  %s1507 = smul.addr %s1506, 8
  %s1508 = scalar_lea.vmem [#allocation3], %s1507
  %v1509 = vld [vmem:[%s1508] sm:$0xff]
  %v1510 = vld [vmem:[%s1508 + $0x8] sm:$0xff]
  %v1511 = vld [vmem:[%s1508 + $0x10] sm:$0xff]
  %1512 = vmatprep.subr.mxu0 %v776
  %1513 = vmatpush1.msra.mxu0 %v775
  %1514 = vmatprep.subr.mxu0 %v779
  %1515 = vmatpush1.msra.mxu0 %v778
  %1516 = vmatprep.subr.mxu0 %v782
  %1517 = vmatpush1.msra.mxu0 %v781
  %1518 = vmatprep.subr.mxu0 %v785
  %1519 = vmatpush1.msra.mxu0 %v784
  %1520 = vmatprep.subr.mxu0 %v788
  %1521 = vmatpush1.msra.mxu0 %v787
  %1522 = vmatprep.subr.mxu0 %v791
  %1523 = vmatpush1.msra.mxu0 %v790
  %1524 = vmatprep.subr.mxu0 %v794
  %1525 = vmatpush1.msra.mxu0 %v793
  %1526 = vmatprep.subr.mxu0 %v797
  %1527 = vmatpush1.msra.mxu0 %v796
  %1528 = vmatprep.subr.mxu0 %v800
  %1529 = vmatpush1.msra.mxu0 %v799
  %1530 = vmatprep.subr.mxu0 %v803
  %1531 = vmatpush1.msra.mxu0 %v802
  %1532 = vmatprep.subr.mxu0 %v806
  %1533 = vmatpush1.msra.mxu0 %v805
  %1534 = vmatprep.subr.mxu0 %v809
  %1535 = vmatpush1.msra.mxu0 %v808
  %1536 = vmatprep.subr.mxu0 %v812
  %1537 = vmatpush1.msra.mxu0 %v811
  %1538 = vmatprep.subr.mxu0 %v815
  %1539 = vmatpush1.msra.mxu0 %v814
  %1540 = vmatprep.subr.mxu0 %v818
  %1541 = vmatpush1.msra.mxu0 %v817
  %1542 = vmatprep.subr.mxu0 %v821
  %1543 = vmatpush1.msra.mxu0 %v820
  %1544 = vmatprep.subr.mxu0 0.0
  %1545 = vmatpush1.msra.mxu0 0.0
  %1546 = vmatprep.subr.mxu0 0.0
  %1547 = vmatpush1.msra.mxu0 0.0
  %1548 = vmatprep.subr.mxu0 0.0
  %1549 = vmatpush1.msra.mxu0 0.0
  %1550 = vmatprep.subr.mxu0 0.0
  %1551 = vmatpush1.msra.mxu0 0.0
  %1552 = vmatprep.subr.mxu0 0.0
  %1553 = vmatpush1.msra.mxu0 0.0
  %1554 = vmatprep.subr.mxu0 0.0
  %1555 = vmatpush1.msra.mxu0 0.0
  %1556 = vmatprep.subr.mxu0 0.0
  %1557 = vmatpush1.msra.mxu0 0.0
  %1558 = vmatprep.subr.mxu0 0.0
  %1559 = vmatpush1.msra.mxu0 0.0
  %1560 = vmatprep.subr.mxu0 0.0
  %1561 = vmatpush1.msra.mxu0 0.0
  %1562 = vmatprep.subr.mxu0 0.0
  %1563 = vmatpush1.msra.mxu0 0.0
  %1564 = vmatprep.subr.mxu0 0.0
  %1565 = vmatpush1.msra.mxu0 0.0
  %1566 = vmatprep.subr.mxu0 0.0
  %1567 = vmatpush1.msra.mxu0 0.0
  %1568 = vmatprep.subr.mxu0 0.0
  %1569 = vmatpush1.msra.mxu0 0.0
  %1570 = vmatprep.subr.mxu0 0.0
  %1571 = vmatpush1.msra.mxu0 0.0
  %1572 = vmatprep.subr.mxu0 0.0
  %1573 = vmatpush1.msra.mxu0 0.0
  %1574 = vmatprep.subr.mxu0 0.0
  %1575 = vmatpush1.msra.mxu0 0.0
  %1576 = vmatprep.mubr.f32.mxu0 0.0
  %1577 = vmatmul.mubr.f32.gmra.mrb[0].mxu0 %v1505
  %v1578 = vpop.f32.mrb[0].mxu0
  %v1579 = vadd.f32 0.0, %v1578
  %v1580 = vpop.f32.mrb[0].mxu0
  %v1581 = vadd.f32 0.0, %v1580
  %1582 = vdwg.mxu0
  %1583 = vmatprep.subr.mxu0 0.0
  %1584 = vmatpush1.msra.mxu0 %v777
  %1585 = vmatprep.subr.mxu0 0.0
  %1586 = vmatpush1.msra.mxu0 %v780
  %1587 = vmatprep.subr.mxu0 0.0
  %1588 = vmatpush1.msra.mxu0 %v783
  %1589 = vmatprep.subr.mxu0 0.0
  %1590 = vmatpush1.msra.mxu0 %v786
  %1591 = vmatprep.subr.mxu0 0.0
  %1592 = vmatpush1.msra.mxu0 %v789
  %1593 = vmatprep.subr.mxu0 0.0
  %1594 = vmatpush1.msra.mxu0 %v792
  %1595 = vmatprep.subr.mxu0 0.0
  %1596 = vmatpush1.msra.mxu0 %v795
  %1597 = vmatprep.subr.mxu0 0.0
  %1598 = vmatpush1.msra.mxu0 %v798
  %1599 = vmatprep.subr.mxu0 0.0
  %1600 = vmatpush1.msra.mxu0 %v801
  %1601 = vmatprep.subr.mxu0 0.0
  %1602 = vmatpush1.msra.mxu0 %v804
  %1603 = vmatprep.subr.mxu0 0.0
  %1604 = vmatpush1.msra.mxu0 %v807
  %1605 = vmatprep.subr.mxu0 0.0
  %1606 = vmatpush1.msra.mxu0 %v810
  %1607 = vmatprep.subr.mxu0 0.0
  %1608 = vmatpush1.msra.mxu0 %v813
  %1609 = vmatprep.subr.mxu0 0.0
  %1610 = vmatpush1.msra.mxu0 %v816
  %1611 = vmatprep.subr.mxu0 0.0
  %1612 = vmatpush1.msra.mxu0 %v819
  %1613 = vmatprep.subr.mxu0 0.0
  %1614 = vmatpush1.msra.mxu0 %v822
  %1615 = vmatprep.subr.mxu0 0.0
  %1616 = vmatpush1.msra.mxu0 0.0
  %1617 = vmatprep.subr.mxu0 0.0
  %1618 = vmatpush1.msra.mxu0 0.0
  %1619 = vmatprep.subr.mxu0 0.0
  %1620 = vmatpush1.msra.mxu0 0.0
  %1621 = vmatprep.subr.mxu0 0.0
  %1622 = vmatpush1.msra.mxu0 0.0
  %1623 = vmatprep.subr.mxu0 0.0
  %1624 = vmatpush1.msra.mxu0 0.0
  %1625 = vmatprep.subr.mxu0 0.0
  %1626 = vmatpush1.msra.mxu0 0.0
  %1627 = vmatprep.subr.mxu0 0.0
  %1628 = vmatpush1.msra.mxu0 0.0
  %1629 = vmatprep.subr.mxu0 0.0
  %1630 = vmatpush1.msra.mxu0 0.0
  %1631 = vmatprep.subr.mxu0 0.0
  %1632 = vmatpush1.msra.mxu0 0.0
  %1633 = vmatprep.subr.mxu0 0.0
  %1634 = vmatpush1.msra.mxu0 0.0
  %1635 = vmatprep.subr.mxu0 0.0
  %1636 = vmatpush1.msra.mxu0 0.0
  %1637 = vmatprep.subr.mxu0 0.0
  %1638 = vmatpush1.msra.mxu0 0.0
  %1639 = vmatprep.subr.mxu0 0.0
  %1640 = vmatpush1.msra.mxu0 0.0
  %1641 = vmatprep.subr.mxu0 0.0
  %1642 = vmatpush1.msra.mxu0 0.0
  %1643 = vmatprep.subr.mxu0 0.0
  %1644 = vmatpush1.msra.mxu0 0.0
  %1645 = vmatprep.subr.mxu0 0.0
  %1646 = vmatpush1.msra.mxu0 0.0
  %1647 = vmatprep.mubr.f32.mxu0 0.0
  %1648 = vmatmul.mubr.f32.gmra.mrb[0].mxu0 %v1505
  %v1649 = vpop.f32.mrb[0].mxu0
  %v1650 = vadd.f32 0.0, %v1649
  %v1651 = vpop.f32.mrb[0].mxu0
  %1652 = vdwg.mxu0
  %v1653 = vadd.f32 %v1509, %v1579
  %v1654 = vadd.f32 %v1510, %v1581
  %v1655 = vxor.u32 %v1653, 2147483648
  %v1656 = vxor.u32 %v1654, 2147483648
  %v1657 = vmul.f32 %v1655, 1.442695
  %v1658 = vpow.pop %v1657
  %v1659 = vmul.f32 %v1656, 1.442695
  %v1660 = vpow.pop %v1659
  %v1661 = vadd.f32 %v1658, 1.0
  %v1662 = vadd.f32 %v1660, 1.0
  %v1663 = vrcp.pop %v1661
  %v1664 = vmul.f32 1.0, %v1663
  %v1665 = vrcp.pop %v1662
  %v1666 = vmul.f32 1.0, %v1665
  %v1667 = vadd.f32 %v1650, %v828
  %v1668 = vmul.f32 %v1664, %v1667
  %v1669 = vadd.f32 %v1511, %v1668
  %v1670 = vtanh.pop %v1669
  %v1671 = vsub.f32 1.0, %v1666
  %v1672 = vmul.f32 %v1671, %v1670
  %v1673 = vmul.f32 %v1666, %v1505
  %v1674 = vadd.f32 %v1672, %v1673
  %s1675 = smul.u32 5, 3
  %s1676 = smul.addr %s1675, 8
  %s1677 = scalar_lea.vmem [#allocation3], %s1676
  %v1678 = vld [vmem:[%s1677] sm:$0xff]
  %v1679 = vld [vmem:[%s1677 + $0x8] sm:$0xff]
  %v1680 = vld [vmem:[%s1677 + $0x10] sm:$0xff]
  %1681 = vmatprep.subr.mxu0 %v776
  %1682 = vmatpush1.msra.mxu0 %v775
  %1683 = vmatprep.subr.mxu0 %v779
  %1684 = vmatpush1.msra.mxu0 %v778
  %1685 = vmatprep.subr.mxu0 %v782
  %1686 = vmatpush1.msra.mxu0 %v781
  %1687 = vmatprep.subr.mxu0 %v785
  %1688 = vmatpush1.msra.mxu0 %v784
  %1689 = vmatprep.subr.mxu0 %v788
  %1690 = vmatpush1.msra.mxu0 %v787
  %1691 = vmatprep.subr.mxu0 %v791
  %1692 = vmatpush1.msra.mxu0 %v790
  %1693 = vmatprep.subr.mxu0 %v794
  %1694 = vmatpush1.msra.mxu0 %v793
  %1695 = vmatprep.subr.mxu0 %v797
  %1696 = vmatpush1.msra.mxu0 %v796
  %1697 = vmatprep.subr.mxu0 %v800
  %1698 = vmatpush1.msra.mxu0 %v799
  %1699 = vmatprep.subr.mxu0 %v803
  %1700 = vmatpush1.msra.mxu0 %v802
  %1701 = vmatprep.subr.mxu0 %v806
  %1702 = vmatpush1.msra.mxu0 %v805
  %1703 = vmatprep.subr.mxu0 %v809
  %1704 = vmatpush1.msra.mxu0 %v808
  %1705 = vmatprep.subr.mxu0 %v812
  %1706 = vmatpush1.msra.mxu0 %v811
  %1707 = vmatprep.subr.mxu0 %v815
  %1708 = vmatpush1.msra.mxu0 %v814
  %1709 = vmatprep.subr.mxu0 %v818
  %1710 = vmatpush1.msra.mxu0 %v817
  %1711 = vmatprep.subr.mxu0 %v821
  %1712 = vmatpush1.msra.mxu0 %v820
  %1713 = vmatprep.subr.mxu0 0.0
  %1714 = vmatpush1.msra.mxu0 0.0
  %1715 = vmatprep.subr.mxu0 0.0
  %1716 = vmatpush1.msra.mxu0 0.0
  %1717 = vmatprep.subr.mxu0 0.0
  %1718 = vmatpush1.msra.mxu0 0.0
  %1719 = vmatprep.subr.mxu0 0.0
  %1720 = vmatpush1.msra.mxu0 0.0
  %1721 = vmatprep.subr.mxu0 0.0
  %1722 = vmatpush1.msra.mxu0 0.0
  %1723 = vmatprep.subr.mxu0 0.0
  %1724 = vmatpush1.msra.mxu0 0.0
  %1725 = vmatprep.subr.mxu0 0.0
  %1726 = vmatpush1.msra.mxu0 0.0
  %1727 = vmatprep.subr.mxu0 0.0
  %1728 = vmatpush1.msra.mxu0 0.0
  %1729 = vmatprep.subr.mxu0 0.0
  %1730 = vmatpush1.msra.mxu0 0.0
  %1731 = vmatprep.subr.mxu0 0.0
  %1732 = vmatpush1.msra.mxu0 0.0
  %1733 = vmatprep.subr.mxu0 0.0
  %1734 = vmatpush1.msra.mxu0 0.0
  %1735 = vmatprep.subr.mxu0 0.0
  %1736 = vmatpush1.msra.mxu0 0.0
  %1737 = vmatprep.subr.mxu0 0.0
  %1738 = vmatpush1.msra.mxu0 0.0
  %1739 = vmatprep.subr.mxu0 0.0
  %1740 = vmatpush1.msra.mxu0 0.0
  %1741 = vmatprep.subr.mxu0 0.0
  %1742 = vmatpush1.msra.mxu0 0.0
  %1743 = vmatprep.subr.mxu0 0.0
  %1744 = vmatpush1.msra.mxu0 0.0
  %1745 = vmatprep.mubr.f32.mxu0 0.0
  %1746 = vmatmul.mubr.f32.gmra.mrb[0].mxu0 %v1674
  %v1747 = vpop.f32.mrb[0].mxu0
  %v1748 = vadd.f32 0.0, %v1747
  %v1749 = vpop.f32.mrb[0].mxu0
  %v1750 = vadd.f32 0.0, %v1749
  %1751 = vdwg.mxu0
  %1752 = vmatprep.subr.mxu0 0.0
  %1753 = vmatpush1.msra.mxu0 %v777
  %1754 = vmatprep.subr.mxu0 0.0
  %1755 = vmatpush1.msra.mxu0 %v780
  %1756 = vmatprep.subr.mxu0 0.0
  %1757 = vmatpush1.msra.mxu0 %v783
  %1758 = vmatprep.subr.mxu0 0.0
  %1759 = vmatpush1.msra.mxu0 %v786
  %1760 = vmatprep.subr.mxu0 0.0
  %1761 = vmatpush1.msra.mxu0 %v789
  %1762 = vmatprep.subr.mxu0 0.0
  %1763 = vmatpush1.msra.mxu0 %v792
  %1764 = vmatprep.subr.mxu0 0.0
  %1765 = vmatpush1.msra.mxu0 %v795
  %1766 = vmatprep.subr.mxu0 0.0
  %1767 = vmatpush1.msra.mxu0 %v798
  %1768 = vmatprep.subr.mxu0 0.0
  %1769 = vmatpush1.msra.mxu0 %v801
  %1770 = vmatprep.subr.mxu0 0.0
  %1771 = vmatpush1.msra.mxu0 %v804
  %1772 = vmatprep.subr.mxu0 0.0
  %1773 = vmatpush1.msra.mxu0 %v807
  %1774 = vmatprep.subr.mxu0 0.0
  %1775 = vmatpush1.msra.mxu0 %v810
  %1776 = vmatprep.subr.mxu0 0.0
  %1777 = vmatpush1.msra.mxu0 %v813
  %1778 = vmatprep.subr.mxu0 0.0
  %1779 = vmatpush1.msra.mxu0 %v816
  %1780 = vmatprep.subr.mxu0 0.0
  %1781 = vmatpush1.msra.mxu0 %v819
  %1782 = vmatprep.subr.mxu0 0.0
  %1783 = vmatpush1.msra.mxu0 %v822
  %1784 = vmatprep.subr.mxu0 0.0
  %1785 = vmatpush1.msra.mxu0 0.0
  %1786 = vmatprep.subr.mxu0 0.0
  %1787 = vmatpush1.msra.mxu0 0.0
  %1788 = vmatprep.subr.mxu0 0.0
  %1789 = vmatpush1.msra.mxu0 0.0
  %1790 = vmatprep.subr.mxu0 0.0
  %1791 = vmatpush1.msra.mxu0 0.0
  %1792 = vmatprep.subr.mxu0 0.0
  %1793 = vmatpush1.msra.mxu0 0.0
  %1794 = vmatprep.subr.mxu0 0.0
  %1795 = vmatpush1.msra.mxu0 0.0
  %1796 = vmatprep.subr.mxu0 0.0
  %1797 = vmatpush1.msra.mxu0 0.0
  %1798 = vmatprep.subr.mxu0 0.0
  %1799 = vmatpush1.msra.mxu0 0.0
  %1800 = vmatprep.subr.mxu0 0.0
  %1801 = vmatpush1.msra.mxu0 0.0
  %1802 = vmatprep.subr.mxu0 0.0
  %1803 = vmatpush1.msra.mxu0 0.0
  %1804 = vmatprep.subr.mxu0 0.0
  %1805 = vmatpush1.msra.mxu0 0.0
  %1806 = vmatprep.subr.mxu0 0.0
  %1807 = vmatpush1.msra.mxu0 0.0
  %1808 = vmatprep.subr.mxu0 0.0
  %1809 = vmatpush1.msra.mxu0 0.0
  %1810 = vmatprep.subr.mxu0 0.0
  %1811 = vmatpush1.msra.mxu0 0.0
  %1812 = vmatprep.subr.mxu0 0.0
  %1813 = vmatpush1.msra.mxu0 0.0
  %1814 = vmatprep.subr.mxu0 0.0
  %1815 = vmatpush1.msra.mxu0 0.0
  %1816 = vmatprep.mubr.f32.mxu0 0.0
  %1817 = vmatmul.mubr.f32.gmra.mrb[0].mxu0 %v1674
  %v1818 = vpop.f32.mrb[0].mxu0
  %v1819 = vadd.f32 0.0, %v1818
  %v1820 = vpop.f32.mrb[0].mxu0
  %1821 = vdwg.mxu0
  %v1822 = vadd.f32 %v1678, %v1748
  %v1823 = vadd.f32 %v1679, %v1750
  %v1824 = vxor.u32 %v1822, 2147483648
  %v1825 = vxor.u32 %v1823, 2147483648
  %v1826 = vmul.f32 %v1824, 1.442695
  %v1827 = vpow.pop %v1826
  %v1828 = vmul.f32 %v1825, 1.442695
  %v1829 = vpow.pop %v1828
  %v1830 = vadd.f32 %v1827, 1.0
  %v1831 = vadd.f32 %v1829, 1.0
  %v1832 = vrcp.pop %v1830
  %v1833 = vmul.f32 1.0, %v1832
  %v1834 = vrcp.pop %v1831
  %v1835 = vmul.f32 1.0, %v1834
  %v1836 = vadd.f32 %v1819, %v828
  %v1837 = vmul.f32 %v1833, %v1836
  %v1838 = vadd.f32 %v1680, %v1837
  %v1839 = vtanh.pop %v1838
  %v1840 = vsub.f32 1.0, %v1835
  %v1841 = vmul.f32 %v1840, %v1839
  %v1842 = vmul.f32 %v1835, %v1674
  %v1843 = vadd.f32 %v1841, %v1842
  %s1844 = smul.u32 6, 3
  %s1845 = smul.addr %s1844, 8
  %s1846 = scalar_lea.vmem [#allocation3], %s1845
  %v1847 = vld [vmem:[%s1846] sm:$0xff]
  %v1848 = vld [vmem:[%s1846 + $0x8] sm:$0xff]
  %v1849 = vld [vmem:[%s1846 + $0x10] sm:$0xff]
  %1850 = vmatprep.subr.mxu0 %v776
  %1851 = vmatpush1.msra.mxu0 %v775
  %1852 = vmatprep.subr.mxu0 %v779
  %1853 = vmatpush1.msra.mxu0 %v778
  %1854 = vmatprep.subr.mxu0 %v782
  %1855 = vmatpush1.msra.mxu0 %v781
  %1856 = vmatprep.subr.mxu0 %v785
  %1857 = vmatpush1.msra.mxu0 %v784
  %1858 = vmatprep.subr.mxu0 %v788
  %1859 = vmatpush1.msra.mxu0 %v787
  %1860 = vmatprep.subr.mxu0 %v791
  %1861 = vmatpush1.msra.mxu0 %v790
  %1862 = vmatprep.subr.mxu0 %v794
  %1863 = vmatpush1.msra.mxu0 %v793
  %1864 = vmatprep.subr.mxu0 %v797
  %1865 = vmatpush1.msra.mxu0 %v796
  %1866 = vmatprep.subr.mxu0 %v800
  %1867 = vmatpush1.msra.mxu0 %v799
  %1868 = vmatprep.subr.mxu0 %v803
  %1869 = vmatpush1.msra.mxu0 %v802
  %1870 = vmatprep.subr.mxu0 %v806
  %1871 = vmatpush1.msra.mxu0 %v805
  %1872 = vmatprep.subr.mxu0 %v809
  %1873 = vmatpush1.msra.mxu0 %v808
  %1874 = vmatprep.subr.mxu0 %v812
  %1875 = vmatpush1.msra.mxu0 %v811
  %1876 = vmatprep.subr.mxu0 %v815
  %1877 = vmatpush1.msra.mxu0 %v814
  %1878 = vmatprep.subr.mxu0 %v818
  %1879 = vmatpush1.msra.mxu0 %v817
  %1880 = vmatprep.subr.mxu0 %v821
  %1881 = vmatpush1.msra.mxu0 %v820
  %1882 = vmatprep.subr.mxu0 0.0
  %1883 = vmatpush1.msra.mxu0 0.0
  %1884 = vmatprep.subr.mxu0 0.0
  %1885 = vmatpush1.msra.mxu0 0.0
  %1886 = vmatprep.subr.mxu0 0.0
  %1887 = vmatpush1.msra.mxu0 0.0
  %1888 = vmatprep.subr.mxu0 0.0
  %1889 = vmatpush1.msra.mxu0 0.0
  %1890 = vmatprep.subr.mxu0 0.0
  %1891 = vmatpush1.msra.mxu0 0.0
  %1892 = vmatprep.subr.mxu0 0.0
  %1893 = vmatpush1.msra.mxu0 0.0
  %1894 = vmatprep.subr.mxu0 0.0
  %1895 = vmatpush1.msra.mxu0 0.0
  %1896 = vmatprep.subr.mxu0 0.0
  %1897 = vmatpush1.msra.mxu0 0.0
  %1898 = vmatprep.subr.mxu0 0.0
  %1899 = vmatpush1.msra.mxu0 0.0
  %1900 = vmatprep.subr.mxu0 0.0
  %1901 = vmatpush1.msra.mxu0 0.0
  %1902 = vmatprep.subr.mxu0 0.0
  %1903 = vmatpush1.msra.mxu0 0.0
  %1904 = vmatprep.subr.mxu0 0.0
  %1905 = vmatpush1.msra.mxu0 0.0
  %1906 = vmatprep.subr.mxu0 0.0
  %1907 = vmatpush1.msra.mxu0 0.0
  %1908 = vmatprep.subr.mxu0 0.0
  %1909 = vmatpush1.msra.mxu0 0.0
  %1910 = vmatprep.subr.mxu0 0.0
  %1911 = vmatpush1.msra.mxu0 0.0
  %1912 = vmatprep.subr.mxu0 0.0
  %1913 = vmatpush1.msra.mxu0 0.0
  %1914 = vmatprep.mubr.f32.mxu0 0.0
  %1915 = vmatmul.mubr.f32.gmra.mrb[0].mxu0 %v1843
  %v1916 = vpop.f32.mrb[0].mxu0
  %v1917 = vadd.f32 0.0, %v1916
  %v1918 = vpop.f32.mrb[0].mxu0
  %v1919 = vadd.f32 0.0, %v1918
  %1920 = vdwg.mxu0
  %1921 = vmatprep.subr.mxu0 0.0
  %1922 = vmatpush1.msra.mxu0 %v777
  %1923 = vmatprep.subr.mxu0 0.0
  %1924 = vmatpush1.msra.mxu0 %v780
  %1925 = vmatprep.subr.mxu0 0.0
  %1926 = vmatpush1.msra.mxu0 %v783
  %1927 = vmatprep.subr.mxu0 0.0
  %1928 = vmatpush1.msra.mxu0 %v786
  %1929 = vmatprep.subr.mxu0 0.0
  %1930 = vmatpush1.msra.mxu0 %v789
  %1931 = vmatprep.subr.mxu0 0.0
  %1932 = vmatpush1.msra.mxu0 %v792
  %1933 = vmatprep.subr.mxu0 0.0
  %1934 = vmatpush1.msra.mxu0 %v795
  %1935 = vmatprep.subr.mxu0 0.0
  %1936 = vmatpush1.msra.mxu0 %v798
  %1937 = vmatprep.subr.mxu0 0.0
  %1938 = vmatpush1.msra.mxu0 %v801
  %1939 = vmatprep.subr.mxu0 0.0
  %1940 = vmatpush1.msra.mxu0 %v804
  %1941 = vmatprep.subr.mxu0 0.0
  %1942 = vmatpush1.msra.mxu0 %v807
  %1943 = vmatprep.subr.mxu0 0.0
  %1944 = vmatpush1.msra.mxu0 %v810
  %1945 = vmatprep.subr.mxu0 0.0
  %1946 = vmatpush1.msra.mxu0 %v813
  %1947 = vmatprep.subr.mxu0 0.0
  %1948 = vmatpush1.msra.mxu0 %v816
  %1949 = vmatprep.subr.mxu0 0.0
  %1950 = vmatpush1.msra.mxu0 %v819
  %1951 = vmatprep.subr.mxu0 0.0
  %1952 = vmatpush1.msra.mxu0 %v822
  %1953 = vmatprep.subr.mxu0 0.0
  %1954 = vmatpush1.msra.mxu0 0.0
  %1955 = vmatprep.subr.mxu0 0.0
  %1956 = vmatpush1.msra.mxu0 0.0
  %1957 = vmatprep.subr.mxu0 0.0
  %1958 = vmatpush1.msra.mxu0 0.0
  %1959 = vmatprep.subr.mxu0 0.0
  %1960 = vmatpush1.msra.mxu0 0.0
  %1961 = vmatprep.subr.mxu0 0.0
  %1962 = vmatpush1.msra.mxu0 0.0
  %1963 = vmatprep.subr.mxu0 0.0
  %1964 = vmatpush1.msra.mxu0 0.0
  %1965 = vmatprep.subr.mxu0 0.0
  %1966 = vmatpush1.msra.mxu0 0.0
  %1967 = vmatprep.subr.mxu0 0.0
  %1968 = vmatpush1.msra.mxu0 0.0
  %1969 = vmatprep.subr.mxu0 0.0
  %1970 = vmatpush1.msra.mxu0 0.0
  %1971 = vmatprep.subr.mxu0 0.0
  %1972 = vmatpush1.msra.mxu0 0.0
  %1973 = vmatprep.subr.mxu0 0.0
  %1974 = vmatpush1.msra.mxu0 0.0
  %1975 = vmatprep.subr.mxu0 0.0
  %1976 = vmatpush1.msra.mxu0 0.0
  %1977 = vmatprep.subr.mxu0 0.0
  %1978 = vmatpush1.msra.mxu0 0.0
  %1979 = vmatprep.subr.mxu0 0.0
  %1980 = vmatpush1.msra.mxu0 0.0
  %1981 = vmatprep.subr.mxu0 0.0
  %1982 = vmatpush1.msra.mxu0 0.0
  %1983 = vmatprep.subr.mxu0 0.0
  %1984 = vmatpush1.msra.mxu0 0.0
  %1985 = vmatprep.mubr.f32.mxu0 0.0
  %1986 = vmatmul.mubr.f32.gmra.mrb[0].mxu0 %v1843
  %v1987 = vpop.f32.mrb[0].mxu0
  %v1988 = vadd.f32 0.0, %v1987
  %v1989 = vpop.f32.mrb[0].mxu0
  %1990 = vdwg.mxu0
  %v1991 = vadd.f32 %v1847, %v1917
  %v1992 = vadd.f32 %v1848, %v1919
  %v1993 = vxor.u32 %v1991, 2147483648
  %v1994 = vxor.u32 %v1992, 2147483648
  %v1995 = vmul.f32 %v1993, 1.442695
  %v1996 = vpow.pop %v1995
  %v1997 = vmul.f32 %v1994, 1.442695
  %v1998 = vpow.pop %v1997
  %v1999 = vadd.f32 %v1996, 1.0
  %v2000 = vadd.f32 %v1998, 1.0
  %v2001 = vrcp.pop %v1999
  %v2002 = vmul.f32 1.0, %v2001
  %v2003 = vrcp.pop %v2000
  %v2004 = vmul.f32 1.0, %v2003
  %v2005 = vadd.f32 %v1988, %v828
  %v2006 = vmul.f32 %v2002, %v2005
  %v2007 = vadd.f32 %v1849, %v2006
  %v2008 = vtanh.pop %v2007
  %v2009 = vsub.f32 1.0, %v2004
  %v2010 = vmul.f32 %v2009, %v2008
  %v2011 = vmul.f32 %v2004, %v1843
  %v2012 = vadd.f32 %v2010, %v2011
  %s2013 = smul.u32 7, 3
  %s2014 = smul.addr %s2013, 8
  %s2015 = scalar_lea.vmem [#allocation3], %s2014
  %v2016 = vld [vmem:[%s2015] sm:$0xff]
  %v2017 = vld [vmem:[%s2015 + $0x8] sm:$0xff]
  %v2018 = vld [vmem:[%s2015 + $0x10] sm:$0xff]
  %2019 = vmatprep.subr.mxu0 %v776
  %2020 = vmatpush1.msra.mxu0 %v775
  %2021 = vmatprep.subr.mxu0 %v779
  %2022 = vmatpush1.msra.mxu0 %v778
  %2023 = vmatprep.subr.mxu0 %v782
  %2024 = vmatpush1.msra.mxu0 %v781
  %2025 = vmatprep.subr.mxu0 %v785
  %2026 = vmatpush1.msra.mxu0 %v784
  %2027 = vmatprep.subr.mxu0 %v788
  %2028 = vmatpush1.msra.mxu0 %v787
  %2029 = vmatprep.subr.mxu0 %v791
  %2030 = vmatpush1.msra.mxu0 %v790
  %2031 = vmatprep.subr.mxu0 %v794
  %2032 = vmatpush1.msra.mxu0 %v793
  %2033 = vmatprep.subr.mxu0 %v797
  %2034 = vmatpush1.msra.mxu0 %v796
  %2035 = vmatprep.subr.mxu0 %v800
  %2036 = vmatpush1.msra.mxu0 %v799
  %2037 = vmatprep.subr.mxu0 %v803
  %2038 = vmatpush1.msra.mxu0 %v802
  %2039 = vmatprep.subr.mxu0 %v806
  %2040 = vmatpush1.msra.mxu0 %v805
  %2041 = vmatprep.subr.mxu0 %v809
  %2042 = vmatpush1.msra.mxu0 %v808
  %2043 = vmatprep.subr.mxu0 %v812
  %2044 = vmatpush1.msra.mxu0 %v811
  %2045 = vmatprep.subr.mxu0 %v815
  %2046 = vmatpush1.msra.mxu0 %v814
  %2047 = vmatprep.subr.mxu0 %v818
  %2048 = vmatpush1.msra.mxu0 %v817
  %2049 = vmatprep.subr.mxu0 %v821
  %2050 = vmatpush1.msra.mxu0 %v820
  %2051 = vmatprep.subr.mxu0 0.0
  %2052 = vmatpush1.msra.mxu0 0.0
  %2053 = vmatprep.subr.mxu0 0.0
  %2054 = vmatpush1.msra.mxu0 0.0
  %2055 = vmatprep.subr.mxu0 0.0
  %2056 = vmatpush1.msra.mxu0 0.0
  %2057 = vmatprep.subr.mxu0 0.0
  %2058 = vmatpush1.msra.mxu0 0.0
  %2059 = vmatprep.subr.mxu0 0.0
  %2060 = vmatpush1.msra.mxu0 0.0
  %2061 = vmatprep.subr.mxu0 0.0
  %2062 = vmatpush1.msra.mxu0 0.0
  %2063 = vmatprep.subr.mxu0 0.0
  %2064 = vmatpush1.msra.mxu0 0.0
  %2065 = vmatprep.subr.mxu0 0.0
  %2066 = vmatpush1.msra.mxu0 0.0
  %2067 = vmatprep.subr.mxu0 0.0
  %2068 = vmatpush1.msra.mxu0 0.0
  %2069 = vmatprep.subr.mxu0 0.0
  %2070 = vmatpush1.msra.mxu0 0.0
  %2071 = vmatprep.subr.mxu0 0.0
  %2072 = vmatpush1.msra.mxu0 0.0
  %2073 = vmatprep.subr.mxu0 0.0
  %2074 = vmatpush1.msra.mxu0 0.0
  %2075 = vmatprep.subr.mxu0 0.0
  %2076 = vmatpush1.msra.mxu0 0.0
  %2077 = vmatprep.subr.mxu0 0.0
  %2078 = vmatpush1.msra.mxu0 0.0
  %2079 = vmatprep.subr.mxu0 0.0
  %2080 = vmatpush1.msra.mxu0 0.0
  %2081 = vmatprep.subr.mxu0 0.0
  %2082 = vmatpush1.msra.mxu0 0.0
  %2083 = vmatprep.mubr.f32.mxu0 0.0
  %2084 = vmatmul.mubr.f32.gmra.mrb[0].mxu0 %v2012
  %v2085 = vpop.f32.mrb[0].mxu0
  %v2086 = vadd.f32 0.0, %v2085
  %v2087 = vpop.f32.mrb[0].mxu0
  %v2088 = vadd.f32 0.0, %v2087
  %2089 = vdwg.mxu0
  %2090 = vmatprep.subr.mxu0 0.0
  %2091 = vmatpush1.msra.mxu0 %v777
  %2092 = vmatprep.subr.mxu0 0.0
  %2093 = vmatpush1.msra.mxu0 %v780
  %2094 = vmatprep.subr.mxu0 0.0
  %2095 = vmatpush1.msra.mxu0 %v783
  %2096 = vmatprep.subr.mxu0 0.0
  %2097 = vmatpush1.msra.mxu0 %v786
  %2098 = vmatprep.subr.mxu0 0.0
  %2099 = vmatpush1.msra.mxu0 %v789
  %2100 = vmatprep.subr.mxu0 0.0
  %2101 = vmatpush1.msra.mxu0 %v792
  %2102 = vmatprep.subr.mxu0 0.0
  %2103 = vmatpush1.msra.mxu0 %v795
  %2104 = vmatprep.subr.mxu0 0.0
  %2105 = vmatpush1.msra.mxu0 %v798
  %2106 = vmatprep.subr.mxu0 0.0
  %2107 = vmatpush1.msra.mxu0 %v801
  %2108 = vmatprep.subr.mxu0 0.0
  %2109 = vmatpush1.msra.mxu0 %v804
  %2110 = vmatprep.subr.mxu0 0.0
  %2111 = vmatpush1.msra.mxu0 %v807
  %2112 = vmatprep.subr.mxu0 0.0
  %2113 = vmatpush1.msra.mxu0 %v810
  %2114 = vmatprep.subr.mxu0 0.0
  %2115 = vmatpush1.msra.mxu0 %v813
  %2116 = vmatprep.subr.mxu0 0.0
  %2117 = vmatpush1.msra.mxu0 %v816
  %2118 = vmatprep.subr.mxu0 0.0
  %2119 = vmatpush1.msra.mxu0 %v819
  %2120 = vmatprep.subr.mxu0 0.0
  %2121 = vmatpush1.msra.mxu0 %v822
  %2122 = vmatprep.subr.mxu0 0.0
  %2123 = vmatpush1.msra.mxu0 0.0
  %2124 = vmatprep.subr.mxu0 0.0
  %2125 = vmatpush1.msra.mxu0 0.0
  %2126 = vmatprep.subr.mxu0 0.0
  %2127 = vmatpush1.msra.mxu0 0.0
  %2128 = vmatprep.subr.mxu0 0.0
  %2129 = vmatpush1.msra.mxu0 0.0
  %2130 = vmatprep.subr.mxu0 0.0
  %2131 = vmatpush1.msra.mxu0 0.0
  %2132 = vmatprep.subr.mxu0 0.0
  %2133 = vmatpush1.msra.mxu0 0.0
  %2134 = vmatprep.subr.mxu0 0.0
  %2135 = vmatpush1.msra.mxu0 0.0
  %2136 = vmatprep.subr.mxu0 0.0
  %2137 = vmatpush1.msra.mxu0 0.0
  %2138 = vmatprep.subr.mxu0 0.0
  %2139 = vmatpush1.msra.mxu0 0.0
  %2140 = vmatprep.subr.mxu0 0.0
  %2141 = vmatpush1.msra.mxu0 0.0
  %2142 = vmatprep.subr.mxu0 0.0
  %2143 = vmatpush1.msra.mxu0 0.0
  %2144 = vmatprep.subr.mxu0 0.0
  %2145 = vmatpush1.msra.mxu0 0.0
  %2146 = vmatprep.subr.mxu0 0.0
  %2147 = vmatpush1.msra.mxu0 0.0
  %2148 = vmatprep.subr.mxu0 0.0
  %2149 = vmatpush1.msra.mxu0 0.0
  %2150 = vmatprep.subr.mxu0 0.0
  %2151 = vmatpush1.msra.mxu0 0.0
  %2152 = vmatprep.subr.mxu0 0.0
  %2153 = vmatpush1.msra.mxu0 0.0
  %2154 = vmatprep.mubr.f32.mxu0 0.0
  %2155 = vmatmul.mubr.f32.gmra.mrb[0].mxu0 %v2012
  %v2156 = vpop.f32.mrb[0].mxu0
  %v2157 = vadd.f32 0.0, %v2156
  %v2158 = vpop.f32.mrb[0].mxu0
  %2159 = vdwg.mxu0
  %v2160 = vadd.f32 %v2016, %v2086
  %v2161 = vadd.f32 %v2017, %v2088
  %v2162 = vxor.u32 %v2160, 2147483648
  %v2163 = vxor.u32 %v2161, 2147483648
  %v2164 = vmul.f32 %v2162, 1.442695
  %v2165 = vpow.pop %v2164
  %v2166 = vmul.f32 %v2163, 1.442695
  %v2167 = vpow.pop %v2166
  %v2168 = vadd.f32 %v2165, 1.0
  %v2169 = vadd.f32 %v2167, 1.0
  %v2170 = vrcp.pop %v2168
  %v2171 = vmul.f32 1.0, %v2170
  %v2172 = vrcp.pop %v2169
  %v2173 = vmul.f32 1.0, %v2172
  %v2174 = vadd.f32 %v2157, %v828
  %v2175 = vmul.f32 %v2171, %v2174
  %v2176 = vadd.f32 %v2018, %v2175
  %v2177 = vtanh.pop %v2176
  %v2178 = vsub.f32 1.0, %v2173
  %v2179 = vmul.f32 %v2178, %v2177
  %v2180 = vmul.f32 %v2173, %v2012
  %v2181 = vadd.f32 %v2179, %v2180
  %v2182 = vld [vmem:[%s6] sm:$0xff]
  %v2183 = vld [vmem:[%s6 + $0x8] sm:$0xff]
  %v2184 = vld [vmem:[%s6 + $0x10] sm:$0xff]
  %v2185 = vld [vmem:[%s6 + $0x18] sm:$0xff]
  %v2186 = vld [vmem:[%s6 + $0x20] sm:$0xff]
  %v2187 = vld [vmem:[%s6 + $0x28] sm:$0xff]
  %v2188 = vld [vmem:[%s6 + $0x30] sm:$0xff]
  %v2189 = vld [vmem:[%s6 + $0x38] sm:$0xff]
  %v2190 = vld [vmem:[%s6 + $0x40] sm:$0xff]
  %v2191 = vld [vmem:[%s6 + $0x48] sm:$0xff]
  %v2192 = vld [vmem:[%s6 + $0x50] sm:$0xff]
  %v2193 = vld [vmem:[%s6 + $0x58] sm:$0xff]
  %v2194 = vld [vmem:[%s6 + $0x60] sm:$0xff]
  %v2195 = vld [vmem:[%s6 + $0x68] sm:$0xff]
  %v2196 = vld [vmem:[%s6 + $0x70] sm:$0xff]
  %v2197 = vld [vmem:[%s6 + $0x78] sm:$0xff]
  %v2198 = vld [vmem:[%s7] sm:$0x1]
  %v2200 = vlaneseq
  %v2201 = vshrl.u32 %v2200, 7
  %v2202 = vsub.s32 0, %v2201
  %v2203 = vrot.slane %v2198, %v2202
  %2205 = vmatprep.subr.mxu0 0.0
  %2206 = vmatpush1.msra.mxu0 %v2182
  %2207 = vmatprep.subr.mxu0 0.0
  %2208 = vmatpush1.msra.mxu0 %v2183
  %2209 = vmatprep.subr.mxu0 0.0
  %2210 = vmatpush1.msra.mxu0 %v2184
  %2211 = vmatprep.subr.mxu0 0.0
  %2212 = vmatpush1.msra.mxu0 %v2185
  %2213 = vmatprep.subr.mxu0 0.0
  %2214 = vmatpush1.msra.mxu0 %v2186
  %2215 = vmatprep.subr.mxu0 0.0
  %2216 = vmatpush1.msra.mxu0 %v2187
  %2217 = vmatprep.subr.mxu0 0.0
  %2218 = vmatpush1.msra.mxu0 %v2188
  %2219 = vmatprep.subr.mxu0 0.0
  %2220 = vmatpush1.msra.mxu0 %v2189
  %2221 = vmatprep.subr.mxu0 0.0
  %2222 = vmatpush1.msra.mxu0 %v2190
  %2223 = vmatprep.subr.mxu0 0.0
  %2224 = vmatpush1.msra.mxu0 %v2191
  %2225 = vmatprep.subr.mxu0 0.0
  %2226 = vmatpush1.msra.mxu0 %v2192
  %2227 = vmatprep.subr.mxu0 0.0
  %2228 = vmatpush1.msra.mxu0 %v2193
  %2229 = vmatprep.subr.mxu0 0.0
  %2230 = vmatpush1.msra.mxu0 %v2194
  %2231 = vmatprep.subr.mxu0 0.0
  %2232 = vmatpush1.msra.mxu0 %v2195
  %2233 = vmatprep.subr.mxu0 0.0
  %2234 = vmatpush1.msra.mxu0 %v2196
  %2235 = vmatprep.subr.mxu0 0.0
  %2236 = vmatpush1.msra.mxu0 %v2197
  %2237 = vmatprep.subr.mxu0 0.0
  %2238 = vmatpush1.msra.mxu0 0.0
  %2239 = vmatprep.subr.mxu0 0.0
  %2240 = vmatpush1.msra.mxu0 0.0
  %2241 = vmatprep.subr.mxu0 0.0
  %2242 = vmatpush1.msra.mxu0 0.0
  %2243 = vmatprep.subr.mxu0 0.0
  %2244 = vmatpush1.msra.mxu0 0.0
  %2245 = vmatprep.subr.mxu0 0.0
  %2246 = vmatpush1.msra.mxu0 0.0
  %2247 = vmatprep.subr.mxu0 0.0
  %2248 = vmatpush1.msra.mxu0 0.0
  %2249 = vmatprep.subr.mxu0 0.0
  %2250 = vmatpush1.msra.mxu0 0.0
  %2251 = vmatprep.subr.mxu0 0.0
  %2252 = vmatpush1.msra.mxu0 0.0
  %2253 = vmatprep.subr.mxu0 0.0
  %2254 = vmatpush1.msra.mxu0 0.0
  %2255 = vmatprep.subr.mxu0 0.0
  %2256 = vmatpush1.msra.mxu0 0.0
  %2257 = vmatprep.subr.mxu0 0.0
  %2258 = vmatpush1.msra.mxu0 0.0
  %2259 = vmatprep.subr.mxu0 0.0
  %2260 = vmatpush1.msra.mxu0 0.0
  %2261 = vmatprep.subr.mxu0 0.0
  %2262 = vmatpush1.msra.mxu0 0.0
  %2263 = vmatprep.subr.mxu0 0.0
  %2264 = vmatpush1.msra.mxu0 0.0
  %2265 = vmatprep.subr.mxu0 0.0
  %2266 = vmatpush1.msra.mxu0 0.0
  %2267 = vmatprep.subr.mxu0 0.0
  %2268 = vmatpush1.msra.mxu0 0.0
  %2269 = vmatprep.mubr.f32.mxu0 0.0
  %2270 = vmatmul.mubr.f32.gmra.mrb[0].mxu0 %v2181
  %v2271 = vpop.f32.mrb[0].mxu0
  %v2272 = vadd.f32 %v2203, %v2271
  %v2273 = vpop.f32.mrb[0].mxu0
  %2274 = vdwg.mxu0
  %2275 = vst [vmem:[%s8] sm:$0xff] %v2272
  // Predicated region
  $region30: #{simple_qa_forward.1} parent=0 // pred_check
    _
  $region31: #{simple_qa_forward.1} parent=0 // pred_check_branch
    %2277 = sbr.rel (0) target = $region33
  $region32: #{simple_qa_forward.1} parent=0 // pred_region
    _
  $region33: #{simple_qa_forward.1} parent=0 // pred_fallthru
    _
  // Predicated region
  $region34: #{simple_qa_forward.1} parent=0 // pred_check
    _
  $region35: #{simple_qa_forward.1} parent=0 // pred_check_branch
    %2279 = sbr.rel (0) target = $region37
  $region36: #{simple_qa_forward.1} parent=0 // pred_region
    _
  $region37: #{simple_qa_forward.1} parent=0 // pred_fallthru
    _

</llo_original>
